<compile_context>
chip_gen: v6e
topology: v6e:2x2x1
jax: 0.10.0
libtpu: 0.0.40
codegen_flags: <defaults>
</compile_context>

<pallas_src>
import functools

import jax
import jax.numpy as jnp
from jax import lax
from jax.experimental import pallas as pl
from jax.experimental.pallas import tpu as pltpu
import numpy as np


# --------------------------- fc layer (nn.Linear) ---------------------------
def _fc_kernel(x_ref, w_ref, b_ref, o_ref, *, fuse_relu):
    y = jnp.dot(x_ref[...], w_ref[...], preferred_element_type=jnp.float32)
    y = y + b_ref[...]
    if fuse_relu:
        y = jnp.maximum(y, 0.0)
    o_ref[...] = y.astype(o_ref.dtype)


def linear_pallas(x, weight, bias, *, fuse_relu=False, compute_dtype=jnp.bfloat16):
    """y = x @ weight.T + bias  (PyTorch nn.Linear), optional fused ReLU."""
    N, Din = x.shape
    Dout = weight.shape[0]
    cd = x.dtype if compute_dtype is None else compute_dtype
    return pl.pallas_call(
        functools.partial(_fc_kernel, fuse_relu=fuse_relu),
        out_shape=jax.ShapeDtypeStruct((N, Dout), x.dtype),
    )(x.astype(cd), weight.T.astype(cd), bias.astype(jnp.float32)[None, :])


# ---------------- ConvTranspose2d (padding=0, output_padding) ---------------
def _convt_kernel(x_ref, w_ref, b_ref, o_ref, *, s, m, Wp, L, fuse_relu):
    """One batch element: all s*s output parities of ConvT(k=m*s, stride=s, p=0).

    x_ref: (1, Cin, Pp)            zero-padded input, spatially flattened.
    w_ref: (s*s, m*m, Cout, Cin)   per (parity, tap) transposed weight (resident).
    b_ref: (s*s*Cout, 1)           bias replicated per parity, f32 (resident).
    o_ref: (1, s*s*Cout, L)        parity-major output slabs, row stride Wp.
    """
    pad = m - 1
    outs = []
    for ph in range(s):
        for pw in range(s):
            p = ph * s + pw
            acc = None
            for th in range(m):
                for tw in range(m):
                    t = th * m + tw
                    off = (pad - th) * Wp + (pad - tw)       # static lane shift
                    xt = x_ref[0, :, off:off + L]            # (Cin, L)
                    d = jnp.dot(w_ref[p, t], xt,
                                preferred_element_type=jnp.float32)   # (Cout, L)
                    acc = d if acc is None else acc + d
            outs.append(acc)
    res = jnp.concatenate(outs, axis=0) + b_ref[...]         # (s*s*Cout, L) f32
    if fuse_relu:
        res = jnp.maximum(res, 0.0)
    o_ref[0] = res.astype(o_ref.dtype)                       # one dense store


def conv_transpose2d_pallas(x_nchw, weight, bias, *, kernel_size, stride,
                            output_padding=0, fuse_relu=False,
                            compute_dtype=jnp.bfloat16):
    """Matches nn.ConvTranspose2d(Cin, Cout, k, s, padding=0, output_padding=op).

    x_nchw: (N, Cin, H, W); weight: (Cin, Cout, k, k) [PyTorch layout]; bias: (Cout,).
    Returns (N, Cout, (H-1)s+k+op, (W-1)s+k+op), optionally with fused ReLU.
    """
    N, Cin, H, W = x_nchw.shape
    Cout = weight.shape[1]
    k, s, op = kernel_size, stride, output_padding
    assert k % s == 0, "kernel currently requires kernel_size % stride == 0"
    m = k // s
    pad = m - 1
    Hp, Wp = H + 2 * pad, W + 2 * pad
    A, B = H + m - 1, W + m - 1          # valid rows / cols per output parity
    L = A * Wp                            # parity slab length (row stride == Wp)
    Pp = Hp * Wp + pad                    # slack lanes so the largest tap shift fits
    cd = x_nchw.dtype if compute_dtype is None else compute_dtype

    # ---- glue: zero-pad spatially and flatten; no transpose, no duplication ----
    xflat = jnp.pad(x_nchw, ((0, 0), (0, 0), (pad, pad), (pad, pad)))
    xflat = xflat.reshape(N, Cin, Hp * Wp)
    xflat = jnp.pad(xflat, ((0, 0), (0, 0), (0, Pp - Hp * Wp))).astype(cd)

    # ---- weight taps, pre-transposed for the (Cout,Cin) @ (Cin,L) GEMM ----
    wtaps = []
    for ph in range(s):
        for pw in range(s):
            for th in range(m):
                for tw in range(m):
                    kh, kw = ph + s * th, pw + s * tw
                    wtaps.append(weight[:, :, kh, kw].T)     # (Cout, Cin)
    wstack = jnp.stack(wtaps, 0).reshape(s * s, m * m, Cout, Cin).astype(cd)
    bcol = jnp.tile(bias.astype(jnp.float32)[None, :],
                    (s * s, 1)).reshape(s * s * Cout, 1)

    kernel = functools.partial(_convt_kernel, s=s, m=m, Wp=Wp, L=L,
                               fuse_relu=fuse_relu)
    out = pl.pallas_call(
        kernel,
        out_shape=jax.ShapeDtypeStruct((N, s * s * Cout, L), x_nchw.dtype),
        grid_spec=pltpu.PrefetchScalarGridSpec(
            num_scalar_prefetch=0,
            grid=(N,),                                        # weights stay resident
            in_specs=[
                pl.BlockSpec((1, Cin, Pp), lambda n: (n, 0, 0)),
                pl.BlockSpec((s * s, m * m, Cout, Cin), lambda n: (0, 0, 0, 0)),
                pl.BlockSpec((s * s * Cout, 1), lambda n: (0, 0)),
            ],
            out_specs=pl.BlockSpec((1, s * s * Cout, L), lambda n: (n, 0, 0)),
        ),
        compiler_params=pltpu.CompilerParams(dimension_semantics=("parallel",)),
    )(xflat, wstack, bcol)

    # ---- glue: crop junk cols, interleave parities back to NCHW ----
    out6 = out.reshape(N, s, s, Cout, A, Wp)[..., :B]          # (n, ph, pw, c, a, b)
    y = jnp.transpose(out6, (0, 3, 4, 1, 5, 2)).reshape(N, Cout, A * s, B * s)

    if op:
        # output_padding rows/cols receive only the (activated) bias.
        fill = bias.astype(jnp.float32)
        if fuse_relu:
            fill = jnp.maximum(fill, 0.0)
        Ho, Wo = A * s + op, B * s + op
        mask = ((jnp.arange(Ho) < A * s)[:, None]
                & (jnp.arange(Wo) < B * s)[None, :])[None, None]
        ypad = jnp.pad(y, ((0, 0), (0, 0), (0, op), (0, op)))
        y = jnp.where(mask, ypad, fill.astype(y.dtype)[None, :, None, None])
    return y


# ------------------------------- T_CNN glue ---------------------------------
def build_t_cnn_config(input_dim, hidden_channels_list, output_channels,
                       kernel_size, stride, image_height, output_split_sizes=None):
    """Replicates T_CNN.__init__ shape bookkeeping (output_paddings, post_fc_shape)."""
    n = len(hidden_channels_list)
    ks = list(kernel_size) if isinstance(kernel_size, (list, tuple)) else [kernel_size] * n
    st = list(stride) if isinstance(stride, (list, tuple)) else [stride] * n
    h = image_height
    out_pads = []
    for k, s in zip(ks[::-1], st[::-1]):
        op = (h - k) % s
        h = (h - k - op) // s + 1
        out_pads.append(op)
    out_pads = out_pads[::-1]
    return dict(
        input_dim=input_dim, kernel=ks, stride=st, out_pad=out_pads,
        channels=list(hidden_channels_list) + [output_channels],
        post_fc_shape=(hidden_channels_list[0], h, h),
        fc_out_features=hidden_channels_list[0] * h * h,
        output_split_sizes=output_split_sizes)


def t_cnn_forward_pallas(x, params, *, config, compute_dtype=jnp.bfloat16):
    """Full T_CNN forward (ReLU activation, single_sigma=False)."""
    h = linear_pallas(x, params['fc_w'], params['fc_b'],
                      fuse_relu=True, compute_dtype=compute_dtype)
    h = h.reshape(-1, *config['post_fc_shape'])
    n_convs = len(params['conv_w'])
    for i in range(n_convs):
        h = conv_transpose2d_pallas(
            h, params['conv_w'][i], params['conv_b'][i],
            kernel_size=config['kernel'][i], stride=config['stride'][i],
            output_padding=config['out_pad'][i],
            fuse_relu=(i != n_convs - 1),        # activation after all but the last conv
            compute_dtype=compute_dtype)
    if config['output_split_sizes'] is not None:
        idx = np.cumsum(config['output_split_sizes'])[:-1].tolist()
        return tuple(jnp.split(h, idx, axis=1))
    return h


# ---------------------------- pure-JAX reference ----------------------------
def _conv_transpose_ref(x, weight, bias, stride, output_padding):
    k = weight.shape[2]
    wf = jnp.flip(jnp.transpose(weight, (1, 0, 2, 3)), axis=(2, 3))   # (Cout, Cin, k, k)
    y = lax.conv_general_dilated(
        x, wf, window_strides=(1, 1),
        padding=((k - 1, k - 1 + output_padding), (k - 1, k - 1 + output_padding)),
        lhs_dilation=(stride, stride),
        dimension_numbers=('NCHW', 'OIHW', 'NCHW'),
        precision=lax.Precision.HIGHEST)
    return y + bias[None, :, None, None]


def t_cnn_forward_ref(x, params, config, round_dtype=None):
    rnd = (lambda a: a) if round_dtype is None else (
        lambda a: a.astype(round_dtype).astype(jnp.float32))
    h = rnd(x) @ rnd(params['fc_w']).T + params['fc_b']
    h = jnp.maximum(h, 0.0)
    h = h.reshape(-1, *config['post_fc_shape'])
    n_convs = len(params['conv_w'])
    for i in range(n_convs):
        h = _conv_transpose_ref(rnd(h), rnd(params['conv_w'][i]), params['conv_b'][i],
                                config['stride'][i], config['out_pad'][i])
        if i != n_convs - 1:
            h = jnp.maximum(h, 0.0)
    return h


if __name__ == "__main__":
    N = 2
    input_dim = 32
    hidden_channels_list = [8, 4]
    output_channels = 4
    kernel_size = 4
    stride = 2
    image_height = 16

    cfg = build_t_cnn_config(input_dim, hidden_channels_list, output_channels,
                             kernel_size, stride, image_height)
    # -> fc: 32 -> 8*2*2, then ConvT(8->4, op=1): 2x2 -> 7x7, ConvT(4->4, op=0): 7x7 -> 16x16

    key = jax.random.PRNGKey(0)
    k_x, k_fw, k_fb, *k_conv = jax.random.split(key, 3 + 2 * len(cfg['kernel']))

    x = jax.random.normal(k_x, (N, input_dim), jnp.float32)

    fc_out = cfg['fc_out_features']
    b_fc = 1.0 / (input_dim ** 0.5)
    params = {
        'fc_w': jax.random.uniform(k_fw, (fc_out, input_dim), jnp.float32, -b_fc, b_fc),
        'fc_b': jax.random.uniform(k_fb, (fc_out,), jnp.float32, -b_fc, b_fc),
        'conv_w': [],
        'conv_b': [],
    }
    chans = cfg['channels']
    for i, kk in enumerate(cfg['kernel']):
        cin, cout = chans[i], chans[i + 1]
        bound = 1.0 / ((cin * kk * kk) ** 0.5)
        params['conv_w'].append(jax.random.uniform(
            k_conv[2 * i], (cin, cout, kk, kk), jnp.float32, -bound, bound))
        params['conv_b'].append(jax.random.uniform(
            k_conv[2 * i + 1], (cout,), jnp.float32, -bound, bound))

    fwd_f32 = jax.jit(lambda xx, pp: t_cnn_forward_pallas(
        xx, pp, config=cfg, compute_dtype=jnp.float32))
    fwd_bf16 = jax.jit(lambda xx, pp: t_cnn_forward_pallas(
        xx, pp, config=cfg, compute_dtype=jnp.bfloat16))

    # f32 operand path: validates the parity/tap algorithm + glue against XLA.
    out_f32 = jax.block_until_ready(fwd_f32(x, params))
    assert out_f32.shape == (N, output_channels, image_height, image_height), out_f32.shape
    ref_f32 = t_cnn_forward_ref(x, params, cfg, round_dtype=None)
    np.testing.assert_allclose(np.asarray(out_f32), np.asarray(ref_f32),
                               atol=5e-3, rtol=5e-3)

    # bf16 operand path (default, bandwidth-optimized): compare against the same
    # forward with per-layer bf16-rounded operands (both sides accumulate in f32).
    out_bf = jax.block_until_ready(fwd_bf16(x, params))
    assert out_bf.shape == (N, output_channels, image_height, image_height), out_bf.shape
    ref_bf = t_cnn_forward_ref(x, params, cfg, round_dtype=jnp.bfloat16)
    np.testing.assert_allclose(np.asarray(out_bf), np.asarray(ref_bf),
                               atol=1.5e-2, rtol=1.5e-2)

    print("KERNEL_OK")
</pallas_src>

<mosaic_0001>
module attributes {stable_mosaic.version = 11 : i64} {
  func.func @_fc_kernel(%arg0: memref<2x32xf32, #tpu.memory_space<vmem>>, %arg1: memref<32x32xf32, #tpu.memory_space<vmem>>, %arg2: memref<1x32xf32, #tpu.memory_space<vmem>>, %arg3: memref<2x32xf32, #tpu.memory_space<vmem>>) attributes {dimension_semantics = [], scalar_prefetch = 0 : i64, scratch_operands = 0 : i64, tpu.core_type = #tpu.core_type<tc>} {
    %c0 = arith.constant 0 : index
    %c0_0 = arith.constant 0 : index
    %0 = vector.load %arg0[%c0, %c0_0] : memref<2x32xf32, #tpu.memory_space<vmem>>, vector<2x32xf32>
    %c0_1 = arith.constant 0 : index
    %c0_2 = arith.constant 0 : index
    %1 = vector.load %arg1[%c0_1, %c0_2] : memref<32x32xf32, #tpu.memory_space<vmem>>, vector<32x32xf32>
    %cst = arith.constant dense<0.000000e+00> : vector<2x32xf32>
    %2 = tpu.matmul %0, %1, %cst {dimension_numbers = #tpu.dot_dimension_numbers<[1], [0], [0], [1], [0, 0, 1, 1], [], []>} : vector<2x32xf32>, vector<32x32xf32>, vector<2x32xf32> -> vector<2x32xf32>
    %c0_3 = arith.constant 0 : index
    %c0_4 = arith.constant 0 : index
    %3 = vector.load %arg2[%c0_3, %c0_4] : memref<1x32xf32, #tpu.memory_space<vmem>>, vector<1x32xf32>
    %4 = vector.broadcast %3 : vector<1x32xf32> to vector<2x32xf32>
    %5 = arith.addf %2, %4 : vector<2x32xf32>
    %cst_5 = arith.constant 0.000000e+00 : f32
    %6 = vector.broadcast %cst_5 : f32 to vector<2x32xf32>
    %7 = arith.maximumf %5, %6 : vector<2x32xf32>
    %c0_6 = arith.constant 0 : index
    %c0_7 = arith.constant 0 : index
    %8 = vector.load %arg3[%c0_6, %c0_7] : memref<2x32xf32, #tpu.memory_space<vmem>>, vector<2x32xf32>
    tpu.vector_store %arg3[%c0_6, %c0_7], %7 {strides = array<i32>} : memref<2x32xf32, #tpu.memory_space<vmem>>, vector<2x32xf32>,
    return
  }
}

module attributes {stable_mosaic.version = 11 : i64} {
  func.func @_convt_kernel(%arg0: i32, %arg1: memref<1x8x17xf32, #tpu.memory_space<vmem>>, %arg2: memref<4x4x4x8xf32, #tpu.memory_space<vmem>>, %arg3: memref<16x1xf32, #tpu.memory_space<vmem>>, %arg4: memref<1x16x12xf32, #tpu.memory_space<vmem>>) attributes {dimension_semantics = [#tpu.dimension_semantics<parallel>], iteration_bounds = array<i64: 2>, scalar_prefetch = 0 : i64, scratch_operands = 0 : i64, tpu.core_type = #tpu.core_type<tc>, window_params = [{transform_indices = @transform_0, window_bounds = array<i64: 1, 8, 17>}, {pipeline_mode = #tpu.pipeline_mode<synchronous>, transform_indices = @transform_1, window_bounds = array<i64: 4, 4, 4, 8>}, {pipeline_mode = #tpu.pipeline_mode<synchronous>, transform_indices = @transform_2, window_bounds = array<i64: 16, 1>}, {transform_indices = @transform_3, window_bounds = array<i64: 1, 16, 12>}]} {
    %c0 = arith.constant 0 : index
    %c0_0 = arith.constant 0 : index
    %c5 = arith.constant 5 : index
    %0 = vector.load %arg1[%c0, %c0_0, %c5] : memref<1x8x17xf32, #tpu.memory_space<vmem>>, vector<1x8x12xf32>
    %1 = vector.shape_cast %0 : vector<1x8x12xf32> to vector<8x12xf32>
    %c0_1 = arith.constant 0 : index
    %c0_2 = arith.constant 0 : index
    %c0_3 = arith.constant 0 : index
    %c0_4 = arith.constant 0 : index
    %2 = vector.load %arg2[%c0_1, %c0_2, %c0_3, %c0_4] : memref<4x4x4x8xf32, #tpu.memory_space<vmem>>, vector<1x1x4x8xf32>
    %3 = vector.shape_cast %2 : vector<1x1x4x8xf32> to vector<4x8xf32>
    %cst = arith.constant dense<0.000000e+00> : vector<4x12xf32>
    %4 = tpu.matmul %3, %1, %cst {dimension_numbers = #tpu.dot_dimension_numbers<[1], [0], [0], [1], [0, 0, 1, 1], [], []>} : vector<4x8xf32>, vector<8x12xf32>, vector<4x12xf32> -> vector<4x12xf32>
    %c0_5 = arith.constant 0 : index
    %c0_6 = arith.constant 0 : index
    %c4 = arith.constant 4 : index
    %5 = vector.load %arg1[%c0_5, %c0_6, %c4] : memref<1x8x17xf32, #tpu.memory_space<vmem>>, vector<1x8x12xf32>
    %6 = vector.shape_cast %5 : vector<1x8x12xf32> to vector<8x12xf32>
    %c0_7 = arith.constant 0 : index
    %c1 = arith.constant 1 : index
    %c0_8 = arith.constant 0 : index
    %c0_9 = arith.constant 0 : index
    %7 = vector.load %arg2[%c0_7, %c1, %c0_8, %c0_9] : memref<4x4x4x8xf32, #tpu.memory_space<vmem>>, vector<1x1x4x8xf32>
    %8 = vector.shape_cast %7 : vector<1x1x4x8xf32> to vector<4x8xf32>
    %cst_10 = arith.constant dense<0.000000e+00> : vector<4x12xf32>
    %9 = tpu.matmul %8, %6, %cst_10 {dimension_numbers = #tpu.dot_dimension_numbers<[1], [0], [0], [1], [0, 0, 1, 1], [], []>} : vector<4x8xf32>, vector<8x12xf32>, vector<4x12xf32> -> vector<4x12xf32>
    %10 = arith.addf %4, %9 : vector<4x12xf32>
    %c0_11 = arith.constant 0 : index
    %c0_12 = arith.constant 0 : index
    %c1_13 = arith.constant 1 : index
    %11 = vector.load %arg1[%c0_11, %c0_12, %c1_13] : memref<1x8x17xf32, #tpu.memory_space<vmem>>, vector<1x8x12xf32>
    %12 = vector.shape_cast %11 : vector<1x8x12xf32> to vector<8x12xf32>
    %c0_14 = arith.constant 0 : index
    %c2 = arith.constant 2 : index
    %c0_15 = arith.constant 0 : index
    %c0_16 = arith.constant 0 : index
    %13 = vector.load %arg2[%c0_14, %c2, %c0_15, %c0_16] : memref<4x4x4x8xf32, #tpu.memory_space<vmem>>, vector<1x1x4x8xf32>
    %14 = vector.shape_cast %13 : vector<1x1x4x8xf32> to vector<4x8xf32>
    %cst_17 = arith.constant dense<0.000000e+00> : vector<4x12xf32>
    %15 = tpu.matmul %14, %12, %cst_17 {dimension_numbers = #tpu.dot_dimension_numbers<[1], [0], [0], [1], [0, 0, 1, 1], [], []>} : vector<4x8xf32>, vector<8x12xf32>, vector<4x12xf32> -> vector<4x12xf32>
    %16 = arith.addf %10, %15 : vector<4x12xf32>
    %c0_18 = arith.constant 0 : index
    %c0_19 = arith.constant 0 : index
    %c0_20 = arith.constant 0 : index
    %17 = vector.load %arg1[%c0_18, %c0_19, %c0_20] : memref<1x8x17xf32, #tpu.memory_space<vmem>>, vector<1x8x12xf32>
    %18 = vector.shape_cast %17 : vector<1x8x12xf32> to vector<8x12xf32>
    %c0_21 = arith.constant 0 : index
    %c3 = arith.constant 3 : index
    %c0_22 = arith.constant 0 : index
    %c0_23 = arith.constant 0 : index
    %19 = vector.load %arg2[%c0_21, %c3, %c0_22, %c0_23] : memref<4x4x4x8xf32, #tpu.memory_space<vmem>>, vector<1x1x4x8xf32>
    %20 = vector.shape_cast %19 : vector<1x1x4x8xf32> to vector<4x8xf32>
    %cst_24 = arith.constant dense<0.000000e+00> : vector<4x12xf32>
    %21 = tpu.matmul %20, %18, %cst_24 {dimension_numbers = #tpu.dot_dimension_numbers<[1], [0], [0], [1], [0, 0, 1, 1], [], []>} : vector<4x8xf32>, vector<8x12xf32>, vector<4x12xf32> -> vector<4x12xf32>
    %22 = arith.addf %16, %21 : vector<4x12xf32>
    %c0_25 = arith.constant 0 : index
    %c0_26 = arith.constant 0 : index
    %c5_27 = arith.constant 5 : index
    %23 = vector.load %arg1[%c0_25, %c0_26, %c5_27] : memref<1x8x17xf32, #tpu.memory_space<vmem>>, vector<1x8x12xf32>
    %24 = vector.shape_cast %23 : vector<1x8x12xf32> to vector<8x12xf32>
    %c1_28 = arith.constant 1 : index
    %c0_29 = arith.constant 0 : index
    %c0_30 = arith.constant 0 : index
    %c0_31 = arith.constant 0 : index
    %25 = vector.load %arg2[%c1_28, %c0_29, %c0_30, %c0_31] : memref<4x4x4x8xf32, #tpu.memory_space<vmem>>, vector<1x1x4x8xf32>
    %26 = vector.shape_cast %25 : vector<1x1x4x8xf32> to vector<4x8xf32>
    %cst_32 = arith.constant dense<0.000000e+00> : vector<4x12xf32>
    %27 = tpu.matmul %26, %24, %cst_32 {dimension_numbers = #tpu.dot_dimension_numbers<[1], [0], [0], [1], [0, 0, 1, 1], [], []>} : vector<4x8xf32>, vector<8x12xf32>, vector<4x12xf32> -> vector<4x12xf32>
    %c0_33 = arith.constant 0 : index
    %c0_34 = arith.constant 0 : index
    %c4_35 = arith.constant 4 : index
    %28 = vector.load %arg1[%c0_33, %c0_34, %c4_35] : memref<1x8x17xf32, #tpu.memory_space<vmem>>, vector<1x8x12xf32>
    %29 = vector.shape_cast %28 : vector<1x8x12xf32> to vector<8x12xf32>
    %c1_36 = arith.constant 1 : index
    %c1_37 = arith.constant 1 : index
    %c0_38 = arith.constant 0 : index
    %c0_39 = arith.constant 0 : index
    %30 = vector.load %arg2[%c1_36, %c1_37, %c0_38, %c0_39] : memref<4x4x4x8xf32, #tpu.memory_space<vmem>>, vector<1x1x4x8xf32>
    %31 = vector.shape_cast %30 : vector<1x1x4x8xf32> to vector<4x8xf32>
    %cst_40 = arith.constant dense<0.000000e+00> : vector<4x12xf32>
    %32 = tpu.matmul %31, %29, %cst_40 {dimension_numbers = #tpu.dot_dimension_numbers<[1], [0], [0], [1], [0, 0, 1, 1], [], []>} : vector<4x8xf32>, vector<8x12xf32>, vector<4x12xf32> -> vector<4x12xf32>
    %33 = arith.addf %27, %32 : vector<4x12xf32>
    %c0_41 = arith.constant 0 : index
    %c0_42 = arith.constant 0 : index
    %c1_43 = arith.constant 1 : index
    %34 = vector.load %arg1[%c0_41, %c0_42, %c1_43] : memref<1x8x17xf32, #tpu.memory_space<vmem>>, vector<1x8x12xf32>
    %35 = vector.shape_cast %34 : vector<1x8x12xf32> to vector<8x12xf32>
    %c1_44 = arith.constant 1 : index
    %c2_45 = arith.constant 2 : index
    %c0_46 = arith.constant 0 : index
    %c0_47 = arith.constant 0 : index
    %36 = vector.load %arg2[%c1_44, %c2_45, %c0_46, %c0_47] : memref<4x4x4x8xf32, #tpu.memory_space<vmem>>, vector<1x1x4x8xf32>
    %37 = vector.shape_cast %36 : vector<1x1x4x8xf32> to vector<4x8xf32>
    %cst_48 = arith.constant dense<0.000000e+00> : vector<4x12xf32>
    %38 = tpu.matmul %37, %35, %cst_48 {dimension_numbers = #tpu.dot_dimension_numbers<[1], [0], [0], [1], [0, 0, 1, 1], [], []>} : vector<4x8xf32>, vector<8x12xf32>, vector<4x12xf32> -> vector<4x12xf32>
    %39 = arith.addf %33, %38 : vector<4x12xf32>
    %c0_49 = arith.constant 0 : index
    %c0_50 = arith.constant 0 : index
    %c0_51 = arith.constant 0 : index
    %40 = vector.load %arg1[%c0_49, %c0_50, %c0_51] : memref<1x8x17xf32, #tpu.memory_space<vmem>>, vector<1x8x12xf32>
    %41 = vector.shape_cast %40 : vector<1x8x12xf32> to vector<8x12xf32>
    %c1_52 = arith.constant 1 : index
    %c3_53 = arith.constant 3 : index
    %c0_54 = arith.constant 0 : index
    %c0_55 = arith.constant 0 : index
    %42 = vector.load %arg2[%c1_52, %c3_53, %c0_54, %c0_55] : memref<4x4x4x8xf32, #tpu.memory_space<vmem>>, vector<1x1x4x8xf32>
    %43 = vector.shape_cast %42 : vector<1x1x4x8xf32> to vector<4x8xf32>
    %cst_56 = arith.constant dense<0.000000e+00> : vector<4x12xf32>
    %44 = tpu.matmul %43, %41, %cst_56 {dimension_numbers = #tpu.dot_dimension_numbers<[1], [0], [0], [1], [0, 0, 1, 1], [], []>} : vector<4x8xf32>, vector<8x12xf32>, vector<4x12xf32> -> vector<4x12xf32>
    %45 = arith.addf %39, %44 : vector<4x12xf32>
    %c0_57 = arith.constant 0 : index
    %c0_58 = arith.constant 0 : index
    %c5_59 = arith.constant 5 : index
    %46 = vector.load %arg1[%c0_57, %c0_58, %c5_59] : memref<1x8x17xf32, #tpu.memory_space<vmem>>, vector<1x8x12xf32>
    %47 = vector.shape_cast %46 : vector<1x8x12xf32> to vector<8x12xf32>
    %c2_60 = arith.constant 2 : index
    %c0_61 = arith.constant 0 : index
    %c0_62 = arith.constant 0 : index
    %c0_63 = arith.constant 0 : index
    %48 = vector.load %arg2[%c2_60, %c0_61, %c0_62, %c0_63] : memref<4x4x4x8xf32, #tpu.memory_space<vmem>>, vector<1x1x4x8xf32>
    %49 = vector.shape_cast %48 : vector<1x1x4x8xf32> to vector<4x8xf32>
    %cst_64 = arith.constant dense<0.000000e+00> : vector<4x12xf32>
    %50 = tpu.matmul %49, %47, %cst_64 {dimension_numbers = #tpu.dot_dimension_numbers<[1], [0], [0], [1], [0, 0, 1, 1], [], []>} : vector<4x8xf32>, vector<8x12xf32>, vector<4x12xf32> -> vector<4x12xf32>
    %c0_65 = arith.constant 0 : index
    %c0_66 = arith.constant 0 : index
    %c4_67 = arith.constant 4 : index
    %51 = vector.load %arg1[%c0_65, %c0_66, %c4_67] : memref<1x8x17xf32, #tpu.memory_space<vmem>>, vector<1x8x12xf32>
    %52 = vector.shape_cast %51 : vector<1x8x12xf32> to vector<8x12xf32>
    %c2_68 = arith.constant 2 : index
    %c1_69 = arith.constant 1 : index
    %c0_70 = arith.constant 0 : index
    %c0_71 = arith.constant 0 : index
    %53 = vector.load %arg2[%c2_68, %c1_69, %c0_70, %c0_71] : memref<4x4x4x8xf32, #tpu.memory_space<vmem>>, vector<1x1x4x8xf32>
    %54 = vector.shape_cast %53 : vector<1x1x4x8xf32> to vector<4x8xf32>
    %cst_72 = arith.constant dense<0.000000e+00> : vector<4x12xf32>
    %55 = tpu.matmul %54, %52, %cst_72 {dimension_numbers = #tpu.dot_dimension_numbers<[1], [0], [0], [1], [0, 0, 1, 1], [], []>} : vector<4x8xf32>, vector<8x12xf32>, vector<4x12xf32> -> vector<4x12xf32>
    %56 = arith.addf %50, %55 : vector<4x12xf32>
    %c0_73 = arith.constant 0 : index
    %c0_74 = arith.constant 0 : index
    %c1_75 = arith.constant 1 : index
    %57 = vector.load %arg1[%c0_73, %c0_74, %c1_75] : memref<1x8x17xf32, #tpu.memory_space<vmem>>, vector<1x8x12xf32>
    %58 = vector.shape_cast %57 : vector<1x8x12xf32> to vector<8x12xf32>
    %c2_76 = arith.constant 2 : index
    %c2_77 = arith.constant 2 : index
    %c0_78 = arith.constant 0 : index
    %c0_79 = arith.constant 0 : index
    %59 = vector.load %arg2[%c2_76, %c2_77, %c0_78, %c0_79] : memref<4x4x4x8xf32, #tpu.memory_space<vmem>>, vector<1x1x4x8xf32>
    %60 = vector.shape_cast %59 : vector<1x1x4x8xf32> to vector<4x8xf32>
    %cst_80 = arith.constant dense<0.000000e+00> : vector<4x12xf32>
    %61 = tpu.matmul %60, %58, %cst_80 {dimension_numbers = #tpu.dot_dimension_numbers<[1], [0], [0], [1], [0, 0, 1, 1], [], []>} : vector<4x8xf32>, vector<8x12xf32>, vector<4x12xf32> -> vector<4x12xf32>
    %62 = arith.addf %56, %61 : vector<4x12xf32>
    %c0_81 = arith.constant 0 : index
    %c0_82 = arith.constant 0 : index
    %c0_83 = arith.constant 0 : index
    %63 = vector.load %arg1[%c0_81, %c0_82, %c0_83] : memref<1x8x17xf32, #tpu.memory_space<vmem>>, vector<1x8x12xf32>
    %64 = vector.shape_cast %63 : vector<1x8x12xf32> to vector<8x12xf32>
    %c2_84 = arith.constant 2 : index
    %c3_85 = arith.constant 3 : index
    %c0_86 = arith.constant 0 : index
    %c0_87 = arith.constant 0 : index
    %65 = vector.load %arg2[%c2_84, %c3_85, %c0_86, %c0_87] : memref<4x4x4x8xf32, #tpu.memory_space<vmem>>, vector<1x1x4x8xf32>
    %66 = vector.shape_cast %65 : vector<1x1x4x8xf32> to vector<4x8xf32>
    %cst_88 = arith.constant dense<0.000000e+00> : vector<4x12xf32>
    %67 = tpu.matmul %66, %64, %cst_88 {dimension_numbers = #tpu.dot_dimension_numbers<[1], [0], [0], [1], [0, 0, 1, 1], [], []>} : vector<4x8xf32>, vector<8x12xf32>, vector<4x12xf32> -> vector<4x12xf32>
    %68 = arith.addf %62, %67 : vector<4x12xf32>
    %c0_89 = arith.constant 0 : index
    %c0_90 = arith.constant 0 : index
    %c5_91 = arith.constant 5 : index
    %69 = vector.load %arg1[%c0_89, %c0_90, %c5_91] : memref<1x8x17xf32, #tpu.memory_space<vmem>>, vector<1x8x12xf32>
    %70 = vector.shape_cast %69 : vector<1x8x12xf32> to vector<8x12xf32>
    %c3_92 = arith.constant 3 : index
    %c0_93 = arith.constant 0 : index
    %c0_94 = arith.constant 0 : index
    %c0_95 = arith.constant 0 : index
    %71 = vector.load %arg2[%c3_92, %c0_93, %c0_94, %c0_95] : memref<4x4x4x8xf32, #tpu.memory_space<vmem>>, vector<1x1x4x8xf32>
    %72 = vector.shape_cast %71 : vector<1x1x4x8xf32> to vector<4x8xf32>
    %cst_96 = arith.constant dense<0.000000e+00> : vector<4x12xf32>
    %73 = tpu.matmul %72, %70, %cst_96 {dimension_numbers = #tpu.dot_dimension_numbers<[1], [0], [0], [1], [0, 0, 1, 1], [], []>} : vector<4x8xf32>, vector<8x12xf32>, vector<4x12xf32> -> vector<4x12xf32>
    %c0_97 = arith.constant 0 : index
    %c0_98 = arith.constant 0 : index
    %c4_99 = arith.constant 4 : index
    %74 = vector.load %arg1[%c0_97, %c0_98, %c4_99] : memref<1x8x17xf32, #tpu.memory_space<vmem>>, vector<1x8x12xf32>
    %75 = vector.shape_cast %74 : vector<1x8x12xf32> to vector<8x12xf32>
    %c3_100 = arith.constant 3 : index
    %c1_101 = arith.constant 1 : index
    %c0_102 = arith.constant 0 : index
    %c0_103 = arith.constant 0 : index
    %76 = vector.load %arg2[%c3_100, %c1_101, %c0_102, %c0_103] : memref<4x4x4x8xf32, #tpu.memory_space<vmem>>, vector<1x1x4x8xf32>
    %77 = vector.shape_cast %76 : vector<1x1x4x8xf32> to vector<4x8xf32>
    %cst_104 = arith.constant dense<0.000000e+00> : vector<4x12xf32>
    %78 = tpu.matmul %77, %75, %cst_104 {dimension_numbers = #tpu.dot_dimension_numbers<[1], [0], [0], [1], [0, 0, 1, 1], [], []>} : vector<4x8xf32>, vector<8x12xf32>, vector<4x12xf32> -> vector<4x12xf32>
    %79 = arith.addf %73, %78 : vector<4x12xf32>
    %c0_105 = arith.constant 0 : index
    %c0_106 = arith.constant 0 : index
    %c1_107 = arith.constant 1 : index
    %80 = vector.load %arg1[%c0_105, %c0_106, %c1_107] : memref<1x8x17xf32, #tpu.memory_space<vmem>>, vector<1x8x12xf32>
    %81 = vector.shape_cast %80 : vector<1x8x12xf32> to vector<8x12xf32>
    %c3_108 = arith.constant 3 : index
    %c2_109 = arith.constant 2 : index
    %c0_110 = arith.constant 0 : index
    %c0_111 = arith.constant 0 : index
    %82 = vector.load %arg2[%c3_108, %c2_109, %c0_110, %c0_111] : memref<4x4x4x8xf32, #tpu.memory_space<vmem>>, vector<1x1x4x8xf32>
    %83 = vector.shape_cast %82 : vector<1x1x4x8xf32> to vector<4x8xf32>
    %cst_112 = arith.constant dense<0.000000e+00> : vector<4x12xf32>
    %84 = tpu.matmul %83, %81, %cst_112 {dimension_numbers = #tpu.dot_dimension_numbers<[1], [0], [0], [1], [0, 0, 1, 1], [], []>} : vector<4x8xf32>, vector<8x12xf32>, vector<4x12xf32> -> vector<4x12xf32>
    %85 = arith.addf %79, %84 : vector<4x12xf32>
    %c0_113 = arith.constant 0 : index
    %c0_114 = arith.constant 0 : index
    %c0_115 = arith.constant 0 : index
    %86 = vector.load %arg1[%c0_113, %c0_114, %c0_115] : memref<1x8x17xf32, #tpu.memory_space<vmem>>, vector<1x8x12xf32>
    %87 = vector.shape_cast %86 : vector<1x8x12xf32> to vector<8x12xf32>
    %c3_116 = arith.constant 3 : index
    %c3_117 = arith.constant 3 : index
    %c0_118 = arith.constant 0 : index
    %c0_119 = arith.constant 0 : index
    %88 = vector.load %arg2[%c3_116, %c3_117, %c0_118, %c0_119] : memref<4x4x4x8xf32, #tpu.memory_space<vmem>>, vector<1x1x4x8xf32>
    %89 = vector.shape_cast %88 : vector<1x1x4x8xf32> to vector<4x8xf32>
    %cst_120 = arith.constant dense<0.000000e+00> : vector<4x12xf32>
    %90 = tpu.matmul %89, %87, %cst_120 {dimension_numbers = #tpu.dot_dimension_numbers<[1], [0], [0], [1], [0, 0, 1, 1], [], []>} : vector<4x8xf32>, vector<8x12xf32>, vector<4x12xf32> -> vector<4x12xf32>
    %91 = arith.addf %85, %90 : vector<4x12xf32>
    %92 = tpu.concatenate %22, %45, %68, %91 in 0 : vector<4x12xf32>, vector<4x12xf32>, vector<4x12xf32>, vector<4x12xf32> -> vector<16x12xf32>
    %c0_121 = arith.constant 0 : index
    %c0_122 = arith.constant 0 : index
    %93 = vector.load %arg3[%c0_121, %c0_122] : memref<16x1xf32, #tpu.memory_space<vmem>>, vector<16x1xf32>
    %94 = vector.broadcast %93 : vector<16x1xf32> to vector<16x12xf32>
    %95 = arith.addf %92, %94 : vector<16x12xf32>
    %cst_123 = arith.constant 0.000000e+00 : f32
    %96 = vector.broadcast %cst_123 : f32 to vector<16x12xf32>
    %97 = arith.maximumf %95, %96 : vector<16x12xf32>
    %c0_124 = arith.constant 0 : index
    %c0_125 = arith.constant 0 : index
    %c0_126 = arith.constant 0 : index
    %98 = vector.load %arg4[%c0_124, %c0_125, %c0_126] : memref<1x16x12xf32, #tpu.memory_space<vmem>>, vector<1x16x12xf32>
    %99 = vector.shape_cast %98 : vector<1x16x12xf32> to vector<16x12xf32>
    %100 = vector.shape_cast %97 : vector<16x12xf32> to vector<1x16x12xf32>
    tpu.vector_store %arg4[%c0_124, %c0_125, %c0_126], %100 {strides = array<i32>} : memref<1x16x12xf32, #tpu.memory_space<vmem>>, vector<1x16x12xf32>,
    return
  }
  func.func @transform_0(%arg0: i32) -> (i32, i32, i32) {
    %c0_i32 = arith.constant 0 : i32
    %c0_i32_0 = arith.constant 0 : i32
    %c0_i32_1 = arith.constant 0 : i32
    return %arg0, %c0_i32, %c0_i32_0 : i32, i32, i32
  }
  func.func @transform_1(%arg0: i32) -> (i32, i32, i32, i32) {
    %c0_i32 = arith.constant 0 : i32
    %c0_i32_0 = arith.constant 0 : i32
    %c0_i32_1 = arith.constant 0 : i32
    %c0_i32_2 = arith.constant 0 : i32
    %c0_i32_3 = arith.constant 0 : i32
    return %c0_i32, %c0_i32_0, %c0_i32_1, %c0_i32_2 : i32, i32, i32, i32
  }
  func.func @transform_2(%arg0: i32) -> (i32, i32) {
    %c0_i32 = arith.constant 0 : i32
    %c0_i32_0 = arith.constant 0 : i32
    %c0_i32_1 = arith.constant 0 : i32
    return %c0_i32, %c0_i32_0 : i32, i32
  }
  func.func @transform_3(%arg0: i32) -> (i32, i32, i32) {
    %c0_i32 = arith.constant 0 : i32
    %c0_i32_0 = arith.constant 0 : i32
    %c0_i32_1 = arith.constant 0 : i32
    return %arg0, %c0_i32, %c0_i32_0 : i32, i32, i32
  }
}

module attributes {stable_mosaic.version = 11 : i64} {
  func.func @_convt_kernel(%arg0: i32, %arg1: memref<1x4x82xf32, #tpu.memory_space<vmem>>, %arg2: memref<4x4x4x4xf32, #tpu.memory_space<vmem>>, %arg3: memref<16x1xf32, #tpu.memory_space<vmem>>, %arg4: memref<1x16x72xf32, #tpu.memory_space<vmem>>) attributes {dimension_semantics = [#tpu.dimension_semantics<parallel>], iteration_bounds = array<i64: 2>, scalar_prefetch = 0 : i64, scratch_operands = 0 : i64, tpu.core_type = #tpu.core_type<tc>, window_params = [{transform_indices = @transform_0, window_bounds = array<i64: 1, 4, 82>}, {pipeline_mode = #tpu.pipeline_mode<synchronous>, transform_indices = @transform_1, window_bounds = array<i64: 4, 4, 4, 4>}, {pipeline_mode = #tpu.pipeline_mode<synchronous>, transform_indices = @transform_2, window_bounds = array<i64: 16, 1>}, {transform_indices = @transform_3, window_bounds = array<i64: 1, 16, 72>}]} {
    %c0 = arith.constant 0 : index
    %c0_0 = arith.constant 0 : index
    %c10 = arith.constant 10 : index
    %0 = vector.load %arg1[%c0, %c0_0, %c10] : memref<1x4x82xf32, #tpu.memory_space<vmem>>, vector<1x4x72xf32>
    %1 = vector.shape_cast %0 : vector<1x4x72xf32> to vector<4x72xf32>
    %c0_1 = arith.constant 0 : index
    %c0_2 = arith.constant 0 : index
    %c0_3 = arith.constant 0 : index
    %c0_4 = arith.constant 0 : index
    %2 = vector.load %arg2[%c0_1, %c0_2, %c0_3, %c0_4] : memref<4x4x4x4xf32, #tpu.memory_space<vmem>>, vector<1x1x4x4xf32>
    %3 = vector.shape_cast %2 : vector<1x1x4x4xf32> to vector<4x4xf32>
    %cst = arith.constant dense<0.000000e+00> : vector<4x72xf32>
    %4 = tpu.matmul %3, %1, %cst {dimension_numbers = #tpu.dot_dimension_numbers<[1], [0], [0], [1], [0, 0, 1, 1], [], []>} : vector<4x4xf32>, vector<4x72xf32>, vector<4x72xf32> -> vector<4x72xf32>
    %c0_5 = arith.constant 0 : index
    %c0_6 = arith.constant 0 : index
    %c9 = arith.constant 9 : index
    %5 = vector.load %arg1[%c0_5, %c0_6, %c9] : memref<1x4x82xf32, #tpu.memory_space<vmem>>, vector<1x4x72xf32>
    %6 = vector.shape_cast %5 : vector<1x4x72xf32> to vector<4x72xf32>
    %c0_7 = arith.constant 0 : index
    %c1 = arith.constant 1 : index
    %c0_8 = arith.constant 0 : index
    %c0_9 = arith.constant 0 : index
    %7 = vector.load %arg2[%c0_7, %c1, %c0_8, %c0_9] : memref<4x4x4x4xf32, #tpu.memory_space<vmem>>, vector<1x1x4x4xf32>
    %8 = vector.shape_cast %7 : vector<1x1x4x4xf32> to vector<4x4xf32>
    %cst_10 = arith.constant dense<0.000000e+00> : vector<4x72xf32>
    %9 = tpu.matmul %8, %6, %cst_10 {dimension_numbers = #tpu.dot_dimension_numbers<[1], [0], [0], [1], [0, 0, 1, 1], [], []>} : vector<4x4xf32>, vector<4x72xf32>, vector<4x72xf32> -> vector<4x72xf32>
    %10 = arith.addf %4, %9 : vector<4x72xf32>
    %c0_11 = arith.constant 0 : index
    %c0_12 = arith.constant 0 : index
    %c1_13 = arith.constant 1 : index
    %11 = vector.load %arg1[%c0_11, %c0_12, %c1_13] : memref<1x4x82xf32, #tpu.memory_space<vmem>>, vector<1x4x72xf32>
    %12 = vector.shape_cast %11 : vector<1x4x72xf32> to vector<4x72xf32>
    %c0_14 = arith.constant 0 : index
    %c2 = arith.constant 2 : index
    %c0_15 = arith.constant 0 : index
    %c0_16 = arith.constant 0 : index
    %13 = vector.load %arg2[%c0_14, %c2, %c0_15, %c0_16] : memref<4x4x4x4xf32, #tpu.memory_space<vmem>>, vector<1x1x4x4xf32>
    %14 = vector.shape_cast %13 : vector<1x1x4x4xf32> to vector<4x4xf32>
    %cst_17 = arith.constant dense<0.000000e+00> : vector<4x72xf32>
    %15 = tpu.matmul %14, %12, %cst_17 {dimension_numbers = #tpu.dot_dimension_numbers<[1], [0], [0], [1], [0, 0, 1, 1], [], []>} : vector<4x4xf32>, vector<4x72xf32>, vector<4x72xf32> -> vector<4x72xf32>
    %16 = arith.addf %10, %15 : vector<4x72xf32>
    %c0_18 = arith.constant 0 : index
    %c0_19 = arith.constant 0 : index
    %c0_20 = arith.constant 0 : index
    %17 = vector.load %arg1[%c0_18, %c0_19, %c0_20] : memref<1x4x82xf32, #tpu.memory_space<vmem>>, vector<1x4x72xf32>
    %18 = vector.shape_cast %17 : vector<1x4x72xf32> to vector<4x72xf32>
    %c0_21 = arith.constant 0 : index
    %c3 = arith.constant 3 : index
    %c0_22 = arith.constant 0 : index
    %c0_23 = arith.constant 0 : index
    %19 = vector.load %arg2[%c0_21, %c3, %c0_22, %c0_23] : memref<4x4x4x4xf32, #tpu.memory_space<vmem>>, vector<1x1x4x4xf32>
    %20 = vector.shape_cast %19 : vector<1x1x4x4xf32> to vector<4x4xf32>
    %cst_24 = arith.constant dense<0.000000e+00> : vector<4x72xf32>
    %21 = tpu.matmul %20, %18, %cst_24 {dimension_numbers = #tpu.dot_dimension_numbers<[1], [0], [0], [1], [0, 0, 1, 1], [], []>} : vector<4x4xf32>, vector<4x72xf32>, vector<4x72xf32> -> vector<4x72xf32>
    %22 = arith.addf %16, %21 : vector<4x72xf32>
    %c0_25 = arith.constant 0 : index
    %c0_26 = arith.constant 0 : index
    %c10_27 = arith.constant 10 : index
    %23 = vector.load %arg1[%c0_25, %c0_26, %c10_27] : memref<1x4x82xf32, #tpu.memory_space<vmem>>, vector<1x4x72xf32>
    %24 = vector.shape_cast %23 : vector<1x4x72xf32> to vector<4x72xf32>
    %c1_28 = arith.constant 1 : index
    %c0_29 = arith.constant 0 : index
    %c0_30 = arith.constant 0 : index
    %c0_31 = arith.constant 0 : index
    %25 = vector.load %arg2[%c1_28, %c0_29, %c0_30, %c0_31] : memref<4x4x4x4xf32, #tpu.memory_space<vmem>>, vector<1x1x4x4xf32>
    %26 = vector.shape_cast %25 : vector<1x1x4x4xf32> to vector<4x4xf32>
    %cst_32 = arith.constant dense<0.000000e+00> : vector<4x72xf32>
    %27 = tpu.matmul %26, %24, %cst_32 {dimension_numbers = #tpu.dot_dimension_numbers<[1], [0], [0], [1], [0, 0, 1, 1], [], []>} : vector<4x4xf32>, vector<4x72xf32>, vector<4x72xf32> -> vector<4x72xf32>
    %c0_33 = arith.constant 0 : index
    %c0_34 = arith.constant 0 : index
    %c9_35 = arith.constant 9 : index
    %28 = vector.load %arg1[%c0_33, %c0_34, %c9_35] : memref<1x4x82xf32, #tpu.memory_space<vmem>>, vector<1x4x72xf32>
    %29 = vector.shape_cast %28 : vector<1x4x72xf32> to vector<4x72xf32>
    %c1_36 = arith.constant 1 : index
    %c1_37 = arith.constant 1 : index
    %c0_38 = arith.constant 0 : index
    %c0_39 = arith.constant 0 : index
    %30 = vector.load %arg2[%c1_36, %c1_37, %c0_38, %c0_39] : memref<4x4x4x4xf32, #tpu.memory_space<vmem>>, vector<1x1x4x4xf32>
    %31 = vector.shape_cast %30 : vector<1x1x4x4xf32> to vector<4x4xf32>
    %cst_40 = arith.constant dense<0.000000e+00> : vector<4x72xf32>
    %32 = tpu.matmul %31, %29, %cst_40 {dimension_numbers = #tpu.dot_dimension_numbers<[1], [0], [0], [1], [0, 0, 1, 1], [], []>} : vector<4x4xf32>, vector<4x72xf32>, vector<4x72xf32> -> vector<4x72xf32>
    %33 = arith.addf %27, %32 : vector<4x72xf32>
    %c0_41 = arith.constant 0 : index
    %c0_42 = arith.constant 0 : index
    %c1_43 = arith.constant 1 : index
    %34 = vector.load %arg1[%c0_41, %c0_42, %c1_43] : memref<1x4x82xf32, #tpu.memory_space<vmem>>, vector<1x4x72xf32>
    %35 = vector.shape_cast %34 : vector<1x4x72xf32> to vector<4x72xf32>
    %c1_44 = arith.constant 1 : index
    %c2_45 = arith.constant 2 : index
    %c0_46 = arith.constant 0 : index
    %c0_47 = arith.constant 0 : index
    %36 = vector.load %arg2[%c1_44, %c2_45, %c0_46, %c0_47] : memref<4x4x4x4xf32, #tpu.memory_space<vmem>>, vector<1x1x4x4xf32>
    %37 = vector.shape_cast %36 : vector<1x1x4x4xf32> to vector<4x4xf32>
    %cst_48 = arith.constant dense<0.000000e+00> : vector<4x72xf32>
    %38 = tpu.matmul %37, %35, %cst_48 {dimension_numbers = #tpu.dot_dimension_numbers<[1], [0], [0], [1], [0, 0, 1, 1], [], []>} : vector<4x4xf32>, vector<4x72xf32>, vector<4x72xf32> -> vector<4x72xf32>
    %39 = arith.addf %33, %38 : vector<4x72xf32>
    %c0_49 = arith.constant 0 : index
    %c0_50 = arith.constant 0 : index
    %c0_51 = arith.constant 0 : index
    %40 = vector.load %arg1[%c0_49, %c0_50, %c0_51] : memref<1x4x82xf32, #tpu.memory_space<vmem>>, vector<1x4x72xf32>
    %41 = vector.shape_cast %40 : vector<1x4x72xf32> to vector<4x72xf32>
    %c1_52 = arith.constant 1 : index
    %c3_53 = arith.constant 3 : index
    %c0_54 = arith.constant 0 : index
    %c0_55 = arith.constant 0 : index
    %42 = vector.load %arg2[%c1_52, %c3_53, %c0_54, %c0_55] : memref<4x4x4x4xf32, #tpu.memory_space<vmem>>, vector<1x1x4x4xf32>
    %43 = vector.shape_cast %42 : vector<1x1x4x4xf32> to vector<4x4xf32>
    %cst_56 = arith.constant dense<0.000000e+00> : vector<4x72xf32>
    %44 = tpu.matmul %43, %41, %cst_56 {dimension_numbers = #tpu.dot_dimension_numbers<[1], [0], [0], [1], [0, 0, 1, 1], [], []>} : vector<4x4xf32>, vector<4x72xf32>, vector<4x72xf32> -> vector<4x72xf32>
    %45 = arith.addf %39, %44 : vector<4x72xf32>
    %c0_57 = arith.constant 0 : index
    %c0_58 = arith.constant 0 : index
    %c10_59 = arith.constant 10 : index
    %46 = vector.load %arg1[%c0_57, %c0_58, %c10_59] : memref<1x4x82xf32, #tpu.memory_space<vmem>>, vector<1x4x72xf32>
    %47 = vector.shape_cast %46 : vector<1x4x72xf32> to vector<4x72xf32>
    %c2_60 = arith.constant 2 : index
    %c0_61 = arith.constant 0 : index
    %c0_62 = arith.constant 0 : index
    %c0_63 = arith.constant 0 : index
    %48 = vector.load %arg2[%c2_60, %c0_61, %c0_62, %c0_63] : memref<4x4x4x4xf32, #tpu.memory_space<vmem>>, vector<1x1x4x4xf32>
    %49 = vector.shape_cast %48 : vector<1x1x4x4xf32> to vector<4x4xf32>
    %cst_64 = arith.constant dense<0.000000e+00> : vector<4x72xf32>
    %50 = tpu.matmul %49, %47, %cst_64 {dimension_numbers = #tpu.dot_dimension_numbers<[1], [0], [0], [1], [0, 0, 1, 1], [], []>} : vector<4x4xf32>, vector<4x72xf32>, vector<4x72xf32> -> vector<4x72xf32>
    %c0_65 = arith.constant 0 : index
    %c0_66 = arith.constant 0 : index
    %c9_67 = arith.constant 9 : index
    %51 = vector.load %arg1[%c0_65, %c0_66, %c9_67] : memref<1x4x82xf32, #tpu.memory_space<vmem>>, vector<1x4x72xf32>
    %52 = vector.shape_cast %51 : vector<1x4x72xf32> to vector<4x72xf32>
    %c2_68 = arith.constant 2 : index
    %c1_69 = arith.constant 1 : index
    %c0_70 = arith.constant 0 : index
    %c0_71 = arith.constant 0 : index
    %53 = vector.load %arg2[%c2_68, %c1_69, %c0_70, %c0_71] : memref<4x4x4x4xf32, #tpu.memory_space<vmem>>, vector<1x1x4x4xf32>
    %54 = vector.shape_cast %53 : vector<1x1x4x4xf32> to vector<4x4xf32>
    %cst_72 = arith.constant dense<0.000000e+00> : vector<4x72xf32>
    %55 = tpu.matmul %54, %52, %cst_72 {dimension_numbers = #tpu.dot_dimension_numbers<[1], [0], [0], [1], [0, 0, 1, 1], [], []>} : vector<4x4xf32>, vector<4x72xf32>, vector<4x72xf32> -> vector<4x72xf32>
    %56 = arith.addf %50, %55 : vector<4x72xf32>
    %c0_73 = arith.constant 0 : index
    %c0_74 = arith.constant 0 : index
    %c1_75 = arith.constant 1 : index
    %57 = vector.load %arg1[%c0_73, %c0_74, %c1_75] : memref<1x4x82xf32, #tpu.memory_space<vmem>>, vector<1x4x72xf32>
    %58 = vector.shape_cast %57 : vector<1x4x72xf32> to vector<4x72xf32>
    %c2_76 = arith.constant 2 : index
    %c2_77 = arith.constant 2 : index
    %c0_78 = arith.constant 0 : index
    %c0_79 = arith.constant 0 : index
    %59 = vector.load %arg2[%c2_76, %c2_77, %c0_78, %c0_79] : memref<4x4x4x4xf32, #tpu.memory_space<vmem>>, vector<1x1x4x4xf32>
    %60 = vector.shape_cast %59 : vector<1x1x4x4xf32> to vector<4x4xf32>
    %cst_80 = arith.constant dense<0.000000e+00> : vector<4x72xf32>
    %61 = tpu.matmul %60, %58, %cst_80 {dimension_numbers = #tpu.dot_dimension_numbers<[1], [0], [0], [1], [0, 0, 1, 1], [], []>} : vector<4x4xf32>, vector<4x72xf32>, vector<4x72xf32> -> vector<4x72xf32>
    %62 = arith.addf %56, %61 : vector<4x72xf32>
    %c0_81 = arith.constant 0 : index
    %c0_82 = arith.constant 0 : index
    %c0_83 = arith.constant 0 : index
    %63 = vector.load %arg1[%c0_81, %c0_82, %c0_83] : memref<1x4x82xf32, #tpu.memory_space<vmem>>, vector<1x4x72xf32>
    %64 = vector.shape_cast %63 : vector<1x4x72xf32> to vector<4x72xf32>
    %c2_84 = arith.constant 2 : index
    %c3_85 = arith.constant 3 : index
    %c0_86 = arith.constant 0 : index
    %c0_87 = arith.constant 0 : index
    %65 = vector.load %arg2[%c2_84, %c3_85, %c0_86, %c0_87] : memref<4x4x4x4xf32, #tpu.memory_space<vmem>>, vector<1x1x4x4xf32>
    %66 = vector.shape_cast %65 : vector<1x1x4x4xf32> to vector<4x4xf32>
    %cst_88 = arith.constant dense<0.000000e+00> : vector<4x72xf32>
    %67 = tpu.matmul %66, %64, %cst_88 {dimension_numbers = #tpu.dot_dimension_numbers<[1], [0], [0], [1], [0, 0, 1, 1], [], []>} : vector<4x4xf32>, vector<4x72xf32>, vector<4x72xf32> -> vector<4x72xf32>
    %68 = arith.addf %62, %67 : vector<4x72xf32>
    %c0_89 = arith.constant 0 : index
    %c0_90 = arith.constant 0 : index
    %c10_91 = arith.constant 10 : index
    %69 = vector.load %arg1[%c0_89, %c0_90, %c10_91] : memref<1x4x82xf32, #tpu.memory_space<vmem>>, vector<1x4x72xf32>
    %70 = vector.shape_cast %69 : vector<1x4x72xf32> to vector<4x72xf32>
    %c3_92 = arith.constant 3 : index
    %c0_93 = arith.constant 0 : index
    %c0_94 = arith.constant 0 : index
    %c0_95 = arith.constant 0 : index
    %71 = vector.load %arg2[%c3_92, %c0_93, %c0_94, %c0_95] : memref<4x4x4x4xf32, #tpu.memory_space<vmem>>, vector<1x1x4x4xf32>
    %72 = vector.shape_cast %71 : vector<1x1x4x4xf32> to vector<4x4xf32>
    %cst_96 = arith.constant dense<0.000000e+00> : vector<4x72xf32>
    %73 = tpu.matmul %72, %70, %cst_96 {dimension_numbers = #tpu.dot_dimension_numbers<[1], [0], [0], [1], [0, 0, 1, 1], [], []>} : vector<4x4xf32>, vector<4x72xf32>, vector<4x72xf32> -> vector<4x72xf32>
    %c0_97 = arith.constant 0 : index
    %c0_98 = arith.constant 0 : index
    %c9_99 = arith.constant 9 : index
    %74 = vector.load %arg1[%c0_97, %c0_98, %c9_99] : memref<1x4x82xf32, #tpu.memory_space<vmem>>, vector<1x4x72xf32>
    %75 = vector.shape_cast %74 : vector<1x4x72xf32> to vector<4x72xf32>
    %c3_100 = arith.constant 3 : index
    %c1_101 = arith.constant 1 : index
    %c0_102 = arith.constant 0 : index
    %c0_103 = arith.constant 0 : index
    %76 = vector.load %arg2[%c3_100, %c1_101, %c0_102, %c0_103] : memref<4x4x4x4xf32, #tpu.memory_space<vmem>>, vector<1x1x4x4xf32>
    %77 = vector.shape_cast %76 : vector<1x1x4x4xf32> to vector<4x4xf32>
    %cst_104 = arith.constant dense<0.000000e+00> : vector<4x72xf32>
    %78 = tpu.matmul %77, %75, %cst_104 {dimension_numbers = #tpu.dot_dimension_numbers<[1], [0], [0], [1], [0, 0, 1, 1], [], []>} : vector<4x4xf32>, vector<4x72xf32>, vector<4x72xf32> -> vector<4x72xf32>
    %79 = arith.addf %73, %78 : vector<4x72xf32>
    %c0_105 = arith.constant 0 : index
    %c0_106 = arith.constant 0 : index
    %c1_107 = arith.constant 1 : index
    %80 = vector.load %arg1[%c0_105, %c0_106, %c1_107] : memref<1x4x82xf32, #tpu.memory_space<vmem>>, vector<1x4x72xf32>
    %81 = vector.shape_cast %80 : vector<1x4x72xf32> to vector<4x72xf32>
    %c3_108 = arith.constant 3 : index
    %c2_109 = arith.constant 2 : index
    %c0_110 = arith.constant 0 : index
    %c0_111 = arith.constant 0 : index
    %82 = vector.load %arg2[%c3_108, %c2_109, %c0_110, %c0_111] : memref<4x4x4x4xf32, #tpu.memory_space<vmem>>, vector<1x1x4x4xf32>
    %83 = vector.shape_cast %82 : vector<1x1x4x4xf32> to vector<4x4xf32>
    %cst_112 = arith.constant dense<0.000000e+00> : vector<4x72xf32>
    %84 = tpu.matmul %83, %81, %cst_112 {dimension_numbers = #tpu.dot_dimension_numbers<[1], [0], [0], [1], [0, 0, 1, 1], [], []>} : vector<4x4xf32>, vector<4x72xf32>, vector<4x72xf32> -> vector<4x72xf32>
    %85 = arith.addf %79, %84 : vector<4x72xf32>
    %c0_113 = arith.constant 0 : index
    %c0_114 = arith.constant 0 : index
    %c0_115 = arith.constant 0 : index
    %86 = vector.load %arg1[%c0_113, %c0_114, %c0_115] : memref<1x4x82xf32, #tpu.memory_space<vmem>>, vector<1x4x72xf32>
    %87 = vector.shape_cast %86 : vector<1x4x72xf32> to vector<4x72xf32>
    %c3_116 = arith.constant 3 : index
    %c3_117 = arith.constant 3 : index
    %c0_118 = arith.constant 0 : index
    %c0_119 = arith.constant 0 : index
    %88 = vector.load %arg2[%c3_116, %c3_117, %c0_118, %c0_119] : memref<4x4x4x4xf32, #tpu.memory_space<vmem>>, vector<1x1x4x4xf32>
    %89 = vector.shape_cast %88 : vector<1x1x4x4xf32> to vector<4x4xf32>
    %cst_120 = arith.constant dense<0.000000e+00> : vector<4x72xf32>
    %90 = tpu.matmul %89, %87, %cst_120 {dimension_numbers = #tpu.dot_dimension_numbers<[1], [0], [0], [1], [0, 0, 1, 1], [], []>} : vector<4x4xf32>, vector<4x72xf32>, vector<4x72xf32> -> vector<4x72xf32>
    %91 = arith.addf %85, %90 : vector<4x72xf32>
    %92 = tpu.concatenate %22, %45, %68, %91 in 0 : vector<4x72xf32>, vector<4x72xf32>, vector<4x72xf32>, vector<4x72xf32> -> vector<16x72xf32>
    %c0_121 = arith.constant 0 : index
    %c0_122 = arith.constant 0 : index
    %93 = vector.load %arg3[%c0_121, %c0_122] : memref<16x1xf32, #tpu.memory_space<vmem>>, vector<16x1xf32>
    %94 = vector.broadcast %93 : vector<16x1xf32> to vector<16x72xf32>
    %95 = arith.addf %92, %94 : vector<16x72xf32>
    %c0_123 = arith.constant 0 : index
    %c0_124 = arith.constant 0 : index
    %c0_125 = arith.constant 0 : index
    %96 = vector.load %arg4[%c0_123, %c0_124, %c0_125] : memref<1x16x72xf32, #tpu.memory_space<vmem>>, vector<1x16x72xf32>
    %97 = vector.shape_cast %96 : vector<1x16x72xf32> to vector<16x72xf32>
    %98 = vector.shape_cast %95 : vector<16x72xf32> to vector<1x16x72xf32>
    tpu.vector_store %arg4[%c0_123, %c0_124, %c0_125], %98 {strides = array<i32>} : memref<1x16x72xf32, #tpu.memory_space<vmem>>, vector<1x16x72xf32>,
    return
  }
  func.func @transform_0(%arg0: i32) -> (i32, i32, i32) {
    %c0_i32 = arith.constant 0 : i32
    %c0_i32_0 = arith.constant 0 : i32
    %c0_i32_1 = arith.constant 0 : i32
    return %arg0, %c0_i32, %c0_i32_0 : i32, i32, i32
  }
  func.func @transform_1(%arg0: i32) -> (i32, i32, i32, i32) {
    %c0_i32 = arith.constant 0 : i32
    %c0_i32_0 = arith.constant 0 : i32
    %c0_i32_1 = arith.constant 0 : i32
    %c0_i32_2 = arith.constant 0 : i32
    %c0_i32_3 = arith.constant 0 : i32
    return %c0_i32, %c0_i32_0, %c0_i32_1, %c0_i32_2 : i32, i32, i32, i32
  }
  func.func @transform_2(%arg0: i32) -> (i32, i32) {
    %c0_i32 = arith.constant 0 : i32
    %c0_i32_0 = arith.constant 0 : i32
    %c0_i32_1 = arith.constant 0 : i32
    return %c0_i32, %c0_i32_0 : i32, i32
  }
  func.func @transform_3(%arg0: i32) -> (i32, i32, i32) {
    %c0_i32 = arith.constant 0 : i32
    %c0_i32_0 = arith.constant 0 : i32
    %c0_i32_1 = arith.constant 0 : i32
    return %arg0, %c0_i32, %c0_i32_0 : i32, i32, i32
  }
}

</mosaic_0001>

<llo_original>
// kernel: tile.14
$region0: #{tile.14}
  #allocation2 [shape = 's32[1]{0}', space=sflag, size = 0x4, scoped, tag = 'scoped memory for tile.14']
  %s0 = inlined_call_operand.hbm [shape: f32[4], index: 0, kind: input, shape index: {}]
  %s1 = inlined_call_operand.vmem [shape: f32[4,1,1,4], index: 1, kind: output, shape index: {}]
  $region1: #{tile.14} parent=0
    #allocation0 [shape = 'u8[512]{0}', space=vmem, size = 0x400, scoped, tag = 'operand span for operand 0']
    #allocation1 [shape = 's32[1]{0}', space=sflag, size = 0x4, scoped, tag = 'scoped memory for tile.14']
    %2 = vsyncpa [#allocation1], 0
    // Predicated region
    $region2: #{tile.14} parent=1 // pred_check
      _
    $region3: #{tile.14} parent=1 // pred_check_branch
      %4 = sbr.rel (0) target = $region5
    $region4: #{tile.14} parent=1 // pred_region
      %s6 = ssub.s32 16, 16
      %7 = vsyncadd [#allocation1], %s6
      %s9 = sshll.u32 [#allocation0], 4
      %s10 = int_to_ptr.vmem [resolvable:$true] %s9
      %12 = dma.hbm_to_vmem [thread:$0]  %s0, 16, %s10, [#allocation1]
    $region5: #{tile.14} parent=1 // pred_fallthru
      _
    // Predicated region
    $region6: #{tile.14} parent=1 // pred_check
      _
    $region7: #{tile.14} parent=1 // pred_check_branch
      %14 = sbr.rel (0) target = $region9
    $region8: #{tile.14} parent=1 // pred_region
      %15 = dma.done [#allocation1], 16
    $region9: #{tile.14} parent=1 // pred_fallthru
      _
    %v16 = vld [vmem:[#allocation0] ss:$0 sm:$0xff]
    %17 = vst [vmem:[%s1] sm:$0xf] %v16
    %18 = vsyncpa [#allocation1], 1

// kernel: tile.10
$region0: #{tile.10}
  #allocation0 [shape = 's32[1]{0}', space=sflag, size = 0x4, scoped, tag = 'scoped memory for tile.10']
  %s0 = inlined_call_operand.vmem [shape: f32[4], index: 0, kind: input, shape index: {}]
  %s1 = inlined_call_operand.vmem [shape: f32[4,1,1,4], index: 1, kind: output, shape index: {}]
  // Predicated region
  $region2: #{tile.10} parent=0 // pred_check
    _
  $region3: #{tile.10} parent=0 // pred_check_branch
    %3 = sbr.rel (0) target = $region5
  $region4: #{tile.10} parent=0 // pred_region
    _
  $region5: #{tile.10} parent=0 // pred_fallthru
    _
  %v4 = vld [vmem:[%s0] ss:$0 sm:$0xff]
  %5 = vst [vmem:[%s1] sm:$0xf] %v4

// kernel: tile.0
$region0: #{tile.0}
  %s0 = inlined_call_operand.vmem [shape: f32[4,1,1,4], index: 0, kind: input, shape index: {}]
  %s1 = inlined_call_operand.vmem [shape: f32[16,1], index: 1, kind: output, shape index: {}]
  $region1: #{tile.0} parent=0
    #allocation0 [shape = 'u8[4096]{0}', space=vmem, size = 0x1000, scoped, tag = 'scoped mem for input reshape']
    %s3 = sshll.u32 1, 4
    %s4 = ssub.s32 %s3, 1
    %v5 = vld [vmem:[%s0] sm:%s4]
    %6 = vst [vmem:[#allocation0] sm:%s4] %v5
    %v7 = vld [vmem:[#allocation0] sm:$0xf]
    %vm8 = vcmask 7168
    %9 = vst.msk [vmem:[%s1] ss:$4 sm:$0xf] %vm8, %v7
    %v10 = vld [vmem:[#allocation0] sm:$0xf]
    %11 = vrot.lane.b32.xlu0 %v10, 127
    %v12 = vpop.permute.xlu0 %11
    %vm13 = vcmask 7168
    %s14 = scalar_lea.vmem %s1, 1
    %15 = vst.msk [vmem:[%s14] ss:$4 sm:$0xf] %vm13, %v12
    %v16 = vld [vmem:[#allocation0] sm:$0xf]
    %17 = vrot.lane.b32.xlu0 %v16, 126
    %v18 = vpop.permute.xlu0 %17
    %vm19 = vcmask 7168
    %s20 = scalar_lea.vmem %s1, 2
    %21 = vst.msk [vmem:[%s20] ss:$4 sm:$0xf] %vm19, %v18
    %v22 = vld [vmem:[#allocation0] sm:$0xf]
    %23 = vrot.lane.b32.xlu0 %v22, 125
    %v24 = vpop.permute.xlu0 %23
    %vm25 = vcmask 7168
    %s26 = scalar_lea.vmem %s1, 3
    %27 = vst.msk [vmem:[%s26] ss:$4 sm:$0xf] %vm25, %v24

// kernel: _lambda_.3
$region0: #{_lambda_.3}
  #allocation0 [shape = 'u32[]', space=smem, size = 0x4, offset = 0x4, fixed_abs, tag = 'smem constant byte address 0x4 - core index']
  #allocation1 [shape = 'u32[144,128]{1,0:T(1,128)}', space=vmem, size = 0x12000, scoped, tag = 'internal scratch']
  %s0 = inlined_call_operand.vmem [shape: f32[2,32], index: 0, kind: input, shape index: {}]
  %s1 = inlined_call_operand.vmem [shape: f32[32,32], index: 1, kind: input, shape index: {}]
  %s2 = inlined_call_operand.vmem [shape: f32[1,32], index: 2, kind: input, shape index: {}]
  %s3 = inlined_call_operand.vmem [shape: f32[2,32], index: 3, kind: output, shape index: {}]
  %s4 = sld [smem:[#allocation0]]
  $region22: #{_lambda_.3} parent=0
    _
  %s6 = ssub.s32 1, %s4
  %s7 = scalar_select 0, %s6, %s4
  // Predicated region
  $region2: #{_lambda_.3} parent=0 // pred_check
    _
  $region3: #{_lambda_.3} parent=0 // pred_check_branch
    %9 = sbr.rel (0) target = $region5
  $region4: #{_lambda_.3} parent=0 // pred_region
    _
  $region5: #{_lambda_.3} parent=0 // pred_fallthru
    _
  // Predicated region
  $region6: #{_lambda_.3} parent=0 // pred_check
    _
  $region7: #{_lambda_.3} parent=0 // pred_check_branch
    %11 = sbr.rel (0) target = $region9
  $region8: #{_lambda_.3} parent=0 // pred_region
    _
  $region9: #{_lambda_.3} parent=0 // pred_fallthru
    _
  // Predicated region
  $region10: #{_lambda_.3} parent=0 // pred_check
    _
  $region11: #{_lambda_.3} parent=0 // pred_check_branch
    %13 = sbr.rel (0) target = $region13
  $region12: #{_lambda_.3} parent=0 // pred_region
    _
  $region13: #{_lambda_.3} parent=0 // pred_fallthru
    _
  %v14 = vld [vmem:[%s0] sm:$0x3]
  %v15 = vld [vmem:[%s1] sm:$0xff]
  %v16 = vld [vmem:[%s1 + $0x8] sm:$0xff]
  %v17 = vld [vmem:[%s1 + $0x10] sm:$0xff]
  %v18 = vld [vmem:[%s1 + $0x18] sm:$0xff]
  %v19 = vld [vmem:[%s2] sm:$0x1]
  %v21 = vlaneseq
  %v22 = vshrl.u32 %v21, 7
  %v23 = vsub.s32 0, %v22
  %v24 = vrot.slane %v19, %v23
  %vm26 = vcmask 261120
  %v28 = vsel %vm26, %v14, 0
  %30 = vmatprep.subr.mxu0 0.0
  %31 = vmatpush1.msra.mxu0 0.0
  %32 = vmatprep.subr.mxu0 0.0
  %33 = vmatpush1.msra.mxu0 0.0
  %34 = vmatprep.subr.mxu0 0.0
  %35 = vmatpush1.msra.mxu0 0.0
  %36 = vmatprep.subr.mxu0 0.0
  %37 = vmatpush1.msra.mxu0 0.0
  %38 = vmatprep.subr.mxu0 0.0
  %39 = vmatpush1.msra.mxu0 0.0
  %40 = vmatprep.subr.mxu0 0.0
  %41 = vmatpush1.msra.mxu0 0.0
  %42 = vmatprep.subr.mxu0 0.0
  %43 = vmatpush1.msra.mxu0 0.0
  %44 = vmatprep.subr.mxu0 0.0
  %45 = vmatpush1.msra.mxu0 0.0
  %46 = vmatprep.subr.mxu0 0.0
  %47 = vmatpush1.msra.mxu0 0.0
  %48 = vmatprep.subr.mxu0 0.0
  %49 = vmatpush1.msra.mxu0 0.0
  %50 = vmatprep.subr.mxu0 0.0
  %51 = vmatpush1.msra.mxu0 0.0
  %52 = vmatprep.subr.mxu0 0.0
  %53 = vmatpush1.msra.mxu0 0.0
  %54 = vmatprep.subr.mxu0 0.0
  %55 = vmatpush1.msra.mxu0 %v18
  %56 = vmatprep.subr.mxu0 0.0
  %57 = vmatpush1.msra.mxu0 %v17
  %58 = vmatprep.subr.mxu0 0.0
  %59 = vmatpush1.msra.mxu0 %v16
  %60 = vmatprep.subr.mxu0 0.0
  %61 = vmatpush1.msra.mxu0 %v15
  %62 = vmatprep.subr.mxu0 0.0
  %63 = vmatpush2.msra.mxu0 0.0
  %64 = vmatprep.subr.mxu0 0.0
  %65 = vmatpush2.msra.mxu0 0.0
  %66 = vmatprep.subr.mxu0 0.0
  %67 = vmatpush2.msra.mxu0 0.0
  %68 = vmatprep.subr.mxu0 0.0
  %69 = vmatpush2.msra.mxu0 0.0
  %70 = vmatprep.subr.mxu0 0.0
  %71 = vmatpush2.msra.mxu0 0.0
  %72 = vmatprep.subr.mxu0 0.0
  %73 = vmatpush2.msra.mxu0 0.0
  %74 = vmatprep.subr.mxu0 0.0
  %75 = vmatpush2.msra.mxu0 0.0
  %76 = vmatprep.subr.mxu0 0.0
  %77 = vmatpush2.msra.mxu0 0.0
  %78 = vmatprep.subr.mxu0 0.0
  %79 = vmatpush2.msra.mxu0 0.0
  %80 = vmatprep.subr.mxu0 0.0
  %81 = vmatpush2.msra.mxu0 0.0
  %82 = vmatprep.subr.mxu0 0.0
  %83 = vmatpush2.msra.mxu0 0.0
  %84 = vmatprep.subr.mxu0 0.0
  %85 = vmatpush2.msra.mxu0 0.0
  %86 = vmatprep.subr.mxu0 0.0
  %87 = vmatpush2.msra.mxu0 0.0
  %88 = vmatprep.subr.mxu0 0.0
  %89 = vmatpush2.msra.mxu0 0.0
  %90 = vmatprep.subr.mxu0 0.0
  %91 = vmatpush2.msra.mxu0 0.0
  %92 = vmatprep.subr.mxu0 0.0
  %93 = vmatpush2.msra.mxu0 0.0
  %94 = vmatprep.mubr.f32.mxu0 0.0
  %95 = vmatmul.mubr.f32.gmra.mxu0 %v28
  %v96 = vpop.f32.mrf.mxu0
  %v97 = vadd.f32 %v24, %v96
  %v98 = vpop.f32.mrf.mxu0
  %99 = vdwg.mxu0
  %v100 = vmax.f32 %v97, 0.0
  %vm101 = vcmask 254976
  %102 = vst.msk [vmem:[%s3] sm:$0x3] %vm101, %v100
  // Predicated region
  $region14: #{_lambda_.3} parent=0 // pred_check
    _
  $region15: #{_lambda_.3} parent=0 // pred_check_branch
    %104 = sbr.rel (0) target = $region17
  $region16: #{_lambda_.3} parent=0 // pred_region
    _
  $region17: #{_lambda_.3} parent=0 // pred_fallthru
    _
  // Predicated region
  $region18: #{_lambda_.3} parent=0 // pred_check
    _
  $region19: #{_lambda_.3} parent=0 // pred_check_branch
    %106 = sbr.rel (0) target = $region21
  $region20: #{_lambda_.3} parent=0 // pred_region
    _
  $region21: #{_lambda_.3} parent=0 // pred_fallthru
    _

// kernel: _lambda_.4
$region0: #{_lambda_.4}
  #allocation0 [shape = 'u32[]', space=smem, size = 0x4, offset = 0x4, fixed_abs, tag = 'smem constant byte address 0x4 - core index']
  #allocation1 [shape = 'u32[144,128]{1,0:T(1,128)}', space=vmem, size = 0x12000, scoped, tag = 'internal scratch']
  %s0 = inlined_call_operand.vmem [shape: f32[2,8,17], index: 0, kind: input, shape index: {}]
  %s1 = inlined_call_operand.vmem [shape: f32[4,4,4,8], index: 1, kind: input, shape index: {}]
  %s2 = inlined_call_operand.vmem [shape: f32[16,1], index: 2, kind: input, shape index: {}]
  %s3 = inlined_call_operand.vmem [shape: f32[2,16,12], index: 3, kind: output, shape index: {}]
  %s4 = sld [smem:[#allocation0]]
  $region45: #{_lambda_.4} parent=0
    _
  %s6 = ssub.s32 1, %s4
  %s7 = scalar_select 0, %s6, %s4
  loop: start=0, step=1, limit=4
  $region2: #{_lambda_.4} parent=0 // loop_pre_header
    _
  $region3: #{_lambda_.4} parent=0 // loop_header
    %s9 = sphi 0, %s13
    %p10 = scmp.ge.s32.totalorder %s9, 4
    %s19 = sphi 0, %s21
    %s22 = sphi 0, %s19
    %s23 = sphi 0, %s22
    %s39 = sphi 0, %s23
    %s43 = sphi 0, %s43
    %s45 = sphi 0, %s43
    %s46 = sphi 0, %s45
    %s60 = sphi 0, %s46
    %s64 = sphi 0, %s64
    %s66 = sphi 0, %s64
    %s67 = sphi 0, %s66
    %s81 = sphi 0, %s67
    %s87 = sphi 0, %s89
    %s90 = sphi 0, %s87
    %s91 = sphi 0, %s90
    %s107 = sphi 0, %s91
  $region4: #{_lambda_.4} parent=0 // loop_header_branch
    %12 = sbr.rel (%p10) target = $region8
  $region5: #{_lambda_.4} parent=0 // loop_body
    %s14 = ssub.s32 %s9, 1
    %s15 = ssub.s32 %s9, 2
    %s16 = sadd.s32 %s9, 1
    %s17 = ssub.s32 %s9, %s16
    %p18 = scmp.eq.s32.totalorder %s17, 0
    %s20 = sadd.s32 %s19, 1
    %s21 = scalar_select %p18, %s19, %s20
    %p24 = pneg %p18
    %p25 = scmp.eq.s32.totalorder %s9, 1
    %p26 = por %p24, %p25
    %p27 = scmp.ne.s32.totalorder %s19, %s22
    %p28 = scmp.eq.s32.totalorder %s9, 0
    %p29 = por %p27, %p28
    %p30 = scmp.ne.s32.totalorder %s19, %s22
    %p31 = scmp.eq.s32.totalorder %s14, 1
    %p32 = por %p30, %p31
    %p33 = scmp.ne.s32.totalorder %s22, %s23
    %p34 = scmp.eq.s32.totalorder %s14, 0
    %p35 = por %p33, %p34
    %p36 = scmp.ne.s32.totalorder %s22, %s23
    %p37 = scmp.eq.s32.totalorder %s15, 1
    %p38 = por %p36, %p37
    %p40 = scmp.ne.s32.totalorder %s23, %s39
    %p41 = scmp.eq.s32.totalorder %s15, 0
    %p42 = por %p40, %p41
    %s44 = sadd.s32 %s43, 1
    %p47 = scmp.eq.s32.totalorder %s9, 1
    %p48 = scmp.ne.s32.totalorder %s43, %s45
    %p49 = scmp.eq.s32.totalorder %s9, 0
    %p50 = por %p48, %p49
    %p51 = scmp.ne.s32.totalorder %s43, %s45
    %p52 = scmp.eq.s32.totalorder %s14, 1
    %p53 = por %p51, %p52
    %p54 = scmp.ne.s32.totalorder %s45, %s46
    %p55 = scmp.eq.s32.totalorder %s14, 0
    %p56 = por %p54, %p55
    %p57 = scmp.ne.s32.totalorder %s45, %s46
    %p58 = scmp.eq.s32.totalorder %s15, 1
    %p59 = por %p57, %p58
    %p61 = scmp.ne.s32.totalorder %s46, %s60
    %p62 = scmp.eq.s32.totalorder %s15, 0
    %p63 = por %p61, %p62
    %s65 = sadd.s32 %s64, 1
    %p68 = scmp.eq.s32.totalorder %s9, 1
    %p69 = scmp.ne.s32.totalorder %s64, %s66
    %p70 = scmp.eq.s32.totalorder %s9, 0
    %p71 = por %p69, %p70
    %p72 = scmp.ne.s32.totalorder %s64, %s66
    %p73 = scmp.eq.s32.totalorder %s14, 1
    %p74 = por %p72, %p73
    %p75 = scmp.ne.s32.totalorder %s66, %s67
    %p76 = scmp.eq.s32.totalorder %s14, 0
    %p77 = por %p75, %p76
    %p78 = scmp.ne.s32.totalorder %s66, %s67
    %p79 = scmp.eq.s32.totalorder %s15, 1
    %p80 = por %p78, %p79
    %p82 = scmp.ne.s32.totalorder %s67, %s81
    %p83 = scmp.eq.s32.totalorder %s15, 0
    %p84 = por %p82, %p83
    %s85 = ssub.s32 %s9, %s16
    %p86 = scmp.eq.s32.totalorder %s85, 0
    %s88 = sadd.s32 %s87, 1
    %s89 = scalar_select %p86, %s87, %s88
    %p92 = pneg %p86
    %p93 = scmp.eq.s32.totalorder %s9, 1
    %p94 = por %p92, %p93
    %p95 = scmp.ne.s32.totalorder %s87, %s90
    %p96 = scmp.eq.s32.totalorder %s9, 0
    %p97 = por %p95, %p96
    %p98 = scmp.ne.s32.totalorder %s87, %s90
    %p99 = scmp.eq.s32.totalorder %s14, 1
    %p100 = por %p98, %p99
    %p101 = scmp.ne.s32.totalorder %s90, %s91
    %p102 = scmp.eq.s32.totalorder %s14, 0
    %p103 = por %p101, %p102
    %p104 = scmp.ne.s32.totalorder %s90, %s91
    %p105 = scmp.eq.s32.totalorder %s15, 1
    %p106 = por %p104, %p105
    %p108 = scmp.ne.s32.totalorder %s91, %s107
    %p109 = scmp.eq.s32.totalorder %s15, 0
    %p110 = por %p108, %p109
    %p111 = scmp.le.s32.totalorder 1, %s9
    %p112 = scmp.lt.s32.totalorder %s9, 3
    %p113 = pnand %p111, %p112
    %p114 = pneg %p113
    // Predicated region
    $region9: #{_lambda_.4} parent=5 // pred_check
      _
    $region10: #{_lambda_.4} parent=5 // pred_check_branch
      %116 = sbr.rel (%p113) target = $region12
    $region11: #{_lambda_.4} parent=5 // pred_region
      %s117 = ssub.s32 %s9, 1
      // Predicated region
      $region13: #{_lambda_.4} parent=11 // pred_check
        %p118 = pneg %p56
      $region14: #{_lambda_.4} parent=11 // pred_check_branch
        %120 = sbr.rel (%p118) target = $region16
      $region15: #{_lambda_.4} parent=11 // pred_region
        _
      $region16: #{_lambda_.4} parent=11 // pred_fallthru
        _
      // Predicated region
      $region17: #{_lambda_.4} parent=11 // pred_check
        %p121 = pneg %p77
      $region18: #{_lambda_.4} parent=11 // pred_check_branch
        %123 = sbr.rel (%p121) target = $region20
      $region19: #{_lambda_.4} parent=11 // pred_region
        _
      $region20: #{_lambda_.4} parent=11 // pred_fallthru
        _
    $region12: #{_lambda_.4} parent=5 // pred_fallthru
      _
    %p124 = scmp.lt.s32.totalorder %s9, 2
    // Predicated region
    $region21: #{_lambda_.4} parent=5 // pred_check
      %p125 = pneg %p124
    $region22: #{_lambda_.4} parent=5 // pred_check_branch
      %127 = sbr.rel (%p125) target = $region24
    $region23: #{_lambda_.4} parent=5 // pred_region
      // Predicated region
      $region25: #{_lambda_.4} parent=23 // pred_check
        %p128 = pneg %p29
      $region26: #{_lambda_.4} parent=23 // pred_check_branch
        %130 = sbr.rel (%p128) target = $region28
      $region27: #{_lambda_.4} parent=23 // pred_region
        %p131 = scmp.lt.s32.totalorder %s9, 1
        %s132 = scalar_select %p131, %s9, 1
        %s133 = smul.addr %s132, 8
        %s134 = scalar_lea.vmem %s0, %s133
      $region28: #{_lambda_.4} parent=23 // pred_fallthru
        _
    $region24: #{_lambda_.4} parent=5 // pred_fallthru
      _
    %p135 = scmp.le.s32.totalorder 1, %s9
    %p136 = scmp.lt.s32.totalorder %s9, 3
    %p137 = pnand %p135, %p136
    %p138 = pneg %p137
    // Predicated region
    $region29: #{_lambda_.4} parent=5 // pred_check
      _
    $region30: #{_lambda_.4} parent=5 // pred_check_branch
      %140 = sbr.rel (%p137) target = $region32
    $region31: #{_lambda_.4} parent=5 // pred_region
      %s141 = ssub.s32 %s9, 1
      %p142 = scmp.lt.s32.totalorder %s14, 1
      %s143 = scalar_select %p142, %s14, 1
      %s144 = smul.addr %s143, 8
      %s145 = scalar_lea.vmem %s0, %s144
      %p146 = pneg %p35
      %p147 = pneg %p32
      %p148 = pneg %p56
      %p149 = pneg %p53
      %p150 = pneg %p77
      %p151 = pneg %p74
      %p152 = pneg %p103
      %p153 = pneg %p100
      %p154 = scmp.lt.s32.totalorder %s14, 1
      %s155 = scalar_select %p154, %s14, 1
      %s156 = smul.addr %s155, 2
      %s157 = smul.addr %s156, 8
      %s158 = scalar_lea.vmem %s3, %s157
      %p159 = scmp.lt.s32.totalorder %s14, 1
      %s160 = scalar_select %p159, %s14, 1
      %s161 = smul.addr %s160, 8
      %s162 = scalar_lea.vmem %s0, %s161
      %p163 = scmp.lt.s32.totalorder %s14, 1
      %s164 = scalar_select %p163, %s14, 1
      %s165 = smul.addr %s164, 2
      %s166 = smul.addr %s165, 8
      %s167 = scalar_lea.vmem %s3, %s166
      %v168 = vld [vmem:[%s162] sm:$0xff]
      %v169 = vld [vmem:[%s1] sm:$0xf]
      %s170 = scalar_lea.vmem %s1, 4
      %v171 = vld [vmem:[%s170] sm:$0xf]
      %173 = vrot.lane.b32.xlu0 %v168, 124
      %v174 = vpop.permute.xlu0 %173
      %vm176 = vcmask 64512
      %v178 = vsel %vm176, %v171, 0
      %180 = vmatprep.subr.mxu0 0.0
      %181 = vmatpush1.msra.mxu0 0.0
      %182 = vmatprep.subr.mxu0 0.0
      %183 = vmatpush1.msra.mxu0 0.0
      %184 = vmatprep.subr.mxu0 0.0
      %185 = vmatpush1.msra.mxu0 0.0
      %186 = vmatprep.subr.mxu0 0.0
      %187 = vmatpush1.msra.mxu0 0.0
      %188 = vmatprep.subr.mxu0 0.0
      %189 = vmatpush1.msra.mxu0 0.0
      %190 = vmatprep.subr.mxu0 0.0
      %191 = vmatpush1.msra.mxu0 0.0
      %192 = vmatprep.subr.mxu0 0.0
      %193 = vmatpush1.msra.mxu0 0.0
      %194 = vmatprep.subr.mxu0 0.0
      %195 = vmatpush1.msra.mxu0 0.0
      %196 = vmatprep.subr.mxu0 0.0
      %197 = vmatpush1.msra.mxu0 0.0
      %198 = vmatprep.subr.mxu0 0.0
      %199 = vmatpush1.msra.mxu0 0.0
      %200 = vmatprep.subr.mxu0 0.0
      %201 = vmatpush1.msra.mxu0 0.0
      %202 = vmatprep.subr.mxu0 0.0
      %203 = vmatpush1.msra.mxu0 0.0
      %204 = vmatprep.subr.mxu0 0.0
      %205 = vmatpush1.msra.mxu0 0.0
      %206 = vmatprep.subr.mxu0 0.0
      %207 = vmatpush1.msra.mxu0 0.0
      %208 = vmatprep.subr.mxu0 0.0
      %209 = vmatpush1.msra.mxu0 0.0
      %210 = vmatprep.subr.mxu0 0.0
      %211 = vmatpush1.msra.mxu0 %v174
      %212 = vmatprep.subr.mxu0 0.0
      %213 = vmatpush2.msra.mxu0 0.0
      %214 = vmatprep.subr.mxu0 0.0
      %215 = vmatpush2.msra.mxu0 0.0
      %216 = vmatprep.subr.mxu0 0.0
      %217 = vmatpush2.msra.mxu0 0.0
      %218 = vmatprep.subr.mxu0 0.0
      %219 = vmatpush2.msra.mxu0 0.0
      %220 = vmatprep.subr.mxu0 0.0
      %221 = vmatpush2.msra.mxu0 0.0
      %222 = vmatprep.subr.mxu0 0.0
      %223 = vmatpush2.msra.mxu0 0.0
      %224 = vmatprep.subr.mxu0 0.0
      %225 = vmatpush2.msra.mxu0 0.0
      %226 = vmatprep.subr.mxu0 0.0
      %227 = vmatpush2.msra.mxu0 0.0
      %228 = vmatprep.subr.mxu0 0.0
      %229 = vmatpush2.msra.mxu0 0.0
      %230 = vmatprep.subr.mxu0 0.0
      %231 = vmatpush2.msra.mxu0 0.0
      %232 = vmatprep.subr.mxu0 0.0
      %233 = vmatpush2.msra.mxu0 0.0
      %234 = vmatprep.subr.mxu0 0.0
      %235 = vmatpush2.msra.mxu0 0.0
      %236 = vmatprep.subr.mxu0 0.0
      %237 = vmatpush2.msra.mxu0 0.0
      %238 = vmatprep.subr.mxu0 0.0
      %239 = vmatpush2.msra.mxu0 0.0
      %240 = vmatprep.subr.mxu0 0.0
      %241 = vmatpush2.msra.mxu0 0.0
      %242 = vmatprep.subr.mxu0 0.0
      %243 = vmatpush2.msra.mxu0 0.0
      %244 = vmatprep.mubr.f32.mxu0 0.0
      %245 = vmatmul.mubr.f32.gmra.mxu0 %v178
      %v246 = vpop.f32.mrf.mxu0
      %v247 = vadd.f32 0.0, %v246
      %v248 = vpop.f32.mrf.mxu0
      %249 = vdwg.mxu0
      %250 = vrot.lane.b32.xlu0 %v168, 123
      %v251 = vpop.permute.xlu0 %250
      %v254 = vsel %vm176, %v169, 0
      %256 = vmatprep.subr.mxu0 0.0
      %257 = vmatpush1.msra.mxu0 0.0
      %258 = vmatprep.subr.mxu0 0.0
      %259 = vmatpush1.msra.mxu0 0.0
      %260 = vmatprep.subr.mxu0 0.0
      %261 = vmatpush1.msra.mxu0 0.0
      %262 = vmatprep.subr.mxu0 0.0
      %263 = vmatpush1.msra.mxu0 0.0
      %264 = vmatprep.subr.mxu0 0.0
      %265 = vmatpush1.msra.mxu0 0.0
      %266 = vmatprep.subr.mxu0 0.0
      %267 = vmatpush1.msra.mxu0 0.0
      %268 = vmatprep.subr.mxu0 0.0
      %269 = vmatpush1.msra.mxu0 0.0
      %270 = vmatprep.subr.mxu0 0.0
      %271 = vmatpush1.msra.mxu0 0.0
      %272 = vmatprep.subr.mxu0 0.0
      %273 = vmatpush1.msra.mxu0 0.0
      %274 = vmatprep.subr.mxu0 0.0
      %275 = vmatpush1.msra.mxu0 0.0
      %276 = vmatprep.subr.mxu0 0.0
      %277 = vmatpush1.msra.mxu0 0.0
      %278 = vmatprep.subr.mxu0 0.0
      %279 = vmatpush1.msra.mxu0 0.0
      %280 = vmatprep.subr.mxu0 0.0
      %281 = vmatpush1.msra.mxu0 0.0
      %282 = vmatprep.subr.mxu0 0.0
      %283 = vmatpush1.msra.mxu0 0.0
      %284 = vmatprep.subr.mxu0 0.0
      %285 = vmatpush1.msra.mxu0 0.0
      %286 = vmatprep.subr.mxu0 0.0
      %287 = vmatpush1.msra.mxu0 %v251
      %288 = vmatprep.subr.mxu0 0.0
      %289 = vmatpush2.msra.mxu0 0.0
      %290 = vmatprep.subr.mxu0 0.0
      %291 = vmatpush2.msra.mxu0 0.0
      %292 = vmatprep.subr.mxu0 0.0
      %293 = vmatpush2.msra.mxu0 0.0
      %294 = vmatprep.subr.mxu0 0.0
      %295 = vmatpush2.msra.mxu0 0.0
      %296 = vmatprep.subr.mxu0 0.0
      %297 = vmatpush2.msra.mxu0 0.0
      %298 = vmatprep.subr.mxu0 0.0
      %299 = vmatpush2.msra.mxu0 0.0
      %300 = vmatprep.subr.mxu0 0.0
      %301 = vmatpush2.msra.mxu0 0.0
      %302 = vmatprep.subr.mxu0 0.0
      %303 = vmatpush2.msra.mxu0 0.0
      %304 = vmatprep.subr.mxu0 0.0
      %305 = vmatpush2.msra.mxu0 0.0
      %306 = vmatprep.subr.mxu0 0.0
      %307 = vmatpush2.msra.mxu0 0.0
      %308 = vmatprep.subr.mxu0 0.0
      %309 = vmatpush2.msra.mxu0 0.0
      %310 = vmatprep.subr.mxu0 0.0
      %311 = vmatpush2.msra.mxu0 0.0
      %312 = vmatprep.subr.mxu0 0.0
      %313 = vmatpush2.msra.mxu0 0.0
      %314 = vmatprep.subr.mxu0 0.0
      %315 = vmatpush2.msra.mxu0 0.0
      %316 = vmatprep.subr.mxu0 0.0
      %317 = vmatpush2.msra.mxu0 0.0
      %318 = vmatprep.subr.mxu0 0.0
      %319 = vmatpush2.msra.mxu0 0.0
      %320 = vmatprep.mubr.f32.mxu0 0.0
      %321 = vmatmul.mubr.f32.gmra.mxu0 %v254
      %v322 = vpop.f32.mrf.mxu0
      %v323 = vadd.f32 %v247, %v322
      %v324 = vpop.f32.mrf.mxu0
      %325 = vdwg.mxu0
      %s326 = scalar_lea.vmem %s1, 8
      %v327 = vld [vmem:[%s326] sm:$0xf]
      %328 = vrot.lane.b32.xlu0 %v168, 127
      %v329 = vpop.permute.xlu0 %328
      %v332 = vsel %vm176, %v327, 0
      %334 = vmatprep.subr.mxu0 0.0
      %335 = vmatpush1.msra.mxu0 0.0
      %336 = vmatprep.subr.mxu0 0.0
      %337 = vmatpush1.msra.mxu0 0.0
      %338 = vmatprep.subr.mxu0 0.0
      %339 = vmatpush1.msra.mxu0 0.0
      %340 = vmatprep.subr.mxu0 0.0
      %341 = vmatpush1.msra.mxu0 0.0
      %342 = vmatprep.subr.mxu0 0.0
      %343 = vmatpush1.msra.mxu0 0.0
      %344 = vmatprep.subr.mxu0 0.0
      %345 = vmatpush1.msra.mxu0 0.0
      %346 = vmatprep.subr.mxu0 0.0
      %347 = vmatpush1.msra.mxu0 0.0
      %348 = vmatprep.subr.mxu0 0.0
      %349 = vmatpush1.msra.mxu0 0.0
      %350 = vmatprep.subr.mxu0 0.0
      %351 = vmatpush1.msra.mxu0 0.0
      %352 = vmatprep.subr.mxu0 0.0
      %353 = vmatpush1.msra.mxu0 0.0
      %354 = vmatprep.subr.mxu0 0.0
      %355 = vmatpush1.msra.mxu0 0.0
      %356 = vmatprep.subr.mxu0 0.0
      %357 = vmatpush1.msra.mxu0 0.0
      %358 = vmatprep.subr.mxu0 0.0
      %359 = vmatpush1.msra.mxu0 0.0
      %360 = vmatprep.subr.mxu0 0.0
      %361 = vmatpush1.msra.mxu0 0.0
      %362 = vmatprep.subr.mxu0 0.0
      %363 = vmatpush1.msra.mxu0 0.0
      %364 = vmatprep.subr.mxu0 0.0
      %365 = vmatpush1.msra.mxu0 %v329
      %366 = vmatprep.subr.mxu0 0.0
      %367 = vmatpush2.msra.mxu0 0.0
      %368 = vmatprep.subr.mxu0 0.0
      %369 = vmatpush2.msra.mxu0 0.0
      %370 = vmatprep.subr.mxu0 0.0
      %371 = vmatpush2.msra.mxu0 0.0
      %372 = vmatprep.subr.mxu0 0.0
      %373 = vmatpush2.msra.mxu0 0.0
      %374 = vmatprep.subr.mxu0 0.0
      %375 = vmatpush2.msra.mxu0 0.0
      %376 = vmatprep.subr.mxu0 0.0
      %377 = vmatpush2.msra.mxu0 0.0
      %378 = vmatprep.subr.mxu0 0.0
      %379 = vmatpush2.msra.mxu0 0.0
      %380 = vmatprep.subr.mxu0 0.0
      %381 = vmatpush2.msra.mxu0 0.0
      %382 = vmatprep.subr.mxu0 0.0
      %383 = vmatpush2.msra.mxu0 0.0
      %384 = vmatprep.subr.mxu0 0.0
      %385 = vmatpush2.msra.mxu0 0.0
      %386 = vmatprep.subr.mxu0 0.0
      %387 = vmatpush2.msra.mxu0 0.0
      %388 = vmatprep.subr.mxu0 0.0
      %389 = vmatpush2.msra.mxu0 0.0
      %390 = vmatprep.subr.mxu0 0.0
      %391 = vmatpush2.msra.mxu0 0.0
      %392 = vmatprep.subr.mxu0 0.0
      %393 = vmatpush2.msra.mxu0 0.0
      %394 = vmatprep.subr.mxu0 0.0
      %395 = vmatpush2.msra.mxu0 0.0
      %396 = vmatprep.subr.mxu0 0.0
      %397 = vmatpush2.msra.mxu0 0.0
      %398 = vmatprep.mubr.f32.mxu0 0.0
      %399 = vmatmul.mubr.f32.gmra.mxu0 %v332
      %v400 = vpop.f32.mrf.mxu0
      %v401 = vadd.f32 0.0, %v400
      %v402 = vpop.f32.mrf.mxu0
      %403 = vdwg.mxu0
      %v404 = vadd.f32 %v323, %v401
      %s405 = scalar_lea.vmem %s1, 12
      %v406 = vld [vmem:[%s405] sm:$0xf]
      %v408 = vsel %vm176, %v406, 0
      %410 = vmatprep.subr.mxu0 0.0
      %411 = vmatpush1.msra.mxu0 0.0
      %412 = vmatprep.subr.mxu0 0.0
      %413 = vmatpush1.msra.mxu0 0.0
      %414 = vmatprep.subr.mxu0 0.0
      %415 = vmatpush1.msra.mxu0 0.0
      %416 = vmatprep.subr.mxu0 0.0
      %417 = vmatpush1.msra.mxu0 0.0
      %418 = vmatprep.subr.mxu0 0.0
      %419 = vmatpush1.msra.mxu0 0.0
      %420 = vmatprep.subr.mxu0 0.0
      %421 = vmatpush1.msra.mxu0 0.0
      %422 = vmatprep.subr.mxu0 0.0
      %423 = vmatpush1.msra.mxu0 0.0
      %424 = vmatprep.subr.mxu0 0.0
      %425 = vmatpush1.msra.mxu0 0.0
      %426 = vmatprep.subr.mxu0 0.0
      %427 = vmatpush1.msra.mxu0 0.0
      %428 = vmatprep.subr.mxu0 0.0
      %429 = vmatpush1.msra.mxu0 0.0
      %430 = vmatprep.subr.mxu0 0.0
      %431 = vmatpush1.msra.mxu0 0.0
      %432 = vmatprep.subr.mxu0 0.0
      %433 = vmatpush1.msra.mxu0 0.0
      %434 = vmatprep.subr.mxu0 0.0
      %435 = vmatpush1.msra.mxu0 0.0
      %436 = vmatprep.subr.mxu0 0.0
      %437 = vmatpush1.msra.mxu0 0.0
      %438 = vmatprep.subr.mxu0 0.0
      %439 = vmatpush1.msra.mxu0 0.0
      %440 = vmatprep.subr.mxu0 0.0
      %441 = vmatpush1.msra.mxu0 %v168
      %442 = vmatprep.subr.mxu0 0.0
      %443 = vmatpush2.msra.mxu0 0.0
      %444 = vmatprep.subr.mxu0 0.0
      %445 = vmatpush2.msra.mxu0 0.0
      %446 = vmatprep.subr.mxu0 0.0
      %447 = vmatpush2.msra.mxu0 0.0
      %448 = vmatprep.subr.mxu0 0.0
      %449 = vmatpush2.msra.mxu0 0.0
      %450 = vmatprep.subr.mxu0 0.0
      %451 = vmatpush2.msra.mxu0 0.0
      %452 = vmatprep.subr.mxu0 0.0
      %453 = vmatpush2.msra.mxu0 0.0
      %454 = vmatprep.subr.mxu0 0.0
      %455 = vmatpush2.msra.mxu0 0.0
      %456 = vmatprep.subr.mxu0 0.0
      %457 = vmatpush2.msra.mxu0 0.0
      %458 = vmatprep.subr.mxu0 0.0
      %459 = vmatpush2.msra.mxu0 0.0
      %460 = vmatprep.subr.mxu0 0.0
      %461 = vmatpush2.msra.mxu0 0.0
      %462 = vmatprep.subr.mxu0 0.0
      %463 = vmatpush2.msra.mxu0 0.0
      %464 = vmatprep.subr.mxu0 0.0
      %465 = vmatpush2.msra.mxu0 0.0
      %466 = vmatprep.subr.mxu0 0.0
      %467 = vmatpush2.msra.mxu0 0.0
      %468 = vmatprep.subr.mxu0 0.0
      %469 = vmatpush2.msra.mxu0 0.0
      %470 = vmatprep.subr.mxu0 0.0
      %471 = vmatpush2.msra.mxu0 0.0
      %472 = vmatprep.subr.mxu0 0.0
      %473 = vmatpush2.msra.mxu0 0.0
      %474 = vmatprep.mubr.f32.mxu0 0.0
      %475 = vmatmul.mubr.f32.gmra.mxu0 %v408
      %v476 = vpop.f32.mrf.mxu0
      %v477 = vadd.f32 0.0, %v476
      %v478 = vpop.f32.mrf.mxu0
      %479 = vdwg.mxu0
      %v480 = vadd.f32 %v404, %v477
      %s481 = scalar_lea.vmem %s1, 16
      %v482 = vld [vmem:[%s481] sm:$0xf]
      %s483 = scalar_lea.vmem %s1, 20
      %v484 = vld [vmem:[%s483] sm:$0xf]
      %v486 = vsel %vm176, %v484, 0
      %488 = vmatprep.subr.mxu0 0.0
      %489 = vmatpush1.msra.mxu0 0.0
      %490 = vmatprep.subr.mxu0 0.0
      %491 = vmatpush1.msra.mxu0 0.0
      %492 = vmatprep.subr.mxu0 0.0
      %493 = vmatpush1.msra.mxu0 0.0
      %494 = vmatprep.subr.mxu0 0.0
      %495 = vmatpush1.msra.mxu0 0.0
      %496 = vmatprep.subr.mxu0 0.0
      %497 = vmatpush1.msra.mxu0 0.0
      %498 = vmatprep.subr.mxu0 0.0
      %499 = vmatpush1.msra.mxu0 0.0
      %500 = vmatprep.subr.mxu0 0.0
      %501 = vmatpush1.msra.mxu0 0.0
      %502 = vmatprep.subr.mxu0 0.0
      %503 = vmatpush1.msra.mxu0 0.0
      %504 = vmatprep.subr.mxu0 0.0
      %505 = vmatpush1.msra.mxu0 0.0
      %506 = vmatprep.subr.mxu0 0.0
      %507 = vmatpush1.msra.mxu0 0.0
      %508 = vmatprep.subr.mxu0 0.0
      %509 = vmatpush1.msra.mxu0 0.0
      %510 = vmatprep.subr.mxu0 0.0
      %511 = vmatpush1.msra.mxu0 0.0
      %512 = vmatprep.subr.mxu0 0.0
      %513 = vmatpush1.msra.mxu0 0.0
      %514 = vmatprep.subr.mxu0 0.0
      %515 = vmatpush1.msra.mxu0 0.0
      %516 = vmatprep.subr.mxu0 0.0
      %517 = vmatpush1.msra.mxu0 0.0
      %518 = vmatprep.subr.mxu0 0.0
      %519 = vmatpush1.msra.mxu0 %v174
      %520 = vmatprep.subr.mxu0 0.0
      %521 = vmatpush2.msra.mxu0 0.0
      %522 = vmatprep.subr.mxu0 0.0
      %523 = vmatpush2.msra.mxu0 0.0
      %524 = vmatprep.subr.mxu0 0.0
      %525 = vmatpush2.msra.mxu0 0.0
      %526 = vmatprep.subr.mxu0 0.0
      %527 = vmatpush2.msra.mxu0 0.0
      %528 = vmatprep.subr.mxu0 0.0
      %529 = vmatpush2.msra.mxu0 0.0
      %530 = vmatprep.subr.mxu0 0.0
      %531 = vmatpush2.msra.mxu0 0.0
      %532 = vmatprep.subr.mxu0 0.0
      %533 = vmatpush2.msra.mxu0 0.0
      %534 = vmatprep.subr.mxu0 0.0
      %535 = vmatpush2.msra.mxu0 0.0
      %536 = vmatprep.subr.mxu0 0.0
      %537 = vmatpush2.msra.mxu0 0.0
      %538 = vmatprep.subr.mxu0 0.0
      %539 = vmatpush2.msra.mxu0 0.0
      %540 = vmatprep.subr.mxu0 0.0
      %541 = vmatpush2.msra.mxu0 0.0
      %542 = vmatprep.subr.mxu0 0.0
      %543 = vmatpush2.msra.mxu0 0.0
      %544 = vmatprep.subr.mxu0 0.0
      %545 = vmatpush2.msra.mxu0 0.0
      %546 = vmatprep.subr.mxu0 0.0
      %547 = vmatpush2.msra.mxu0 0.0
      %548 = vmatprep.subr.mxu0 0.0
      %549 = vmatpush2.msra.mxu0 0.0
      %550 = vmatprep.subr.mxu0 0.0
      %551 = vmatpush2.msra.mxu0 0.0
      %552 = vmatprep.mubr.f32.mxu0 0.0
      %553 = vmatmul.mubr.f32.gmra.mxu0 %v486
      %v554 = vpop.f32.mrf.mxu0
      %v555 = vadd.f32 0.0, %v554
      %v556 = vpop.f32.mrf.mxu0
      %557 = vdwg.mxu0
      %v559 = vsel %vm176, %v482, 0
      %561 = vmatprep.subr.mxu0 0.0
      %562 = vmatpush1.msra.mxu0 0.0
      %563 = vmatprep.subr.mxu0 0.0
      %564 = vmatpush1.msra.mxu0 0.0
      %565 = vmatprep.subr.mxu0 0.0
      %566 = vmatpush1.msra.mxu0 0.0
      %567 = vmatprep.subr.mxu0 0.0
      %568 = vmatpush1.msra.mxu0 0.0
      %569 = vmatprep.subr.mxu0 0.0
      %570 = vmatpush1.msra.mxu0 0.0
      %571 = vmatprep.subr.mxu0 0.0
      %572 = vmatpush1.msra.mxu0 0.0
      %573 = vmatprep.subr.mxu0 0.0
      %574 = vmatpush1.msra.mxu0 0.0
      %575 = vmatprep.subr.mxu0 0.0
      %576 = vmatpush1.msra.mxu0 0.0
      %577 = vmatprep.subr.mxu0 0.0
      %578 = vmatpush1.msra.mxu0 0.0
      %579 = vmatprep.subr.mxu0 0.0
      %580 = vmatpush1.msra.mxu0 0.0
      %581 = vmatprep.subr.mxu0 0.0
      %582 = vmatpush1.msra.mxu0 0.0
      %583 = vmatprep.subr.mxu0 0.0
      %584 = vmatpush1.msra.mxu0 0.0
      %585 = vmatprep.subr.mxu0 0.0
      %586 = vmatpush1.msra.mxu0 0.0
      %587 = vmatprep.subr.mxu0 0.0
      %588 = vmatpush1.msra.mxu0 0.0
      %589 = vmatprep.subr.mxu0 0.0
      %590 = vmatpush1.msra.mxu0 0.0
      %591 = vmatprep.subr.mxu0 0.0
      %592 = vmatpush1.msra.mxu0 %v251
      %593 = vmatprep.subr.mxu0 0.0
      %594 = vmatpush2.msra.mxu0 0.0
      %595 = vmatprep.subr.mxu0 0.0
      %596 = vmatpush2.msra.mxu0 0.0
      %597 = vmatprep.subr.mxu0 0.0
      %598 = vmatpush2.msra.mxu0 0.0
      %599 = vmatprep.subr.mxu0 0.0
      %600 = vmatpush2.msra.mxu0 0.0
      %601 = vmatprep.subr.mxu0 0.0
      %602 = vmatpush2.msra.mxu0 0.0
      %603 = vmatprep.subr.mxu0 0.0
      %604 = vmatpush2.msra.mxu0 0.0
      %605 = vmatprep.subr.mxu0 0.0
      %606 = vmatpush2.msra.mxu0 0.0
      %607 = vmatprep.subr.mxu0 0.0
      %608 = vmatpush2.msra.mxu0 0.0
      %609 = vmatprep.subr.mxu0 0.0
      %610 = vmatpush2.msra.mxu0 0.0
      %611 = vmatprep.subr.mxu0 0.0
      %612 = vmatpush2.msra.mxu0 0.0
      %613 = vmatprep.subr.mxu0 0.0
      %614 = vmatpush2.msra.mxu0 0.0
      %615 = vmatprep.subr.mxu0 0.0
      %616 = vmatpush2.msra.mxu0 0.0
      %617 = vmatprep.subr.mxu0 0.0
      %618 = vmatpush2.msra.mxu0 0.0
      %619 = vmatprep.subr.mxu0 0.0
      %620 = vmatpush2.msra.mxu0 0.0
      %621 = vmatprep.subr.mxu0 0.0
      %622 = vmatpush2.msra.mxu0 0.0
      %623 = vmatprep.subr.mxu0 0.0
      %624 = vmatpush2.msra.mxu0 0.0
      %625 = vmatprep.mubr.f32.mxu0 0.0
      %626 = vmatmul.mubr.f32.gmra.mxu0 %v559
      %v627 = vpop.f32.mrf.mxu0
      %v628 = vadd.f32 %v555, %v627
      %v629 = vpop.f32.mrf.mxu0
      %630 = vdwg.mxu0
      %s631 = scalar_lea.vmem %s1, 24
      %v632 = vld [vmem:[%s631] sm:$0xf]
      %v634 = vsel %vm176, %v632, 0
      %636 = vmatprep.subr.mxu0 0.0
      %637 = vmatpush1.msra.mxu0 0.0
      %638 = vmatprep.subr.mxu0 0.0
      %639 = vmatpush1.msra.mxu0 0.0
      %640 = vmatprep.subr.mxu0 0.0
      %641 = vmatpush1.msra.mxu0 0.0
      %642 = vmatprep.subr.mxu0 0.0
      %643 = vmatpush1.msra.mxu0 0.0
      %644 = vmatprep.subr.mxu0 0.0
      %645 = vmatpush1.msra.mxu0 0.0
      %646 = vmatprep.subr.mxu0 0.0
      %647 = vmatpush1.msra.mxu0 0.0
      %648 = vmatprep.subr.mxu0 0.0
      %649 = vmatpush1.msra.mxu0 0.0
      %650 = vmatprep.subr.mxu0 0.0
      %651 = vmatpush1.msra.mxu0 0.0
      %652 = vmatprep.subr.mxu0 0.0
      %653 = vmatpush1.msra.mxu0 0.0
      %654 = vmatprep.subr.mxu0 0.0
      %655 = vmatpush1.msra.mxu0 0.0
      %656 = vmatprep.subr.mxu0 0.0
      %657 = vmatpush1.msra.mxu0 0.0
      %658 = vmatprep.subr.mxu0 0.0
      %659 = vmatpush1.msra.mxu0 0.0
      %660 = vmatprep.subr.mxu0 0.0
      %661 = vmatpush1.msra.mxu0 0.0
      %662 = vmatprep.subr.mxu0 0.0
      %663 = vmatpush1.msra.mxu0 0.0
      %664 = vmatprep.subr.mxu0 0.0
      %665 = vmatpush1.msra.mxu0 0.0
      %666 = vmatprep.subr.mxu0 0.0
      %667 = vmatpush1.msra.mxu0 %v329
      %668 = vmatprep.subr.mxu0 0.0
      %669 = vmatpush2.msra.mxu0 0.0
      %670 = vmatprep.subr.mxu0 0.0
      %671 = vmatpush2.msra.mxu0 0.0
      %672 = vmatprep.subr.mxu0 0.0
      %673 = vmatpush2.msra.mxu0 0.0
      %674 = vmatprep.subr.mxu0 0.0
      %675 = vmatpush2.msra.mxu0 0.0
      %676 = vmatprep.subr.mxu0 0.0
      %677 = vmatpush2.msra.mxu0 0.0
      %678 = vmatprep.subr.mxu0 0.0
      %679 = vmatpush2.msra.mxu0 0.0
      %680 = vmatprep.subr.mxu0 0.0
      %681 = vmatpush2.msra.mxu0 0.0
      %682 = vmatprep.subr.mxu0 0.0
      %683 = vmatpush2.msra.mxu0 0.0
      %684 = vmatprep.subr.mxu0 0.0
      %685 = vmatpush2.msra.mxu0 0.0
      %686 = vmatprep.subr.mxu0 0.0
      %687 = vmatpush2.msra.mxu0 0.0
      %688 = vmatprep.subr.mxu0 0.0
      %689 = vmatpush2.msra.mxu0 0.0
      %690 = vmatprep.subr.mxu0 0.0
      %691 = vmatpush2.msra.mxu0 0.0
      %692 = vmatprep.subr.mxu0 0.0
      %693 = vmatpush2.msra.mxu0 0.0
      %694 = vmatprep.subr.mxu0 0.0
      %695 = vmatpush2.msra.mxu0 0.0
      %696 = vmatprep.subr.mxu0 0.0
      %697 = vmatpush2.msra.mxu0 0.0
      %698 = vmatprep.subr.mxu0 0.0
      %699 = vmatpush2.msra.mxu0 0.0
      %700 = vmatprep.mubr.f32.mxu0 0.0
      %701 = vmatmul.mubr.f32.gmra.mxu0 %v634
      %v702 = vpop.f32.mrf.mxu0
      %v703 = vadd.f32 0.0, %v702
      %v704 = vpop.f32.mrf.mxu0
      %705 = vdwg.mxu0
      %v706 = vadd.f32 %v628, %v703
      %s707 = scalar_lea.vmem %s1, 28
      %v708 = vld [vmem:[%s707] sm:$0xf]
      %v710 = vsel %vm176, %v708, 0
      %712 = vmatprep.subr.mxu0 0.0
      %713 = vmatpush1.msra.mxu0 0.0
      %714 = vmatprep.subr.mxu0 0.0
      %715 = vmatpush1.msra.mxu0 0.0
      %716 = vmatprep.subr.mxu0 0.0
      %717 = vmatpush1.msra.mxu0 0.0
      %718 = vmatprep.subr.mxu0 0.0
      %719 = vmatpush1.msra.mxu0 0.0
      %720 = vmatprep.subr.mxu0 0.0
      %721 = vmatpush1.msra.mxu0 0.0
      %722 = vmatprep.subr.mxu0 0.0
      %723 = vmatpush1.msra.mxu0 0.0
      %724 = vmatprep.subr.mxu0 0.0
      %725 = vmatpush1.msra.mxu0 0.0
      %726 = vmatprep.subr.mxu0 0.0
      %727 = vmatpush1.msra.mxu0 0.0
      %728 = vmatprep.subr.mxu0 0.0
      %729 = vmatpush1.msra.mxu0 0.0
      %730 = vmatprep.subr.mxu0 0.0
      %731 = vmatpush1.msra.mxu0 0.0
      %732 = vmatprep.subr.mxu0 0.0
      %733 = vmatpush1.msra.mxu0 0.0
      %734 = vmatprep.subr.mxu0 0.0
      %735 = vmatpush1.msra.mxu0 0.0
      %736 = vmatprep.subr.mxu0 0.0
      %737 = vmatpush1.msra.mxu0 0.0
      %738 = vmatprep.subr.mxu0 0.0
      %739 = vmatpush1.msra.mxu0 0.0
      %740 = vmatprep.subr.mxu0 0.0
      %741 = vmatpush1.msra.mxu0 0.0
      %742 = vmatprep.subr.mxu0 0.0
      %743 = vmatpush1.msra.mxu0 %v168
      %744 = vmatprep.subr.mxu0 0.0
      %745 = vmatpush2.msra.mxu0 0.0
      %746 = vmatprep.subr.mxu0 0.0
      %747 = vmatpush2.msra.mxu0 0.0
      %748 = vmatprep.subr.mxu0 0.0
      %749 = vmatpush2.msra.mxu0 0.0
      %750 = vmatprep.subr.mxu0 0.0
      %751 = vmatpush2.msra.mxu0 0.0
      %752 = vmatprep.subr.mxu0 0.0
      %753 = vmatpush2.msra.mxu0 0.0
      %754 = vmatprep.subr.mxu0 0.0
      %755 = vmatpush2.msra.mxu0 0.0
      %756 = vmatprep.subr.mxu0 0.0
      %757 = vmatpush2.msra.mxu0 0.0
      %758 = vmatprep.subr.mxu0 0.0
      %759 = vmatpush2.msra.mxu0 0.0
      %760 = vmatprep.subr.mxu0 0.0
      %761 = vmatpush2.msra.mxu0 0.0
      %762 = vmatprep.subr.mxu0 0.0
      %763 = vmatpush2.msra.mxu0 0.0
      %764 = vmatprep.subr.mxu0 0.0
      %765 = vmatpush2.msra.mxu0 0.0
      %766 = vmatprep.subr.mxu0 0.0
      %767 = vmatpush2.msra.mxu0 0.0
      %768 = vmatprep.subr.mxu0 0.0
      %769 = vmatpush2.msra.mxu0 0.0
      %770 = vmatprep.subr.mxu0 0.0
      %771 = vmatpush2.msra.mxu0 0.0
      %772 = vmatprep.subr.mxu0 0.0
      %773 = vmatpush2.msra.mxu0 0.0
      %774 = vmatprep.subr.mxu0 0.0
      %775 = vmatpush2.msra.mxu0 0.0
      %776 = vmatprep.mubr.f32.mxu0 0.0
      %777 = vmatmul.mubr.f32.gmra.mxu0 %v710
      %v778 = vpop.f32.mrf.mxu0
      %v779 = vadd.f32 0.0, %v778
      %v780 = vpop.f32.mrf.mxu0
      %781 = vdwg.mxu0
      %v782 = vadd.f32 %v706, %v779
      %s783 = scalar_lea.vmem %s1, 32
      %v784 = vld [vmem:[%s783] sm:$0xf]
      %s785 = scalar_lea.vmem %s1, 36
      %v786 = vld [vmem:[%s785] sm:$0xf]
      %v788 = vsel %vm176, %v786, 0
      %790 = vmatprep.subr.mxu0 0.0
      %791 = vmatpush1.msra.mxu0 0.0
      %792 = vmatprep.subr.mxu0 0.0
      %793 = vmatpush1.msra.mxu0 0.0
      %794 = vmatprep.subr.mxu0 0.0
      %795 = vmatpush1.msra.mxu0 0.0
      %796 = vmatprep.subr.mxu0 0.0
      %797 = vmatpush1.msra.mxu0 0.0
      %798 = vmatprep.subr.mxu0 0.0
      %799 = vmatpush1.msra.mxu0 0.0
      %800 = vmatprep.subr.mxu0 0.0
      %801 = vmatpush1.msra.mxu0 0.0
      %802 = vmatprep.subr.mxu0 0.0
      %803 = vmatpush1.msra.mxu0 0.0
      %804 = vmatprep.subr.mxu0 0.0
      %805 = vmatpush1.msra.mxu0 0.0
      %806 = vmatprep.subr.mxu0 0.0
      %807 = vmatpush1.msra.mxu0 0.0
      %808 = vmatprep.subr.mxu0 0.0
      %809 = vmatpush1.msra.mxu0 0.0
      %810 = vmatprep.subr.mxu0 0.0
      %811 = vmatpush1.msra.mxu0 0.0
      %812 = vmatprep.subr.mxu0 0.0
      %813 = vmatpush1.msra.mxu0 0.0
      %814 = vmatprep.subr.mxu0 0.0
      %815 = vmatpush1.msra.mxu0 0.0
      %816 = vmatprep.subr.mxu0 0.0
      %817 = vmatpush1.msra.mxu0 0.0
      %818 = vmatprep.subr.mxu0 0.0
      %819 = vmatpush1.msra.mxu0 0.0
      %820 = vmatprep.subr.mxu0 0.0
      %821 = vmatpush1.msra.mxu0 %v174
      %822 = vmatprep.subr.mxu0 0.0
      %823 = vmatpush2.msra.mxu0 0.0
      %824 = vmatprep.subr.mxu0 0.0
      %825 = vmatpush2.msra.mxu0 0.0
      %826 = vmatprep.subr.mxu0 0.0
      %827 = vmatpush2.msra.mxu0 0.0
      %828 = vmatprep.subr.mxu0 0.0
      %829 = vmatpush2.msra.mxu0 0.0
      %830 = vmatprep.subr.mxu0 0.0
      %831 = vmatpush2.msra.mxu0 0.0
      %832 = vmatprep.subr.mxu0 0.0
      %833 = vmatpush2.msra.mxu0 0.0
      %834 = vmatprep.subr.mxu0 0.0
      %835 = vmatpush2.msra.mxu0 0.0
      %836 = vmatprep.subr.mxu0 0.0
      %837 = vmatpush2.msra.mxu0 0.0
      %838 = vmatprep.subr.mxu0 0.0
      %839 = vmatpush2.msra.mxu0 0.0
      %840 = vmatprep.subr.mxu0 0.0
      %841 = vmatpush2.msra.mxu0 0.0
      %842 = vmatprep.subr.mxu0 0.0
      %843 = vmatpush2.msra.mxu0 0.0
      %844 = vmatprep.subr.mxu0 0.0
      %845 = vmatpush2.msra.mxu0 0.0
      %846 = vmatprep.subr.mxu0 0.0
      %847 = vmatpush2.msra.mxu0 0.0
      %848 = vmatprep.subr.mxu0 0.0
      %849 = vmatpush2.msra.mxu0 0.0
      %850 = vmatprep.subr.mxu0 0.0
      %851 = vmatpush2.msra.mxu0 0.0
      %852 = vmatprep.subr.mxu0 0.0
      %853 = vmatpush2.msra.mxu0 0.0
      %854 = vmatprep.mubr.f32.mxu0 0.0
      %855 = vmatmul.mubr.f32.gmra.mxu0 %v788
      %v856 = vpop.f32.mrf.mxu0
      %v857 = vadd.f32 0.0, %v856
      %v858 = vpop.f32.mrf.mxu0
      %859 = vdwg.mxu0
      %v861 = vsel %vm176, %v784, 0
      %863 = vmatprep.subr.mxu0 0.0
      %864 = vmatpush1.msra.mxu0 0.0
      %865 = vmatprep.subr.mxu0 0.0
      %866 = vmatpush1.msra.mxu0 0.0
      %867 = vmatprep.subr.mxu0 0.0
      %868 = vmatpush1.msra.mxu0 0.0
      %869 = vmatprep.subr.mxu0 0.0
      %870 = vmatpush1.msra.mxu0 0.0
      %871 = vmatprep.subr.mxu0 0.0
      %872 = vmatpush1.msra.mxu0 0.0
      %873 = vmatprep.subr.mxu0 0.0
      %874 = vmatpush1.msra.mxu0 0.0
      %875 = vmatprep.subr.mxu0 0.0
      %876 = vmatpush1.msra.mxu0 0.0
      %877 = vmatprep.subr.mxu0 0.0
      %878 = vmatpush1.msra.mxu0 0.0
      %879 = vmatprep.subr.mxu0 0.0
      %880 = vmatpush1.msra.mxu0 0.0
      %881 = vmatprep.subr.mxu0 0.0
      %882 = vmatpush1.msra.mxu0 0.0
      %883 = vmatprep.subr.mxu0 0.0
      %884 = vmatpush1.msra.mxu0 0.0
      %885 = vmatprep.subr.mxu0 0.0
      %886 = vmatpush1.msra.mxu0 0.0
      %887 = vmatprep.subr.mxu0 0.0
      %888 = vmatpush1.msra.mxu0 0.0
      %889 = vmatprep.subr.mxu0 0.0
      %890 = vmatpush1.msra.mxu0 0.0
      %891 = vmatprep.subr.mxu0 0.0
      %892 = vmatpush1.msra.mxu0 0.0
      %893 = vmatprep.subr.mxu0 0.0
      %894 = vmatpush1.msra.mxu0 %v251
      %895 = vmatprep.subr.mxu0 0.0
      %896 = vmatpush2.msra.mxu0 0.0
      %897 = vmatprep.subr.mxu0 0.0
      %898 = vmatpush2.msra.mxu0 0.0
      %899 = vmatprep.subr.mxu0 0.0
      %900 = vmatpush2.msra.mxu0 0.0
      %901 = vmatprep.subr.mxu0 0.0
      %902 = vmatpush2.msra.mxu0 0.0
      %903 = vmatprep.subr.mxu0 0.0
      %904 = vmatpush2.msra.mxu0 0.0
      %905 = vmatprep.subr.mxu0 0.0
      %906 = vmatpush2.msra.mxu0 0.0
      %907 = vmatprep.subr.mxu0 0.0
      %908 = vmatpush2.msra.mxu0 0.0
      %909 = vmatprep.subr.mxu0 0.0
      %910 = vmatpush2.msra.mxu0 0.0
      %911 = vmatprep.subr.mxu0 0.0
      %912 = vmatpush2.msra.mxu0 0.0
      %913 = vmatprep.subr.mxu0 0.0
      %914 = vmatpush2.msra.mxu0 0.0
      %915 = vmatprep.subr.mxu0 0.0
      %916 = vmatpush2.msra.mxu0 0.0
      %917 = vmatprep.subr.mxu0 0.0
      %918 = vmatpush2.msra.mxu0 0.0
      %919 = vmatprep.subr.mxu0 0.0
      %920 = vmatpush2.msra.mxu0 0.0
      %921 = vmatprep.subr.mxu0 0.0
      %922 = vmatpush2.msra.mxu0 0.0
      %923 = vmatprep.subr.mxu0 0.0
      %924 = vmatpush2.msra.mxu0 0.0
      %925 = vmatprep.subr.mxu0 0.0
      %926 = vmatpush2.msra.mxu0 0.0
      %927 = vmatprep.mubr.f32.mxu0 0.0
      %928 = vmatmul.mubr.f32.gmra.mxu0 %v861
      %v929 = vpop.f32.mrf.mxu0
      %v930 = vadd.f32 %v857, %v929
      %v931 = vpop.f32.mrf.mxu0
      %932 = vdwg.mxu0
      %s933 = scalar_lea.vmem %s1, 40
      %v934 = vld [vmem:[%s933] sm:$0xf]
      %v936 = vsel %vm176, %v934, 0
      %938 = vmatprep.subr.mxu0 0.0
      %939 = vmatpush1.msra.mxu0 0.0
      %940 = vmatprep.subr.mxu0 0.0
      %941 = vmatpush1.msra.mxu0 0.0
      %942 = vmatprep.subr.mxu0 0.0
      %943 = vmatpush1.msra.mxu0 0.0
      %944 = vmatprep.subr.mxu0 0.0
      %945 = vmatpush1.msra.mxu0 0.0
      %946 = vmatprep.subr.mxu0 0.0
      %947 = vmatpush1.msra.mxu0 0.0
      %948 = vmatprep.subr.mxu0 0.0
      %949 = vmatpush1.msra.mxu0 0.0
      %950 = vmatprep.subr.mxu0 0.0
      %951 = vmatpush1.msra.mxu0 0.0
      %952 = vmatprep.subr.mxu0 0.0
      %953 = vmatpush1.msra.mxu0 0.0
      %954 = vmatprep.subr.mxu0 0.0
      %955 = vmatpush1.msra.mxu0 0.0
      %956 = vmatprep.subr.mxu0 0.0
      %957 = vmatpush1.msra.mxu0 0.0
      %958 = vmatprep.subr.mxu0 0.0
      %959 = vmatpush1.msra.mxu0 0.0
      %960 = vmatprep.subr.mxu0 0.0
      %961 = vmatpush1.msra.mxu0 0.0
      %962 = vmatprep.subr.mxu0 0.0
      %963 = vmatpush1.msra.mxu0 0.0
      %964 = vmatprep.subr.mxu0 0.0
      %965 = vmatpush1.msra.mxu0 0.0
      %966 = vmatprep.subr.mxu0 0.0
      %967 = vmatpush1.msra.mxu0 0.0
      %968 = vmatprep.subr.mxu0 0.0
      %969 = vmatpush1.msra.mxu0 %v329
      %970 = vmatprep.subr.mxu0 0.0
      %971 = vmatpush2.msra.mxu0 0.0
      %972 = vmatprep.subr.mxu0 0.0
      %973 = vmatpush2.msra.mxu0 0.0
      %974 = vmatprep.subr.mxu0 0.0
      %975 = vmatpush2.msra.mxu0 0.0
      %976 = vmatprep.subr.mxu0 0.0
      %977 = vmatpush2.msra.mxu0 0.0
      %978 = vmatprep.subr.mxu0 0.0
      %979 = vmatpush2.msra.mxu0 0.0
      %980 = vmatprep.subr.mxu0 0.0
      %981 = vmatpush2.msra.mxu0 0.0
      %982 = vmatprep.subr.mxu0 0.0
      %983 = vmatpush2.msra.mxu0 0.0
      %984 = vmatprep.subr.mxu0 0.0
      %985 = vmatpush2.msra.mxu0 0.0
      %986 = vmatprep.subr.mxu0 0.0
      %987 = vmatpush2.msra.mxu0 0.0
      %988 = vmatprep.subr.mxu0 0.0
      %989 = vmatpush2.msra.mxu0 0.0
      %990 = vmatprep.subr.mxu0 0.0
      %991 = vmatpush2.msra.mxu0 0.0
      %992 = vmatprep.subr.mxu0 0.0
      %993 = vmatpush2.msra.mxu0 0.0
      %994 = vmatprep.subr.mxu0 0.0
      %995 = vmatpush2.msra.mxu0 0.0
      %996 = vmatprep.subr.mxu0 0.0
      %997 = vmatpush2.msra.mxu0 0.0
      %998 = vmatprep.subr.mxu0 0.0
      %999 = vmatpush2.msra.mxu0 0.0
      %1000 = vmatprep.subr.mxu0 0.0
      %1001 = vmatpush2.msra.mxu0 0.0
      %1002 = vmatprep.mubr.f32.mxu0 0.0
      %1003 = vmatmul.mubr.f32.gmra.mxu0 %v936
      %v1004 = vpop.f32.mrf.mxu0
      %v1005 = vadd.f32 0.0, %v1004
      %v1006 = vpop.f32.mrf.mxu0
      %1007 = vdwg.mxu0
      %v1008 = vadd.f32 %v930, %v1005
      %s1009 = scalar_lea.vmem %s1, 44
      %v1010 = vld [vmem:[%s1009] sm:$0xf]
      %v1012 = vsel %vm176, %v1010, 0
      %1014 = vmatprep.subr.mxu0 0.0
      %1015 = vmatpush1.msra.mxu0 0.0
      %1016 = vmatprep.subr.mxu0 0.0
      %1017 = vmatpush1.msra.mxu0 0.0
      %1018 = vmatprep.subr.mxu0 0.0
      %1019 = vmatpush1.msra.mxu0 0.0
      %1020 = vmatprep.subr.mxu0 0.0
      %1021 = vmatpush1.msra.mxu0 0.0
      %1022 = vmatprep.subr.mxu0 0.0
      %1023 = vmatpush1.msra.mxu0 0.0
      %1024 = vmatprep.subr.mxu0 0.0
      %1025 = vmatpush1.msra.mxu0 0.0
      %1026 = vmatprep.subr.mxu0 0.0
      %1027 = vmatpush1.msra.mxu0 0.0
      %1028 = vmatprep.subr.mxu0 0.0
      %1029 = vmatpush1.msra.mxu0 0.0
      %1030 = vmatprep.subr.mxu0 0.0
      %1031 = vmatpush1.msra.mxu0 0.0
      %1032 = vmatprep.subr.mxu0 0.0
      %1033 = vmatpush1.msra.mxu0 0.0
      %1034 = vmatprep.subr.mxu0 0.0
      %1035 = vmatpush1.msra.mxu0 0.0
      %1036 = vmatprep.subr.mxu0 0.0
      %1037 = vmatpush1.msra.mxu0 0.0
      %1038 = vmatprep.subr.mxu0 0.0
      %1039 = vmatpush1.msra.mxu0 0.0
      %1040 = vmatprep.subr.mxu0 0.0
      %1041 = vmatpush1.msra.mxu0 0.0
      %1042 = vmatprep.subr.mxu0 0.0
      %1043 = vmatpush1.msra.mxu0 0.0
      %1044 = vmatprep.subr.mxu0 0.0
      %1045 = vmatpush1.msra.mxu0 %v168
      %1046 = vmatprep.subr.mxu0 0.0
      %1047 = vmatpush2.msra.mxu0 0.0
      %1048 = vmatprep.subr.mxu0 0.0
      %1049 = vmatpush2.msra.mxu0 0.0
      %1050 = vmatprep.subr.mxu0 0.0
      %1051 = vmatpush2.msra.mxu0 0.0
      %1052 = vmatprep.subr.mxu0 0.0
      %1053 = vmatpush2.msra.mxu0 0.0
      %1054 = vmatprep.subr.mxu0 0.0
      %1055 = vmatpush2.msra.mxu0 0.0
      %1056 = vmatprep.subr.mxu0 0.0
      %1057 = vmatpush2.msra.mxu0 0.0
      %1058 = vmatprep.subr.mxu0 0.0
      %1059 = vmatpush2.msra.mxu0 0.0
      %1060 = vmatprep.subr.mxu0 0.0
      %1061 = vmatpush2.msra.mxu0 0.0
      %1062 = vmatprep.subr.mxu0 0.0
      %1063 = vmatpush2.msra.mxu0 0.0
      %1064 = vmatprep.subr.mxu0 0.0
      %1065 = vmatpush2.msra.mxu0 0.0
      %1066 = vmatprep.subr.mxu0 0.0
      %1067 = vmatpush2.msra.mxu0 0.0
      %1068 = vmatprep.subr.mxu0 0.0
      %1069 = vmatpush2.msra.mxu0 0.0
      %1070 = vmatprep.subr.mxu0 0.0
      %1071 = vmatpush2.msra.mxu0 0.0
      %1072 = vmatprep.subr.mxu0 0.0
      %1073 = vmatpush2.msra.mxu0 0.0
      %1074 = vmatprep.subr.mxu0 0.0
      %1075 = vmatpush2.msra.mxu0 0.0
      %1076 = vmatprep.subr.mxu0 0.0
      %1077 = vmatpush2.msra.mxu0 0.0
      %1078 = vmatprep.mubr.f32.mxu0 0.0
      %1079 = vmatmul.mubr.f32.gmra.mxu0 %v1012
      %v1080 = vpop.f32.mrf.mxu0
      %v1081 = vadd.f32 0.0, %v1080
      %v1082 = vpop.f32.mrf.mxu0
      %1083 = vdwg.mxu0
      %v1084 = vadd.f32 %v1008, %v1081
      %s1085 = scalar_lea.vmem %s1, 48
      %v1086 = vld [vmem:[%s1085] sm:$0xf]
      %s1087 = scalar_lea.vmem %s1, 52
      %v1088 = vld [vmem:[%s1087] sm:$0xf]
      %v1090 = vsel %vm176, %v1088, 0
      %1092 = vmatprep.subr.mxu0 0.0
      %1093 = vmatpush1.msra.mxu0 0.0
      %1094 = vmatprep.subr.mxu0 0.0
      %1095 = vmatpush1.msra.mxu0 0.0
      %1096 = vmatprep.subr.mxu0 0.0
      %1097 = vmatpush1.msra.mxu0 0.0
      %1098 = vmatprep.subr.mxu0 0.0
      %1099 = vmatpush1.msra.mxu0 0.0
      %1100 = vmatprep.subr.mxu0 0.0
      %1101 = vmatpush1.msra.mxu0 0.0
      %1102 = vmatprep.subr.mxu0 0.0
      %1103 = vmatpush1.msra.mxu0 0.0
      %1104 = vmatprep.subr.mxu0 0.0
      %1105 = vmatpush1.msra.mxu0 0.0
      %1106 = vmatprep.subr.mxu0 0.0
      %1107 = vmatpush1.msra.mxu0 0.0
      %1108 = vmatprep.subr.mxu0 0.0
      %1109 = vmatpush1.msra.mxu0 0.0
      %1110 = vmatprep.subr.mxu0 0.0
      %1111 = vmatpush1.msra.mxu0 0.0
      %1112 = vmatprep.subr.mxu0 0.0
      %1113 = vmatpush1.msra.mxu0 0.0
      %1114 = vmatprep.subr.mxu0 0.0
      %1115 = vmatpush1.msra.mxu0 0.0
      %1116 = vmatprep.subr.mxu0 0.0
      %1117 = vmatpush1.msra.mxu0 0.0
      %1118 = vmatprep.subr.mxu0 0.0
      %1119 = vmatpush1.msra.mxu0 0.0
      %1120 = vmatprep.subr.mxu0 0.0
      %1121 = vmatpush1.msra.mxu0 0.0
      %1122 = vmatprep.subr.mxu0 0.0
      %1123 = vmatpush1.msra.mxu0 %v174
      %1124 = vmatprep.subr.mxu0 0.0
      %1125 = vmatpush2.msra.mxu0 0.0
      %1126 = vmatprep.subr.mxu0 0.0
      %1127 = vmatpush2.msra.mxu0 0.0
      %1128 = vmatprep.subr.mxu0 0.0
      %1129 = vmatpush2.msra.mxu0 0.0
      %1130 = vmatprep.subr.mxu0 0.0
      %1131 = vmatpush2.msra.mxu0 0.0
      %1132 = vmatprep.subr.mxu0 0.0
      %1133 = vmatpush2.msra.mxu0 0.0
      %1134 = vmatprep.subr.mxu0 0.0
      %1135 = vmatpush2.msra.mxu0 0.0
      %1136 = vmatprep.subr.mxu0 0.0
      %1137 = vmatpush2.msra.mxu0 0.0
      %1138 = vmatprep.subr.mxu0 0.0
      %1139 = vmatpush2.msra.mxu0 0.0
      %1140 = vmatprep.subr.mxu0 0.0
      %1141 = vmatpush2.msra.mxu0 0.0
      %1142 = vmatprep.subr.mxu0 0.0
      %1143 = vmatpush2.msra.mxu0 0.0
      %1144 = vmatprep.subr.mxu0 0.0
      %1145 = vmatpush2.msra.mxu0 0.0
      %1146 = vmatprep.subr.mxu0 0.0
      %1147 = vmatpush2.msra.mxu0 0.0
      %1148 = vmatprep.subr.mxu0 0.0
      %1149 = vmatpush2.msra.mxu0 0.0
      %1150 = vmatprep.subr.mxu0 0.0
      %1151 = vmatpush2.msra.mxu0 0.0
      %1152 = vmatprep.subr.mxu0 0.0
      %1153 = vmatpush2.msra.mxu0 0.0
      %1154 = vmatprep.subr.mxu0 0.0
      %1155 = vmatpush2.msra.mxu0 0.0
      %1156 = vmatprep.mubr.f32.mxu0 0.0
      %1157 = vmatmul.mubr.f32.gmra.mxu0 %v1090
      %v1158 = vpop.f32.mrf.mxu0
      %v1159 = vadd.f32 0.0, %v1158
      %v1160 = vpop.f32.mrf.mxu0
      %1161 = vdwg.mxu0
      %v1163 = vsel %vm176, %v1086, 0
      %1165 = vmatprep.subr.mxu0 0.0
      %1166 = vmatpush1.msra.mxu0 0.0
      %1167 = vmatprep.subr.mxu0 0.0
      %1168 = vmatpush1.msra.mxu0 0.0
      %1169 = vmatprep.subr.mxu0 0.0
      %1170 = vmatpush1.msra.mxu0 0.0
      %1171 = vmatprep.subr.mxu0 0.0
      %1172 = vmatpush1.msra.mxu0 0.0
      %1173 = vmatprep.subr.mxu0 0.0
      %1174 = vmatpush1.msra.mxu0 0.0
      %1175 = vmatprep.subr.mxu0 0.0
      %1176 = vmatpush1.msra.mxu0 0.0
      %1177 = vmatprep.subr.mxu0 0.0
      %1178 = vmatpush1.msra.mxu0 0.0
      %1179 = vmatprep.subr.mxu0 0.0
      %1180 = vmatpush1.msra.mxu0 0.0
      %1181 = vmatprep.subr.mxu0 0.0
      %1182 = vmatpush1.msra.mxu0 0.0
      %1183 = vmatprep.subr.mxu0 0.0
      %1184 = vmatpush1.msra.mxu0 0.0
      %1185 = vmatprep.subr.mxu0 0.0
      %1186 = vmatpush1.msra.mxu0 0.0
      %1187 = vmatprep.subr.mxu0 0.0
      %1188 = vmatpush1.msra.mxu0 0.0
      %1189 = vmatprep.subr.mxu0 0.0
      %1190 = vmatpush1.msra.mxu0 0.0
      %1191 = vmatprep.subr.mxu0 0.0
      %1192 = vmatpush1.msra.mxu0 0.0
      %1193 = vmatprep.subr.mxu0 0.0
      %1194 = vmatpush1.msra.mxu0 0.0
      %1195 = vmatprep.subr.mxu0 0.0
      %1196 = vmatpush1.msra.mxu0 %v251
      %1197 = vmatprep.subr.mxu0 0.0
      %1198 = vmatpush2.msra.mxu0 0.0
      %1199 = vmatprep.subr.mxu0 0.0
      %1200 = vmatpush2.msra.mxu0 0.0
      %1201 = vmatprep.subr.mxu0 0.0
      %1202 = vmatpush2.msra.mxu0 0.0
      %1203 = vmatprep.subr.mxu0 0.0
      %1204 = vmatpush2.msra.mxu0 0.0
      %1205 = vmatprep.subr.mxu0 0.0
      %1206 = vmatpush2.msra.mxu0 0.0
      %1207 = vmatprep.subr.mxu0 0.0
      %1208 = vmatpush2.msra.mxu0 0.0
      %1209 = vmatprep.subr.mxu0 0.0
      %1210 = vmatpush2.msra.mxu0 0.0
      %1211 = vmatprep.subr.mxu0 0.0
      %1212 = vmatpush2.msra.mxu0 0.0
      %1213 = vmatprep.subr.mxu0 0.0
      %1214 = vmatpush2.msra.mxu0 0.0
      %1215 = vmatprep.subr.mxu0 0.0
      %1216 = vmatpush2.msra.mxu0 0.0
      %1217 = vmatprep.subr.mxu0 0.0
      %1218 = vmatpush2.msra.mxu0 0.0
      %1219 = vmatprep.subr.mxu0 0.0
      %1220 = vmatpush2.msra.mxu0 0.0
      %1221 = vmatprep.subr.mxu0 0.0
      %1222 = vmatpush2.msra.mxu0 0.0
      %1223 = vmatprep.subr.mxu0 0.0
      %1224 = vmatpush2.msra.mxu0 0.0
      %1225 = vmatprep.subr.mxu0 0.0
      %1226 = vmatpush2.msra.mxu0 0.0
      %1227 = vmatprep.subr.mxu0 0.0
      %1228 = vmatpush2.msra.mxu0 0.0
      %1229 = vmatprep.mubr.f32.mxu0 0.0
      %1230 = vmatmul.mubr.f32.gmra.mxu0 %v1163
      %v1231 = vpop.f32.mrf.mxu0
      %v1232 = vadd.f32 %v1159, %v1231
      %v1233 = vpop.f32.mrf.mxu0
      %1234 = vdwg.mxu0
      %s1235 = scalar_lea.vmem %s1, 56
      %v1236 = vld [vmem:[%s1235] sm:$0xf]
      %v1238 = vsel %vm176, %v1236, 0
      %1240 = vmatprep.subr.mxu0 0.0
      %1241 = vmatpush1.msra.mxu0 0.0
      %1242 = vmatprep.subr.mxu0 0.0
      %1243 = vmatpush1.msra.mxu0 0.0
      %1244 = vmatprep.subr.mxu0 0.0
      %1245 = vmatpush1.msra.mxu0 0.0
      %1246 = vmatprep.subr.mxu0 0.0
      %1247 = vmatpush1.msra.mxu0 0.0
      %1248 = vmatprep.subr.mxu0 0.0
      %1249 = vmatpush1.msra.mxu0 0.0
      %1250 = vmatprep.subr.mxu0 0.0
      %1251 = vmatpush1.msra.mxu0 0.0
      %1252 = vmatprep.subr.mxu0 0.0
      %1253 = vmatpush1.msra.mxu0 0.0
      %1254 = vmatprep.subr.mxu0 0.0
      %1255 = vmatpush1.msra.mxu0 0.0
      %1256 = vmatprep.subr.mxu0 0.0
      %1257 = vmatpush1.msra.mxu0 0.0
      %1258 = vmatprep.subr.mxu0 0.0
      %1259 = vmatpush1.msra.mxu0 0.0
      %1260 = vmatprep.subr.mxu0 0.0
      %1261 = vmatpush1.msra.mxu0 0.0
      %1262 = vmatprep.subr.mxu0 0.0
      %1263 = vmatpush1.msra.mxu0 0.0
      %1264 = vmatprep.subr.mxu0 0.0
      %1265 = vmatpush1.msra.mxu0 0.0
      %1266 = vmatprep.subr.mxu0 0.0
      %1267 = vmatpush1.msra.mxu0 0.0
      %1268 = vmatprep.subr.mxu0 0.0
      %1269 = vmatpush1.msra.mxu0 0.0
      %1270 = vmatprep.subr.mxu0 0.0
      %1271 = vmatpush1.msra.mxu0 %v329
      %1272 = vmatprep.subr.mxu0 0.0
      %1273 = vmatpush2.msra.mxu0 0.0
      %1274 = vmatprep.subr.mxu0 0.0
      %1275 = vmatpush2.msra.mxu0 0.0
      %1276 = vmatprep.subr.mxu0 0.0
      %1277 = vmatpush2.msra.mxu0 0.0
      %1278 = vmatprep.subr.mxu0 0.0
      %1279 = vmatpush2.msra.mxu0 0.0
      %1280 = vmatprep.subr.mxu0 0.0
      %1281 = vmatpush2.msra.mxu0 0.0
      %1282 = vmatprep.subr.mxu0 0.0
      %1283 = vmatpush2.msra.mxu0 0.0
      %1284 = vmatprep.subr.mxu0 0.0
      %1285 = vmatpush2.msra.mxu0 0.0
      %1286 = vmatprep.subr.mxu0 0.0
      %1287 = vmatpush2.msra.mxu0 0.0
      %1288 = vmatprep.subr.mxu0 0.0
      %1289 = vmatpush2.msra.mxu0 0.0
      %1290 = vmatprep.subr.mxu0 0.0
      %1291 = vmatpush2.msra.mxu0 0.0
      %1292 = vmatprep.subr.mxu0 0.0
      %1293 = vmatpush2.msra.mxu0 0.0
      %1294 = vmatprep.subr.mxu0 0.0
      %1295 = vmatpush2.msra.mxu0 0.0
      %1296 = vmatprep.subr.mxu0 0.0
      %1297 = vmatpush2.msra.mxu0 0.0
      %1298 = vmatprep.subr.mxu0 0.0
      %1299 = vmatpush2.msra.mxu0 0.0
      %1300 = vmatprep.subr.mxu0 0.0
      %1301 = vmatpush2.msra.mxu0 0.0
      %1302 = vmatprep.subr.mxu0 0.0
      %1303 = vmatpush2.msra.mxu0 0.0
      %1304 = vmatprep.mubr.f32.mxu0 0.0
      %1305 = vmatmul.mubr.f32.gmra.mxu0 %v1238
      %v1306 = vpop.f32.mrf.mxu0
      %v1307 = vadd.f32 0.0, %v1306
      %v1308 = vpop.f32.mrf.mxu0
      %1309 = vdwg.mxu0
      %v1310 = vadd.f32 %v1232, %v1307
      %s1311 = scalar_lea.vmem %s1, 60
      %v1312 = vld [vmem:[%s1311] sm:$0xf]
      %v1314 = vsel %vm176, %v1312, 0
      %1316 = vmatprep.subr.mxu0 0.0
      %1317 = vmatpush1.msra.mxu0 0.0
      %1318 = vmatprep.subr.mxu0 0.0
      %1319 = vmatpush1.msra.mxu0 0.0
      %1320 = vmatprep.subr.mxu0 0.0
      %1321 = vmatpush1.msra.mxu0 0.0
      %1322 = vmatprep.subr.mxu0 0.0
      %1323 = vmatpush1.msra.mxu0 0.0
      %1324 = vmatprep.subr.mxu0 0.0
      %1325 = vmatpush1.msra.mxu0 0.0
      %1326 = vmatprep.subr.mxu0 0.0
      %1327 = vmatpush1.msra.mxu0 0.0
      %1328 = vmatprep.subr.mxu0 0.0
      %1329 = vmatpush1.msra.mxu0 0.0
      %1330 = vmatprep.subr.mxu0 0.0
      %1331 = vmatpush1.msra.mxu0 0.0
      %1332 = vmatprep.subr.mxu0 0.0
      %1333 = vmatpush1.msra.mxu0 0.0
      %1334 = vmatprep.subr.mxu0 0.0
      %1335 = vmatpush1.msra.mxu0 0.0
      %1336 = vmatprep.subr.mxu0 0.0
      %1337 = vmatpush1.msra.mxu0 0.0
      %1338 = vmatprep.subr.mxu0 0.0
      %1339 = vmatpush1.msra.mxu0 0.0
      %1340 = vmatprep.subr.mxu0 0.0
      %1341 = vmatpush1.msra.mxu0 0.0
      %1342 = vmatprep.subr.mxu0 0.0
      %1343 = vmatpush1.msra.mxu0 0.0
      %1344 = vmatprep.subr.mxu0 0.0
      %1345 = vmatpush1.msra.mxu0 0.0
      %1346 = vmatprep.subr.mxu0 0.0
      %1347 = vmatpush1.msra.mxu0 %v168
      %1348 = vmatprep.subr.mxu0 0.0
      %1349 = vmatpush2.msra.mxu0 0.0
      %1350 = vmatprep.subr.mxu0 0.0
      %1351 = vmatpush2.msra.mxu0 0.0
      %1352 = vmatprep.subr.mxu0 0.0
      %1353 = vmatpush2.msra.mxu0 0.0
      %1354 = vmatprep.subr.mxu0 0.0
      %1355 = vmatpush2.msra.mxu0 0.0
      %1356 = vmatprep.subr.mxu0 0.0
      %1357 = vmatpush2.msra.mxu0 0.0
      %1358 = vmatprep.subr.mxu0 0.0
      %1359 = vmatpush2.msra.mxu0 0.0
      %1360 = vmatprep.subr.mxu0 0.0
      %1361 = vmatpush2.msra.mxu0 0.0
      %1362 = vmatprep.subr.mxu0 0.0
      %1363 = vmatpush2.msra.mxu0 0.0
      %1364 = vmatprep.subr.mxu0 0.0
      %1365 = vmatpush2.msra.mxu0 0.0
      %1366 = vmatprep.subr.mxu0 0.0
      %1367 = vmatpush2.msra.mxu0 0.0
      %1368 = vmatprep.subr.mxu0 0.0
      %1369 = vmatpush2.msra.mxu0 0.0
      %1370 = vmatprep.subr.mxu0 0.0
      %1371 = vmatpush2.msra.mxu0 0.0
      %1372 = vmatprep.subr.mxu0 0.0
      %1373 = vmatpush2.msra.mxu0 0.0
      %1374 = vmatprep.subr.mxu0 0.0
      %1375 = vmatpush2.msra.mxu0 0.0
      %1376 = vmatprep.subr.mxu0 0.0
      %1377 = vmatpush2.msra.mxu0 0.0
      %1378 = vmatprep.subr.mxu0 0.0
      %1379 = vmatpush2.msra.mxu0 0.0
      %1380 = vmatprep.mubr.f32.mxu0 0.0
      %1381 = vmatmul.mubr.f32.gmra.mxu0 %v1314
      %v1382 = vpop.f32.mrf.mxu0
      %v1383 = vadd.f32 0.0, %v1382
      %v1384 = vpop.f32.mrf.mxu0
      %1385 = vdwg.mxu0
      %v1386 = vadd.f32 %v1310, %v1383
      %v1388 = vrot.slane %v782, 4
      %v1391 = vrot.slane %v1386, 4
      %vm1393 = vcmask 1043456
      %v1394 = vsel %vm1393, %v480, %v1388
      %v1395 = vsel %vm1393, %v1084, %v1391
      %v1396 = vld [vmem:[%s2] sm:$0xff]
      %v1397 = vld [vmem:[%s2 + $0x8] sm:$0xff]
      %1399 = vset.pattern.permute.xlu0 0
      %1400 = vperm.xlu0 %1399, %v1396
      %v1401 = vpop.permute.xlu0 %1400
      %1404 = vset.pattern.permute.xlu0 0
      %1405 = vperm.xlu0 %1404, %v1397
      %v1406 = vpop.permute.xlu0 %1405
      %v1408 = vadd.f32 %v1394, %v1401
      %v1409 = vadd.f32 %v1395, %v1406
      %v1410 = vmax.f32 %v1408, 0.0
      %v1411 = vmax.f32 %v1409, 0.0
      %vm1412 = vcmask 97280
      %1413 = vst.msk [vmem:[%s167] sm:$0xff] %vm1412, %v1410
      %1414 = vst.msk [vmem:[%s167 + $0x8] sm:$0xff] %vm1412, %v1411
      %p1415 = scmp.lt.s32.totalorder %s14, 1
      %s1416 = scalar_select %p1415, %s14, 1
      %s1417 = smul.addr %s1416, 2
      %s1418 = smul.addr %s1417, 8
      %s1419 = scalar_lea.vmem %s3, %s1418
      // Predicated region
      $region33: #{_lambda_.4} parent=31 // pred_check
        %p1420 = pneg %p100
      $region34: #{_lambda_.4} parent=31 // pred_check_branch
        %1422 = sbr.rel (%p1420) target = $region36
      $region35: #{_lambda_.4} parent=31 // pred_region
        _
      $region36: #{_lambda_.4} parent=31 // pred_fallthru
        _
    $region32: #{_lambda_.4} parent=5 // pred_fallthru
      _
    %p1423 = scmp.le.s32.totalorder 2, %s9
    // Predicated region
    $region37: #{_lambda_.4} parent=5 // pred_check
      %p1424 = pneg %p1423
    $region38: #{_lambda_.4} parent=5 // pred_check_branch
      %1426 = sbr.rel (%p1424) target = $region40
    $region39: #{_lambda_.4} parent=5 // pred_region
      %s1427 = ssub.s32 %s9, 2
      // Predicated region
      $region41: #{_lambda_.4} parent=39 // pred_check
        %p1428 = pneg %p106
      $region42: #{_lambda_.4} parent=39 // pred_check_branch
        %1430 = sbr.rel (%p1428) target = $region44
      $region43: #{_lambda_.4} parent=39 // pred_region
        %p1431 = scmp.lt.s32.totalorder %s15, 1
        %s1432 = scalar_select %p1431, %s15, 1
        %s1433 = smul.addr %s1432, 2
        %s1434 = smul.addr %s1433, 8
        %s1435 = scalar_lea.vmem %s3, %s1434
      $region44: #{_lambda_.4} parent=39 // pred_fallthru
        _
    $region40: #{_lambda_.4} parent=5 // pred_fallthru
      _
  $region6: #{_lambda_.4} parent=0 // loop_footer
    %s13 = sadd.s32 1, %s9
  $region7: #{_lambda_.4} parent=0 // loop_footer_branch
    %8 = sbr.rel target = $region3
  $region8: #{_lambda_.4} parent=0 // loop_exit
    _

// kernel: _lambda_.5
$region0: #{_lambda_.5}
  #allocation0 [shape = 'u32[]', space=smem, size = 0x4, offset = 0x4, fixed_abs, tag = 'smem constant byte address 0x4 - core index']
  #allocation1 [shape = 'u32[144,128]{1,0:T(1,128)}', space=vmem, size = 0x12000, scoped, tag = 'internal scratch']
  %s0 = inlined_call_operand.vmem [shape: f32[2,4,82], index: 0, kind: input, shape index: {}]
  %s1 = inlined_call_operand.vmem [shape: f32[4,4,4,4], index: 1, kind: input, shape index: {}]
  %s2 = inlined_call_operand.vmem [shape: f32[16,1], index: 2, kind: input, shape index: {}]
  %s3 = inlined_call_operand.vmem [shape: f32[2,16,72], index: 3, kind: output, shape index: {}]
  %s4 = sld [smem:[#allocation0]]
  $region45: #{_lambda_.5} parent=0
    _
  %s6 = ssub.s32 1, %s4
  %s7 = scalar_select 0, %s6, %s4
  loop: start=0, step=1, limit=4
  $region2: #{_lambda_.5} parent=0 // loop_pre_header
    _
  $region3: #{_lambda_.5} parent=0 // loop_header
    %s9 = sphi 0, %s13
    %p10 = scmp.ge.s32.totalorder %s9, 4
    %s19 = sphi 0, %s21
    %s22 = sphi 0, %s19
    %s23 = sphi 0, %s22
    %s39 = sphi 0, %s23
    %s43 = sphi 0, %s43
    %s45 = sphi 0, %s43
    %s46 = sphi 0, %s45
    %s60 = sphi 0, %s46
    %s64 = sphi 0, %s64
    %s66 = sphi 0, %s64
    %s67 = sphi 0, %s66
    %s81 = sphi 0, %s67
    %s87 = sphi 0, %s89
    %s90 = sphi 0, %s87
    %s91 = sphi 0, %s90
    %s107 = sphi 0, %s91
  $region4: #{_lambda_.5} parent=0 // loop_header_branch
    %12 = sbr.rel (%p10) target = $region8
  $region5: #{_lambda_.5} parent=0 // loop_body
    %s14 = ssub.s32 %s9, 1
    %s15 = ssub.s32 %s9, 2
    %s16 = sadd.s32 %s9, 1
    %s17 = ssub.s32 %s9, %s16
    %p18 = scmp.eq.s32.totalorder %s17, 0
    %s20 = sadd.s32 %s19, 1
    %s21 = scalar_select %p18, %s19, %s20
    %p24 = pneg %p18
    %p25 = scmp.eq.s32.totalorder %s9, 1
    %p26 = por %p24, %p25
    %p27 = scmp.ne.s32.totalorder %s19, %s22
    %p28 = scmp.eq.s32.totalorder %s9, 0
    %p29 = por %p27, %p28
    %p30 = scmp.ne.s32.totalorder %s19, %s22
    %p31 = scmp.eq.s32.totalorder %s14, 1
    %p32 = por %p30, %p31
    %p33 = scmp.ne.s32.totalorder %s22, %s23
    %p34 = scmp.eq.s32.totalorder %s14, 0
    %p35 = por %p33, %p34
    %p36 = scmp.ne.s32.totalorder %s22, %s23
    %p37 = scmp.eq.s32.totalorder %s15, 1
    %p38 = por %p36, %p37
    %p40 = scmp.ne.s32.totalorder %s23, %s39
    %p41 = scmp.eq.s32.totalorder %s15, 0
    %p42 = por %p40, %p41
    %s44 = sadd.s32 %s43, 1
    %p47 = scmp.eq.s32.totalorder %s9, 1
    %p48 = scmp.ne.s32.totalorder %s43, %s45
    %p49 = scmp.eq.s32.totalorder %s9, 0
    %p50 = por %p48, %p49
    %p51 = scmp.ne.s32.totalorder %s43, %s45
    %p52 = scmp.eq.s32.totalorder %s14, 1
    %p53 = por %p51, %p52
    %p54 = scmp.ne.s32.totalorder %s45, %s46
    %p55 = scmp.eq.s32.totalorder %s14, 0
    %p56 = por %p54, %p55
    %p57 = scmp.ne.s32.totalorder %s45, %s46
    %p58 = scmp.eq.s32.totalorder %s15, 1
    %p59 = por %p57, %p58
    %p61 = scmp.ne.s32.totalorder %s46, %s60
    %p62 = scmp.eq.s32.totalorder %s15, 0
    %p63 = por %p61, %p62
    %s65 = sadd.s32 %s64, 1
    %p68 = scmp.eq.s32.totalorder %s9, 1
    %p69 = scmp.ne.s32.totalorder %s64, %s66
    %p70 = scmp.eq.s32.totalorder %s9, 0
    %p71 = por %p69, %p70
    %p72 = scmp.ne.s32.totalorder %s64, %s66
    %p73 = scmp.eq.s32.totalorder %s14, 1
    %p74 = por %p72, %p73
    %p75 = scmp.ne.s32.totalorder %s66, %s67
    %p76 = scmp.eq.s32.totalorder %s14, 0
    %p77 = por %p75, %p76
    %p78 = scmp.ne.s32.totalorder %s66, %s67
    %p79 = scmp.eq.s32.totalorder %s15, 1
    %p80 = por %p78, %p79
    %p82 = scmp.ne.s32.totalorder %s67, %s81
    %p83 = scmp.eq.s32.totalorder %s15, 0
    %p84 = por %p82, %p83
    %s85 = ssub.s32 %s9, %s16
    %p86 = scmp.eq.s32.totalorder %s85, 0
    %s88 = sadd.s32 %s87, 1
    %s89 = scalar_select %p86, %s87, %s88
    %p92 = pneg %p86
    %p93 = scmp.eq.s32.totalorder %s9, 1
    %p94 = por %p92, %p93
    %p95 = scmp.ne.s32.totalorder %s87, %s90
    %p96 = scmp.eq.s32.totalorder %s9, 0
    %p97 = por %p95, %p96
    %p98 = scmp.ne.s32.totalorder %s87, %s90
    %p99 = scmp.eq.s32.totalorder %s14, 1
    %p100 = por %p98, %p99
    %p101 = scmp.ne.s32.totalorder %s90, %s91
    %p102 = scmp.eq.s32.totalorder %s14, 0
    %p103 = por %p101, %p102
    %p104 = scmp.ne.s32.totalorder %s90, %s91
    %p105 = scmp.eq.s32.totalorder %s15, 1
    %p106 = por %p104, %p105
    %p108 = scmp.ne.s32.totalorder %s91, %s107
    %p109 = scmp.eq.s32.totalorder %s15, 0
    %p110 = por %p108, %p109
    %p111 = scmp.le.s32.totalorder 1, %s9
    %p112 = scmp.lt.s32.totalorder %s9, 3
    %p113 = pnand %p111, %p112
    %p114 = pneg %p113
    // Predicated region
    $region9: #{_lambda_.5} parent=5 // pred_check
      _
    $region10: #{_lambda_.5} parent=5 // pred_check_branch
      %116 = sbr.rel (%p113) target = $region12
    $region11: #{_lambda_.5} parent=5 // pred_region
      %s117 = ssub.s32 %s9, 1
      // Predicated region
      $region13: #{_lambda_.5} parent=11 // pred_check
        %p118 = pneg %p56
      $region14: #{_lambda_.5} parent=11 // pred_check_branch
        %120 = sbr.rel (%p118) target = $region16
      $region15: #{_lambda_.5} parent=11 // pred_region
        _
      $region16: #{_lambda_.5} parent=11 // pred_fallthru
        _
      // Predicated region
      $region17: #{_lambda_.5} parent=11 // pred_check
        %p121 = pneg %p77
      $region18: #{_lambda_.5} parent=11 // pred_check_branch
        %123 = sbr.rel (%p121) target = $region20
      $region19: #{_lambda_.5} parent=11 // pred_region
        _
      $region20: #{_lambda_.5} parent=11 // pred_fallthru
        _
    $region12: #{_lambda_.5} parent=5 // pred_fallthru
      _
    %p124 = scmp.lt.s32.totalorder %s9, 2
    // Predicated region
    $region21: #{_lambda_.5} parent=5 // pred_check
      %p125 = pneg %p124
    $region22: #{_lambda_.5} parent=5 // pred_check_branch
      %127 = sbr.rel (%p125) target = $region24
    $region23: #{_lambda_.5} parent=5 // pred_region
      // Predicated region
      $region25: #{_lambda_.5} parent=23 // pred_check
        %p128 = pneg %p29
      $region26: #{_lambda_.5} parent=23 // pred_check_branch
        %130 = sbr.rel (%p128) target = $region28
      $region27: #{_lambda_.5} parent=23 // pred_region
        %p131 = scmp.lt.s32.totalorder %s9, 1
        %s132 = scalar_select %p131, %s9, 1
        %s133 = smul.addr %s132, 4
        %s134 = scalar_lea.vmem %s0, %s133
      $region28: #{_lambda_.5} parent=23 // pred_fallthru
        _
    $region24: #{_lambda_.5} parent=5 // pred_fallthru
      _
    %p135 = scmp.le.s32.totalorder 1, %s9
    %p136 = scmp.lt.s32.totalorder %s9, 3
    %p137 = pnand %p135, %p136
    %p138 = pneg %p137
    // Predicated region
    $region29: #{_lambda_.5} parent=5 // pred_check
      _
    $region30: #{_lambda_.5} parent=5 // pred_check_branch
      %140 = sbr.rel (%p137) target = $region32
    $region31: #{_lambda_.5} parent=5 // pred_region
      %s141 = ssub.s32 %s9, 1
      %p142 = scmp.lt.s32.totalorder %s14, 1
      %s143 = scalar_select %p142, %s14, 1
      %s144 = smul.addr %s143, 4
      %s145 = scalar_lea.vmem %s0, %s144
      %p146 = pneg %p35
      %p147 = pneg %p32
      %p148 = pneg %p56
      %p149 = pneg %p53
      %p150 = pneg %p77
      %p151 = pneg %p74
      %p152 = pneg %p103
      %p153 = pneg %p100
      %p154 = scmp.lt.s32.totalorder %s14, 1
      %s155 = scalar_select %p154, %s14, 1
      %s156 = smul.addr %s155, 2
      %s157 = smul.addr %s156, 8
      %s158 = scalar_lea.vmem %s3, %s157
      %p159 = scmp.lt.s32.totalorder %s14, 1
      %s160 = scalar_select %p159, %s14, 1
      %s161 = smul.addr %s160, 4
      %s162 = scalar_lea.vmem %s0, %s161
      %p163 = scmp.lt.s32.totalorder %s14, 1
      %s164 = scalar_select %p163, %s14, 1
      %s165 = smul.addr %s164, 2
      %s166 = smul.addr %s165, 8
      %s167 = scalar_lea.vmem %s3, %s166
      %v168 = vld [vmem:[%s162] sm:$0xf]
      %v169 = vld [vmem:[%s1] sm:$0xf]
      %s170 = scalar_lea.vmem %s1, 4
      %v171 = vld [vmem:[%s170] sm:$0xf]
      %173 = vrot.lane.b32.xlu0 %v168, 119
      %v174 = vpop.permute.xlu0 %173
      %vm175 = vcmask 31744
      %v177 = vsel %vm175, %v171, 0
      %vm179 = vcmask 1043456
      %v180 = vsel %vm179, %v174, 0
      %182 = vmatprep.subr.mxu0 0.0
      %183 = vmatpush1.msra.mxu0 0.0
      %184 = vmatprep.subr.mxu0 0.0
      %185 = vmatpush1.msra.mxu0 0.0
      %186 = vmatprep.subr.mxu0 0.0
      %187 = vmatpush1.msra.mxu0 0.0
      %188 = vmatprep.subr.mxu0 0.0
      %189 = vmatpush1.msra.mxu0 0.0
      %190 = vmatprep.subr.mxu0 0.0
      %191 = vmatpush1.msra.mxu0 0.0
      %192 = vmatprep.subr.mxu0 0.0
      %193 = vmatpush1.msra.mxu0 0.0
      %194 = vmatprep.subr.mxu0 0.0
      %195 = vmatpush1.msra.mxu0 0.0
      %196 = vmatprep.subr.mxu0 0.0
      %197 = vmatpush1.msra.mxu0 0.0
      %198 = vmatprep.subr.mxu0 0.0
      %199 = vmatpush1.msra.mxu0 0.0
      %200 = vmatprep.subr.mxu0 0.0
      %201 = vmatpush1.msra.mxu0 0.0
      %202 = vmatprep.subr.mxu0 0.0
      %203 = vmatpush1.msra.mxu0 0.0
      %204 = vmatprep.subr.mxu0 0.0
      %205 = vmatpush1.msra.mxu0 0.0
      %206 = vmatprep.subr.mxu0 0.0
      %207 = vmatpush1.msra.mxu0 0.0
      %208 = vmatprep.subr.mxu0 0.0
      %209 = vmatpush1.msra.mxu0 0.0
      %210 = vmatprep.subr.mxu0 0.0
      %211 = vmatpush1.msra.mxu0 0.0
      %212 = vmatprep.subr.mxu0 0.0
      %213 = vmatpush1.msra.mxu0 %v180
      %214 = vmatprep.subr.mxu0 0.0
      %215 = vmatpush2.msra.mxu0 0.0
      %216 = vmatprep.subr.mxu0 0.0
      %217 = vmatpush2.msra.mxu0 0.0
      %218 = vmatprep.subr.mxu0 0.0
      %219 = vmatpush2.msra.mxu0 0.0
      %220 = vmatprep.subr.mxu0 0.0
      %221 = vmatpush2.msra.mxu0 0.0
      %222 = vmatprep.subr.mxu0 0.0
      %223 = vmatpush2.msra.mxu0 0.0
      %224 = vmatprep.subr.mxu0 0.0
      %225 = vmatpush2.msra.mxu0 0.0
      %226 = vmatprep.subr.mxu0 0.0
      %227 = vmatpush2.msra.mxu0 0.0
      %228 = vmatprep.subr.mxu0 0.0
      %229 = vmatpush2.msra.mxu0 0.0
      %230 = vmatprep.subr.mxu0 0.0
      %231 = vmatpush2.msra.mxu0 0.0
      %232 = vmatprep.subr.mxu0 0.0
      %233 = vmatpush2.msra.mxu0 0.0
      %234 = vmatprep.subr.mxu0 0.0
      %235 = vmatpush2.msra.mxu0 0.0
      %236 = vmatprep.subr.mxu0 0.0
      %237 = vmatpush2.msra.mxu0 0.0
      %238 = vmatprep.subr.mxu0 0.0
      %239 = vmatpush2.msra.mxu0 0.0
      %240 = vmatprep.subr.mxu0 0.0
      %241 = vmatpush2.msra.mxu0 0.0
      %242 = vmatprep.subr.mxu0 0.0
      %243 = vmatpush2.msra.mxu0 0.0
      %244 = vmatprep.subr.mxu0 0.0
      %245 = vmatpush2.msra.mxu0 0.0
      %246 = vmatprep.mubr.f32.mxu0 0.0
      %247 = vmatmul.mubr.f32.gmra.mxu0 %v177
      %v248 = vpop.f32.mrf.mxu0
      %v249 = vadd.f32 0.0, %v248
      %v250 = vpop.f32.mrf.mxu0
      %251 = vdwg.mxu0
      %252 = vrot.lane.b32.xlu0 %v168, 118
      %v253 = vpop.permute.xlu0 %252
      %v255 = vsel %vm175, %v169, 0
      %v257 = vsel %vm179, %v253, 0
      %259 = vmatprep.subr.mxu0 0.0
      %260 = vmatpush1.msra.mxu0 0.0
      %261 = vmatprep.subr.mxu0 0.0
      %262 = vmatpush1.msra.mxu0 0.0
      %263 = vmatprep.subr.mxu0 0.0
      %264 = vmatpush1.msra.mxu0 0.0
      %265 = vmatprep.subr.mxu0 0.0
      %266 = vmatpush1.msra.mxu0 0.0
      %267 = vmatprep.subr.mxu0 0.0
      %268 = vmatpush1.msra.mxu0 0.0
      %269 = vmatprep.subr.mxu0 0.0
      %270 = vmatpush1.msra.mxu0 0.0
      %271 = vmatprep.subr.mxu0 0.0
      %272 = vmatpush1.msra.mxu0 0.0
      %273 = vmatprep.subr.mxu0 0.0
      %274 = vmatpush1.msra.mxu0 0.0
      %275 = vmatprep.subr.mxu0 0.0
      %276 = vmatpush1.msra.mxu0 0.0
      %277 = vmatprep.subr.mxu0 0.0
      %278 = vmatpush1.msra.mxu0 0.0
      %279 = vmatprep.subr.mxu0 0.0
      %280 = vmatpush1.msra.mxu0 0.0
      %281 = vmatprep.subr.mxu0 0.0
      %282 = vmatpush1.msra.mxu0 0.0
      %283 = vmatprep.subr.mxu0 0.0
      %284 = vmatpush1.msra.mxu0 0.0
      %285 = vmatprep.subr.mxu0 0.0
      %286 = vmatpush1.msra.mxu0 0.0
      %287 = vmatprep.subr.mxu0 0.0
      %288 = vmatpush1.msra.mxu0 0.0
      %289 = vmatprep.subr.mxu0 0.0
      %290 = vmatpush1.msra.mxu0 %v257
      %291 = vmatprep.subr.mxu0 0.0
      %292 = vmatpush2.msra.mxu0 0.0
      %293 = vmatprep.subr.mxu0 0.0
      %294 = vmatpush2.msra.mxu0 0.0
      %295 = vmatprep.subr.mxu0 0.0
      %296 = vmatpush2.msra.mxu0 0.0
      %297 = vmatprep.subr.mxu0 0.0
      %298 = vmatpush2.msra.mxu0 0.0
      %299 = vmatprep.subr.mxu0 0.0
      %300 = vmatpush2.msra.mxu0 0.0
      %301 = vmatprep.subr.mxu0 0.0
      %302 = vmatpush2.msra.mxu0 0.0
      %303 = vmatprep.subr.mxu0 0.0
      %304 = vmatpush2.msra.mxu0 0.0
      %305 = vmatprep.subr.mxu0 0.0
      %306 = vmatpush2.msra.mxu0 0.0
      %307 = vmatprep.subr.mxu0 0.0
      %308 = vmatpush2.msra.mxu0 0.0
      %309 = vmatprep.subr.mxu0 0.0
      %310 = vmatpush2.msra.mxu0 0.0
      %311 = vmatprep.subr.mxu0 0.0
      %312 = vmatpush2.msra.mxu0 0.0
      %313 = vmatprep.subr.mxu0 0.0
      %314 = vmatpush2.msra.mxu0 0.0
      %315 = vmatprep.subr.mxu0 0.0
      %316 = vmatpush2.msra.mxu0 0.0
      %317 = vmatprep.subr.mxu0 0.0
      %318 = vmatpush2.msra.mxu0 0.0
      %319 = vmatprep.subr.mxu0 0.0
      %320 = vmatpush2.msra.mxu0 0.0
      %321 = vmatprep.subr.mxu0 0.0
      %322 = vmatpush2.msra.mxu0 0.0
      %323 = vmatprep.mubr.f32.mxu0 0.0
      %324 = vmatmul.mubr.f32.gmra.mxu0 %v255
      %v325 = vpop.f32.mrf.mxu0
      %v326 = vadd.f32 %v249, %v325
      %v327 = vpop.f32.mrf.mxu0
      %328 = vdwg.mxu0
      %s329 = scalar_lea.vmem %s1, 8
      %v330 = vld [vmem:[%s329] sm:$0xf]
      %331 = vrot.lane.b32.xlu0 %v168, 127
      %v332 = vpop.permute.xlu0 %331
      %v334 = vsel %vm175, %v330, 0
      %v336 = vsel %vm179, %v332, 0
      %338 = vmatprep.subr.mxu0 0.0
      %339 = vmatpush1.msra.mxu0 0.0
      %340 = vmatprep.subr.mxu0 0.0
      %341 = vmatpush1.msra.mxu0 0.0
      %342 = vmatprep.subr.mxu0 0.0
      %343 = vmatpush1.msra.mxu0 0.0
      %344 = vmatprep.subr.mxu0 0.0
      %345 = vmatpush1.msra.mxu0 0.0
      %346 = vmatprep.subr.mxu0 0.0
      %347 = vmatpush1.msra.mxu0 0.0
      %348 = vmatprep.subr.mxu0 0.0
      %349 = vmatpush1.msra.mxu0 0.0
      %350 = vmatprep.subr.mxu0 0.0
      %351 = vmatpush1.msra.mxu0 0.0
      %352 = vmatprep.subr.mxu0 0.0
      %353 = vmatpush1.msra.mxu0 0.0
      %354 = vmatprep.subr.mxu0 0.0
      %355 = vmatpush1.msra.mxu0 0.0
      %356 = vmatprep.subr.mxu0 0.0
      %357 = vmatpush1.msra.mxu0 0.0
      %358 = vmatprep.subr.mxu0 0.0
      %359 = vmatpush1.msra.mxu0 0.0
      %360 = vmatprep.subr.mxu0 0.0
      %361 = vmatpush1.msra.mxu0 0.0
      %362 = vmatprep.subr.mxu0 0.0
      %363 = vmatpush1.msra.mxu0 0.0
      %364 = vmatprep.subr.mxu0 0.0
      %365 = vmatpush1.msra.mxu0 0.0
      %366 = vmatprep.subr.mxu0 0.0
      %367 = vmatpush1.msra.mxu0 0.0
      %368 = vmatprep.subr.mxu0 0.0
      %369 = vmatpush1.msra.mxu0 %v336
      %370 = vmatprep.subr.mxu0 0.0
      %371 = vmatpush2.msra.mxu0 0.0
      %372 = vmatprep.subr.mxu0 0.0
      %373 = vmatpush2.msra.mxu0 0.0
      %374 = vmatprep.subr.mxu0 0.0
      %375 = vmatpush2.msra.mxu0 0.0
      %376 = vmatprep.subr.mxu0 0.0
      %377 = vmatpush2.msra.mxu0 0.0
      %378 = vmatprep.subr.mxu0 0.0
      %379 = vmatpush2.msra.mxu0 0.0
      %380 = vmatprep.subr.mxu0 0.0
      %381 = vmatpush2.msra.mxu0 0.0
      %382 = vmatprep.subr.mxu0 0.0
      %383 = vmatpush2.msra.mxu0 0.0
      %384 = vmatprep.subr.mxu0 0.0
      %385 = vmatpush2.msra.mxu0 0.0
      %386 = vmatprep.subr.mxu0 0.0
      %387 = vmatpush2.msra.mxu0 0.0
      %388 = vmatprep.subr.mxu0 0.0
      %389 = vmatpush2.msra.mxu0 0.0
      %390 = vmatprep.subr.mxu0 0.0
      %391 = vmatpush2.msra.mxu0 0.0
      %392 = vmatprep.subr.mxu0 0.0
      %393 = vmatpush2.msra.mxu0 0.0
      %394 = vmatprep.subr.mxu0 0.0
      %395 = vmatpush2.msra.mxu0 0.0
      %396 = vmatprep.subr.mxu0 0.0
      %397 = vmatpush2.msra.mxu0 0.0
      %398 = vmatprep.subr.mxu0 0.0
      %399 = vmatpush2.msra.mxu0 0.0
      %400 = vmatprep.subr.mxu0 0.0
      %401 = vmatpush2.msra.mxu0 0.0
      %402 = vmatprep.mubr.f32.mxu0 0.0
      %403 = vmatmul.mubr.f32.gmra.mxu0 %v334
      %v404 = vpop.f32.mrf.mxu0
      %v405 = vadd.f32 0.0, %v404
      %v406 = vpop.f32.mrf.mxu0
      %407 = vdwg.mxu0
      %v408 = vadd.f32 %v326, %v405
      %s409 = scalar_lea.vmem %s1, 12
      %v410 = vld [vmem:[%s409] sm:$0xf]
      %v412 = vsel %vm175, %v410, 0
      %v414 = vsel %vm179, %v168, 0
      %416 = vmatprep.subr.mxu0 0.0
      %417 = vmatpush1.msra.mxu0 0.0
      %418 = vmatprep.subr.mxu0 0.0
      %419 = vmatpush1.msra.mxu0 0.0
      %420 = vmatprep.subr.mxu0 0.0
      %421 = vmatpush1.msra.mxu0 0.0
      %422 = vmatprep.subr.mxu0 0.0
      %423 = vmatpush1.msra.mxu0 0.0
      %424 = vmatprep.subr.mxu0 0.0
      %425 = vmatpush1.msra.mxu0 0.0
      %426 = vmatprep.subr.mxu0 0.0
      %427 = vmatpush1.msra.mxu0 0.0
      %428 = vmatprep.subr.mxu0 0.0
      %429 = vmatpush1.msra.mxu0 0.0
      %430 = vmatprep.subr.mxu0 0.0
      %431 = vmatpush1.msra.mxu0 0.0
      %432 = vmatprep.subr.mxu0 0.0
      %433 = vmatpush1.msra.mxu0 0.0
      %434 = vmatprep.subr.mxu0 0.0
      %435 = vmatpush1.msra.mxu0 0.0
      %436 = vmatprep.subr.mxu0 0.0
      %437 = vmatpush1.msra.mxu0 0.0
      %438 = vmatprep.subr.mxu0 0.0
      %439 = vmatpush1.msra.mxu0 0.0
      %440 = vmatprep.subr.mxu0 0.0
      %441 = vmatpush1.msra.mxu0 0.0
      %442 = vmatprep.subr.mxu0 0.0
      %443 = vmatpush1.msra.mxu0 0.0
      %444 = vmatprep.subr.mxu0 0.0
      %445 = vmatpush1.msra.mxu0 0.0
      %446 = vmatprep.subr.mxu0 0.0
      %447 = vmatpush1.msra.mxu0 %v414
      %448 = vmatprep.subr.mxu0 0.0
      %449 = vmatpush2.msra.mxu0 0.0
      %450 = vmatprep.subr.mxu0 0.0
      %451 = vmatpush2.msra.mxu0 0.0
      %452 = vmatprep.subr.mxu0 0.0
      %453 = vmatpush2.msra.mxu0 0.0
      %454 = vmatprep.subr.mxu0 0.0
      %455 = vmatpush2.msra.mxu0 0.0
      %456 = vmatprep.subr.mxu0 0.0
      %457 = vmatpush2.msra.mxu0 0.0
      %458 = vmatprep.subr.mxu0 0.0
      %459 = vmatpush2.msra.mxu0 0.0
      %460 = vmatprep.subr.mxu0 0.0
      %461 = vmatpush2.msra.mxu0 0.0
      %462 = vmatprep.subr.mxu0 0.0
      %463 = vmatpush2.msra.mxu0 0.0
      %464 = vmatprep.subr.mxu0 0.0
      %465 = vmatpush2.msra.mxu0 0.0
      %466 = vmatprep.subr.mxu0 0.0
      %467 = vmatpush2.msra.mxu0 0.0
      %468 = vmatprep.subr.mxu0 0.0
      %469 = vmatpush2.msra.mxu0 0.0
      %470 = vmatprep.subr.mxu0 0.0
      %471 = vmatpush2.msra.mxu0 0.0
      %472 = vmatprep.subr.mxu0 0.0
      %473 = vmatpush2.msra.mxu0 0.0
      %474 = vmatprep.subr.mxu0 0.0
      %475 = vmatpush2.msra.mxu0 0.0
      %476 = vmatprep.subr.mxu0 0.0
      %477 = vmatpush2.msra.mxu0 0.0
      %478 = vmatprep.subr.mxu0 0.0
      %479 = vmatpush2.msra.mxu0 0.0
      %480 = vmatprep.mubr.f32.mxu0 0.0
      %481 = vmatmul.mubr.f32.gmra.mxu0 %v412
      %v482 = vpop.f32.mrf.mxu0
      %v483 = vadd.f32 0.0, %v482
      %v484 = vpop.f32.mrf.mxu0
      %485 = vdwg.mxu0
      %v486 = vadd.f32 %v408, %v483
      %s487 = scalar_lea.vmem %s1, 16
      %v488 = vld [vmem:[%s487] sm:$0xf]
      %s489 = scalar_lea.vmem %s1, 20
      %v490 = vld [vmem:[%s489] sm:$0xf]
      %v492 = vsel %vm175, %v490, 0
      %494 = vmatprep.subr.mxu0 0.0
      %495 = vmatpush1.msra.mxu0 0.0
      %496 = vmatprep.subr.mxu0 0.0
      %497 = vmatpush1.msra.mxu0 0.0
      %498 = vmatprep.subr.mxu0 0.0
      %499 = vmatpush1.msra.mxu0 0.0
      %500 = vmatprep.subr.mxu0 0.0
      %501 = vmatpush1.msra.mxu0 0.0
      %502 = vmatprep.subr.mxu0 0.0
      %503 = vmatpush1.msra.mxu0 0.0
      %504 = vmatprep.subr.mxu0 0.0
      %505 = vmatpush1.msra.mxu0 0.0
      %506 = vmatprep.subr.mxu0 0.0
      %507 = vmatpush1.msra.mxu0 0.0
      %508 = vmatprep.subr.mxu0 0.0
      %509 = vmatpush1.msra.mxu0 0.0
      %510 = vmatprep.subr.mxu0 0.0
      %511 = vmatpush1.msra.mxu0 0.0
      %512 = vmatprep.subr.mxu0 0.0
      %513 = vmatpush1.msra.mxu0 0.0
      %514 = vmatprep.subr.mxu0 0.0
      %515 = vmatpush1.msra.mxu0 0.0
      %516 = vmatprep.subr.mxu0 0.0
      %517 = vmatpush1.msra.mxu0 0.0
      %518 = vmatprep.subr.mxu0 0.0
      %519 = vmatpush1.msra.mxu0 0.0
      %520 = vmatprep.subr.mxu0 0.0
      %521 = vmatpush1.msra.mxu0 0.0
      %522 = vmatprep.subr.mxu0 0.0
      %523 = vmatpush1.msra.mxu0 0.0
      %524 = vmatprep.subr.mxu0 0.0
      %525 = vmatpush1.msra.mxu0 %v180
      %526 = vmatprep.subr.mxu0 0.0
      %527 = vmatpush2.msra.mxu0 0.0
      %528 = vmatprep.subr.mxu0 0.0
      %529 = vmatpush2.msra.mxu0 0.0
      %530 = vmatprep.subr.mxu0 0.0
      %531 = vmatpush2.msra.mxu0 0.0
      %532 = vmatprep.subr.mxu0 0.0
      %533 = vmatpush2.msra.mxu0 0.0
      %534 = vmatprep.subr.mxu0 0.0
      %535 = vmatpush2.msra.mxu0 0.0
      %536 = vmatprep.subr.mxu0 0.0
      %537 = vmatpush2.msra.mxu0 0.0
      %538 = vmatprep.subr.mxu0 0.0
      %539 = vmatpush2.msra.mxu0 0.0
      %540 = vmatprep.subr.mxu0 0.0
      %541 = vmatpush2.msra.mxu0 0.0
      %542 = vmatprep.subr.mxu0 0.0
      %543 = vmatpush2.msra.mxu0 0.0
      %544 = vmatprep.subr.mxu0 0.0
      %545 = vmatpush2.msra.mxu0 0.0
      %546 = vmatprep.subr.mxu0 0.0
      %547 = vmatpush2.msra.mxu0 0.0
      %548 = vmatprep.subr.mxu0 0.0
      %549 = vmatpush2.msra.mxu0 0.0
      %550 = vmatprep.subr.mxu0 0.0
      %551 = vmatpush2.msra.mxu0 0.0
      %552 = vmatprep.subr.mxu0 0.0
      %553 = vmatpush2.msra.mxu0 0.0
      %554 = vmatprep.subr.mxu0 0.0
      %555 = vmatpush2.msra.mxu0 0.0
      %556 = vmatprep.subr.mxu0 0.0
      %557 = vmatpush2.msra.mxu0 0.0
      %558 = vmatprep.mubr.f32.mxu0 0.0
      %559 = vmatmul.mubr.f32.gmra.mxu0 %v492
      %v560 = vpop.f32.mrf.mxu0
      %v561 = vadd.f32 0.0, %v560
      %v562 = vpop.f32.mrf.mxu0
      %563 = vdwg.mxu0
      %v565 = vsel %vm175, %v488, 0
      %567 = vmatprep.subr.mxu0 0.0
      %568 = vmatpush1.msra.mxu0 0.0
      %569 = vmatprep.subr.mxu0 0.0
      %570 = vmatpush1.msra.mxu0 0.0
      %571 = vmatprep.subr.mxu0 0.0
      %572 = vmatpush1.msra.mxu0 0.0
      %573 = vmatprep.subr.mxu0 0.0
      %574 = vmatpush1.msra.mxu0 0.0
      %575 = vmatprep.subr.mxu0 0.0
      %576 = vmatpush1.msra.mxu0 0.0
      %577 = vmatprep.subr.mxu0 0.0
      %578 = vmatpush1.msra.mxu0 0.0
      %579 = vmatprep.subr.mxu0 0.0
      %580 = vmatpush1.msra.mxu0 0.0
      %581 = vmatprep.subr.mxu0 0.0
      %582 = vmatpush1.msra.mxu0 0.0
      %583 = vmatprep.subr.mxu0 0.0
      %584 = vmatpush1.msra.mxu0 0.0
      %585 = vmatprep.subr.mxu0 0.0
      %586 = vmatpush1.msra.mxu0 0.0
      %587 = vmatprep.subr.mxu0 0.0
      %588 = vmatpush1.msra.mxu0 0.0
      %589 = vmatprep.subr.mxu0 0.0
      %590 = vmatpush1.msra.mxu0 0.0
      %591 = vmatprep.subr.mxu0 0.0
      %592 = vmatpush1.msra.mxu0 0.0
      %593 = vmatprep.subr.mxu0 0.0
      %594 = vmatpush1.msra.mxu0 0.0
      %595 = vmatprep.subr.mxu0 0.0
      %596 = vmatpush1.msra.mxu0 0.0
      %597 = vmatprep.subr.mxu0 0.0
      %598 = vmatpush1.msra.mxu0 %v257
      %599 = vmatprep.subr.mxu0 0.0
      %600 = vmatpush2.msra.mxu0 0.0
      %601 = vmatprep.subr.mxu0 0.0
      %602 = vmatpush2.msra.mxu0 0.0
      %603 = vmatprep.subr.mxu0 0.0
      %604 = vmatpush2.msra.mxu0 0.0
      %605 = vmatprep.subr.mxu0 0.0
      %606 = vmatpush2.msra.mxu0 0.0
      %607 = vmatprep.subr.mxu0 0.0
      %608 = vmatpush2.msra.mxu0 0.0
      %609 = vmatprep.subr.mxu0 0.0
      %610 = vmatpush2.msra.mxu0 0.0
      %611 = vmatprep.subr.mxu0 0.0
      %612 = vmatpush2.msra.mxu0 0.0
      %613 = vmatprep.subr.mxu0 0.0
      %614 = vmatpush2.msra.mxu0 0.0
      %615 = vmatprep.subr.mxu0 0.0
      %616 = vmatpush2.msra.mxu0 0.0
      %617 = vmatprep.subr.mxu0 0.0
      %618 = vmatpush2.msra.mxu0 0.0
      %619 = vmatprep.subr.mxu0 0.0
      %620 = vmatpush2.msra.mxu0 0.0
      %621 = vmatprep.subr.mxu0 0.0
      %622 = vmatpush2.msra.mxu0 0.0
      %623 = vmatprep.subr.mxu0 0.0
      %624 = vmatpush2.msra.mxu0 0.0
      %625 = vmatprep.subr.mxu0 0.0
      %626 = vmatpush2.msra.mxu0 0.0
      %627 = vmatprep.subr.mxu0 0.0
      %628 = vmatpush2.msra.mxu0 0.0
      %629 = vmatprep.subr.mxu0 0.0
      %630 = vmatpush2.msra.mxu0 0.0
      %631 = vmatprep.mubr.f32.mxu0 0.0
      %632 = vmatmul.mubr.f32.gmra.mxu0 %v565
      %v633 = vpop.f32.mrf.mxu0
      %v634 = vadd.f32 %v561, %v633
      %v635 = vpop.f32.mrf.mxu0
      %636 = vdwg.mxu0
      %s637 = scalar_lea.vmem %s1, 24
      %v638 = vld [vmem:[%s637] sm:$0xf]
      %v640 = vsel %vm175, %v638, 0
      %642 = vmatprep.subr.mxu0 0.0
      %643 = vmatpush1.msra.mxu0 0.0
      %644 = vmatprep.subr.mxu0 0.0
      %645 = vmatpush1.msra.mxu0 0.0
      %646 = vmatprep.subr.mxu0 0.0
      %647 = vmatpush1.msra.mxu0 0.0
      %648 = vmatprep.subr.mxu0 0.0
      %649 = vmatpush1.msra.mxu0 0.0
      %650 = vmatprep.subr.mxu0 0.0
      %651 = vmatpush1.msra.mxu0 0.0
      %652 = vmatprep.subr.mxu0 0.0
      %653 = vmatpush1.msra.mxu0 0.0
      %654 = vmatprep.subr.mxu0 0.0
      %655 = vmatpush1.msra.mxu0 0.0
      %656 = vmatprep.subr.mxu0 0.0
      %657 = vmatpush1.msra.mxu0 0.0
      %658 = vmatprep.subr.mxu0 0.0
      %659 = vmatpush1.msra.mxu0 0.0
      %660 = vmatprep.subr.mxu0 0.0
      %661 = vmatpush1.msra.mxu0 0.0
      %662 = vmatprep.subr.mxu0 0.0
      %663 = vmatpush1.msra.mxu0 0.0
      %664 = vmatprep.subr.mxu0 0.0
      %665 = vmatpush1.msra.mxu0 0.0
      %666 = vmatprep.subr.mxu0 0.0
      %667 = vmatpush1.msra.mxu0 0.0
      %668 = vmatprep.subr.mxu0 0.0
      %669 = vmatpush1.msra.mxu0 0.0
      %670 = vmatprep.subr.mxu0 0.0
      %671 = vmatpush1.msra.mxu0 0.0
      %672 = vmatprep.subr.mxu0 0.0
      %673 = vmatpush1.msra.mxu0 %v336
      %674 = vmatprep.subr.mxu0 0.0
      %675 = vmatpush2.msra.mxu0 0.0
      %676 = vmatprep.subr.mxu0 0.0
      %677 = vmatpush2.msra.mxu0 0.0
      %678 = vmatprep.subr.mxu0 0.0
      %679 = vmatpush2.msra.mxu0 0.0
      %680 = vmatprep.subr.mxu0 0.0
      %681 = vmatpush2.msra.mxu0 0.0
      %682 = vmatprep.subr.mxu0 0.0
      %683 = vmatpush2.msra.mxu0 0.0
      %684 = vmatprep.subr.mxu0 0.0
      %685 = vmatpush2.msra.mxu0 0.0
      %686 = vmatprep.subr.mxu0 0.0
      %687 = vmatpush2.msra.mxu0 0.0
      %688 = vmatprep.subr.mxu0 0.0
      %689 = vmatpush2.msra.mxu0 0.0
      %690 = vmatprep.subr.mxu0 0.0
      %691 = vmatpush2.msra.mxu0 0.0
      %692 = vmatprep.subr.mxu0 0.0
      %693 = vmatpush2.msra.mxu0 0.0
      %694 = vmatprep.subr.mxu0 0.0
      %695 = vmatpush2.msra.mxu0 0.0
      %696 = vmatprep.subr.mxu0 0.0
      %697 = vmatpush2.msra.mxu0 0.0
      %698 = vmatprep.subr.mxu0 0.0
      %699 = vmatpush2.msra.mxu0 0.0
      %700 = vmatprep.subr.mxu0 0.0
      %701 = vmatpush2.msra.mxu0 0.0
      %702 = vmatprep.subr.mxu0 0.0
      %703 = vmatpush2.msra.mxu0 0.0
      %704 = vmatprep.subr.mxu0 0.0
      %705 = vmatpush2.msra.mxu0 0.0
      %706 = vmatprep.mubr.f32.mxu0 0.0
      %707 = vmatmul.mubr.f32.gmra.mxu0 %v640
      %v708 = vpop.f32.mrf.mxu0
      %v709 = vadd.f32 0.0, %v708
      %v710 = vpop.f32.mrf.mxu0
      %711 = vdwg.mxu0
      %v712 = vadd.f32 %v634, %v709
      %s713 = scalar_lea.vmem %s1, 28
      %v714 = vld [vmem:[%s713] sm:$0xf]
      %v716 = vsel %vm175, %v714, 0
      %718 = vmatprep.subr.mxu0 0.0
      %719 = vmatpush1.msra.mxu0 0.0
      %720 = vmatprep.subr.mxu0 0.0
      %721 = vmatpush1.msra.mxu0 0.0
      %722 = vmatprep.subr.mxu0 0.0
      %723 = vmatpush1.msra.mxu0 0.0
      %724 = vmatprep.subr.mxu0 0.0
      %725 = vmatpush1.msra.mxu0 0.0
      %726 = vmatprep.subr.mxu0 0.0
      %727 = vmatpush1.msra.mxu0 0.0
      %728 = vmatprep.subr.mxu0 0.0
      %729 = vmatpush1.msra.mxu0 0.0
      %730 = vmatprep.subr.mxu0 0.0
      %731 = vmatpush1.msra.mxu0 0.0
      %732 = vmatprep.subr.mxu0 0.0
      %733 = vmatpush1.msra.mxu0 0.0
      %734 = vmatprep.subr.mxu0 0.0
      %735 = vmatpush1.msra.mxu0 0.0
      %736 = vmatprep.subr.mxu0 0.0
      %737 = vmatpush1.msra.mxu0 0.0
      %738 = vmatprep.subr.mxu0 0.0
      %739 = vmatpush1.msra.mxu0 0.0
      %740 = vmatprep.subr.mxu0 0.0
      %741 = vmatpush1.msra.mxu0 0.0
      %742 = vmatprep.subr.mxu0 0.0
      %743 = vmatpush1.msra.mxu0 0.0
      %744 = vmatprep.subr.mxu0 0.0
      %745 = vmatpush1.msra.mxu0 0.0
      %746 = vmatprep.subr.mxu0 0.0
      %747 = vmatpush1.msra.mxu0 0.0
      %748 = vmatprep.subr.mxu0 0.0
      %749 = vmatpush1.msra.mxu0 %v414
      %750 = vmatprep.subr.mxu0 0.0
      %751 = vmatpush2.msra.mxu0 0.0
      %752 = vmatprep.subr.mxu0 0.0
      %753 = vmatpush2.msra.mxu0 0.0
      %754 = vmatprep.subr.mxu0 0.0
      %755 = vmatpush2.msra.mxu0 0.0
      %756 = vmatprep.subr.mxu0 0.0
      %757 = vmatpush2.msra.mxu0 0.0
      %758 = vmatprep.subr.mxu0 0.0
      %759 = vmatpush2.msra.mxu0 0.0
      %760 = vmatprep.subr.mxu0 0.0
      %761 = vmatpush2.msra.mxu0 0.0
      %762 = vmatprep.subr.mxu0 0.0
      %763 = vmatpush2.msra.mxu0 0.0
      %764 = vmatprep.subr.mxu0 0.0
      %765 = vmatpush2.msra.mxu0 0.0
      %766 = vmatprep.subr.mxu0 0.0
      %767 = vmatpush2.msra.mxu0 0.0
      %768 = vmatprep.subr.mxu0 0.0
      %769 = vmatpush2.msra.mxu0 0.0
      %770 = vmatprep.subr.mxu0 0.0
      %771 = vmatpush2.msra.mxu0 0.0
      %772 = vmatprep.subr.mxu0 0.0
      %773 = vmatpush2.msra.mxu0 0.0
      %774 = vmatprep.subr.mxu0 0.0
      %775 = vmatpush2.msra.mxu0 0.0
      %776 = vmatprep.subr.mxu0 0.0
      %777 = vmatpush2.msra.mxu0 0.0
      %778 = vmatprep.subr.mxu0 0.0
      %779 = vmatpush2.msra.mxu0 0.0
      %780 = vmatprep.subr.mxu0 0.0
      %781 = vmatpush2.msra.mxu0 0.0
      %782 = vmatprep.mubr.f32.mxu0 0.0
      %783 = vmatmul.mubr.f32.gmra.mxu0 %v716
      %v784 = vpop.f32.mrf.mxu0
      %v785 = vadd.f32 0.0, %v784
      %v786 = vpop.f32.mrf.mxu0
      %787 = vdwg.mxu0
      %v788 = vadd.f32 %v712, %v785
      %s789 = scalar_lea.vmem %s1, 32
      %v790 = vld [vmem:[%s789] sm:$0xf]
      %s791 = scalar_lea.vmem %s1, 36
      %v792 = vld [vmem:[%s791] sm:$0xf]
      %v794 = vsel %vm175, %v792, 0
      %796 = vmatprep.subr.mxu0 0.0
      %797 = vmatpush1.msra.mxu0 0.0
      %798 = vmatprep.subr.mxu0 0.0
      %799 = vmatpush1.msra.mxu0 0.0
      %800 = vmatprep.subr.mxu0 0.0
      %801 = vmatpush1.msra.mxu0 0.0
      %802 = vmatprep.subr.mxu0 0.0
      %803 = vmatpush1.msra.mxu0 0.0
      %804 = vmatprep.subr.mxu0 0.0
      %805 = vmatpush1.msra.mxu0 0.0
      %806 = vmatprep.subr.mxu0 0.0
      %807 = vmatpush1.msra.mxu0 0.0
      %808 = vmatprep.subr.mxu0 0.0
      %809 = vmatpush1.msra.mxu0 0.0
      %810 = vmatprep.subr.mxu0 0.0
      %811 = vmatpush1.msra.mxu0 0.0
      %812 = vmatprep.subr.mxu0 0.0
      %813 = vmatpush1.msra.mxu0 0.0
      %814 = vmatprep.subr.mxu0 0.0
      %815 = vmatpush1.msra.mxu0 0.0
      %816 = vmatprep.subr.mxu0 0.0
      %817 = vmatpush1.msra.mxu0 0.0
      %818 = vmatprep.subr.mxu0 0.0
      %819 = vmatpush1.msra.mxu0 0.0
      %820 = vmatprep.subr.mxu0 0.0
      %821 = vmatpush1.msra.mxu0 0.0
      %822 = vmatprep.subr.mxu0 0.0
      %823 = vmatpush1.msra.mxu0 0.0
      %824 = vmatprep.subr.mxu0 0.0
      %825 = vmatpush1.msra.mxu0 0.0
      %826 = vmatprep.subr.mxu0 0.0
      %827 = vmatpush1.msra.mxu0 %v180
      %828 = vmatprep.subr.mxu0 0.0
      %829 = vmatpush2.msra.mxu0 0.0
      %830 = vmatprep.subr.mxu0 0.0
      %831 = vmatpush2.msra.mxu0 0.0
      %832 = vmatprep.subr.mxu0 0.0
      %833 = vmatpush2.msra.mxu0 0.0
      %834 = vmatprep.subr.mxu0 0.0
      %835 = vmatpush2.msra.mxu0 0.0
      %836 = vmatprep.subr.mxu0 0.0
      %837 = vmatpush2.msra.mxu0 0.0
      %838 = vmatprep.subr.mxu0 0.0
      %839 = vmatpush2.msra.mxu0 0.0
      %840 = vmatprep.subr.mxu0 0.0
      %841 = vmatpush2.msra.mxu0 0.0
      %842 = vmatprep.subr.mxu0 0.0
      %843 = vmatpush2.msra.mxu0 0.0
      %844 = vmatprep.subr.mxu0 0.0
      %845 = vmatpush2.msra.mxu0 0.0
      %846 = vmatprep.subr.mxu0 0.0
      %847 = vmatpush2.msra.mxu0 0.0
      %848 = vmatprep.subr.mxu0 0.0
      %849 = vmatpush2.msra.mxu0 0.0
      %850 = vmatprep.subr.mxu0 0.0
      %851 = vmatpush2.msra.mxu0 0.0
      %852 = vmatprep.subr.mxu0 0.0
      %853 = vmatpush2.msra.mxu0 0.0
      %854 = vmatprep.subr.mxu0 0.0
      %855 = vmatpush2.msra.mxu0 0.0
      %856 = vmatprep.subr.mxu0 0.0
      %857 = vmatpush2.msra.mxu0 0.0
      %858 = vmatprep.subr.mxu0 0.0
      %859 = vmatpush2.msra.mxu0 0.0
      %860 = vmatprep.mubr.f32.mxu0 0.0
      %861 = vmatmul.mubr.f32.gmra.mxu0 %v794
      %v862 = vpop.f32.mrf.mxu0
      %v863 = vadd.f32 0.0, %v862
      %v864 = vpop.f32.mrf.mxu0
      %865 = vdwg.mxu0
      %v867 = vsel %vm175, %v790, 0
      %869 = vmatprep.subr.mxu0 0.0
      %870 = vmatpush1.msra.mxu0 0.0
      %871 = vmatprep.subr.mxu0 0.0
      %872 = vmatpush1.msra.mxu0 0.0
      %873 = vmatprep.subr.mxu0 0.0
      %874 = vmatpush1.msra.mxu0 0.0
      %875 = vmatprep.subr.mxu0 0.0
      %876 = vmatpush1.msra.mxu0 0.0
      %877 = vmatprep.subr.mxu0 0.0
      %878 = vmatpush1.msra.mxu0 0.0
      %879 = vmatprep.subr.mxu0 0.0
      %880 = vmatpush1.msra.mxu0 0.0
      %881 = vmatprep.subr.mxu0 0.0
      %882 = vmatpush1.msra.mxu0 0.0
      %883 = vmatprep.subr.mxu0 0.0
      %884 = vmatpush1.msra.mxu0 0.0
      %885 = vmatprep.subr.mxu0 0.0
      %886 = vmatpush1.msra.mxu0 0.0
      %887 = vmatprep.subr.mxu0 0.0
      %888 = vmatpush1.msra.mxu0 0.0
      %889 = vmatprep.subr.mxu0 0.0
      %890 = vmatpush1.msra.mxu0 0.0
      %891 = vmatprep.subr.mxu0 0.0
      %892 = vmatpush1.msra.mxu0 0.0
      %893 = vmatprep.subr.mxu0 0.0
      %894 = vmatpush1.msra.mxu0 0.0
      %895 = vmatprep.subr.mxu0 0.0
      %896 = vmatpush1.msra.mxu0 0.0
      %897 = vmatprep.subr.mxu0 0.0
      %898 = vmatpush1.msra.mxu0 0.0
      %899 = vmatprep.subr.mxu0 0.0
      %900 = vmatpush1.msra.mxu0 %v257
      %901 = vmatprep.subr.mxu0 0.0
      %902 = vmatpush2.msra.mxu0 0.0
      %903 = vmatprep.subr.mxu0 0.0
      %904 = vmatpush2.msra.mxu0 0.0
      %905 = vmatprep.subr.mxu0 0.0
      %906 = vmatpush2.msra.mxu0 0.0
      %907 = vmatprep.subr.mxu0 0.0
      %908 = vmatpush2.msra.mxu0 0.0
      %909 = vmatprep.subr.mxu0 0.0
      %910 = vmatpush2.msra.mxu0 0.0
      %911 = vmatprep.subr.mxu0 0.0
      %912 = vmatpush2.msra.mxu0 0.0
      %913 = vmatprep.subr.mxu0 0.0
      %914 = vmatpush2.msra.mxu0 0.0
      %915 = vmatprep.subr.mxu0 0.0
      %916 = vmatpush2.msra.mxu0 0.0
      %917 = vmatprep.subr.mxu0 0.0
      %918 = vmatpush2.msra.mxu0 0.0
      %919 = vmatprep.subr.mxu0 0.0
      %920 = vmatpush2.msra.mxu0 0.0
      %921 = vmatprep.subr.mxu0 0.0
      %922 = vmatpush2.msra.mxu0 0.0
      %923 = vmatprep.subr.mxu0 0.0
      %924 = vmatpush2.msra.mxu0 0.0
      %925 = vmatprep.subr.mxu0 0.0
      %926 = vmatpush2.msra.mxu0 0.0
      %927 = vmatprep.subr.mxu0 0.0
      %928 = vmatpush2.msra.mxu0 0.0
      %929 = vmatprep.subr.mxu0 0.0
      %930 = vmatpush2.msra.mxu0 0.0
      %931 = vmatprep.subr.mxu0 0.0
      %932 = vmatpush2.msra.mxu0 0.0
      %933 = vmatprep.mubr.f32.mxu0 0.0
      %934 = vmatmul.mubr.f32.gmra.mxu0 %v867
      %v935 = vpop.f32.mrf.mxu0
      %v936 = vadd.f32 %v863, %v935
      %v937 = vpop.f32.mrf.mxu0
      %938 = vdwg.mxu0
      %s939 = scalar_lea.vmem %s1, 40
      %v940 = vld [vmem:[%s939] sm:$0xf]
      %v942 = vsel %vm175, %v940, 0
      %944 = vmatprep.subr.mxu0 0.0
      %945 = vmatpush1.msra.mxu0 0.0
      %946 = vmatprep.subr.mxu0 0.0
      %947 = vmatpush1.msra.mxu0 0.0
      %948 = vmatprep.subr.mxu0 0.0
      %949 = vmatpush1.msra.mxu0 0.0
      %950 = vmatprep.subr.mxu0 0.0
      %951 = vmatpush1.msra.mxu0 0.0
      %952 = vmatprep.subr.mxu0 0.0
      %953 = vmatpush1.msra.mxu0 0.0
      %954 = vmatprep.subr.mxu0 0.0
      %955 = vmatpush1.msra.mxu0 0.0
      %956 = vmatprep.subr.mxu0 0.0
      %957 = vmatpush1.msra.mxu0 0.0
      %958 = vmatprep.subr.mxu0 0.0
      %959 = vmatpush1.msra.mxu0 0.0
      %960 = vmatprep.subr.mxu0 0.0
      %961 = vmatpush1.msra.mxu0 0.0
      %962 = vmatprep.subr.mxu0 0.0
      %963 = vmatpush1.msra.mxu0 0.0
      %964 = vmatprep.subr.mxu0 0.0
      %965 = vmatpush1.msra.mxu0 0.0
      %966 = vmatprep.subr.mxu0 0.0
      %967 = vmatpush1.msra.mxu0 0.0
      %968 = vmatprep.subr.mxu0 0.0
      %969 = vmatpush1.msra.mxu0 0.0
      %970 = vmatprep.subr.mxu0 0.0
      %971 = vmatpush1.msra.mxu0 0.0
      %972 = vmatprep.subr.mxu0 0.0
      %973 = vmatpush1.msra.mxu0 0.0
      %974 = vmatprep.subr.mxu0 0.0
      %975 = vmatpush1.msra.mxu0 %v336
      %976 = vmatprep.subr.mxu0 0.0
      %977 = vmatpush2.msra.mxu0 0.0
      %978 = vmatprep.subr.mxu0 0.0
      %979 = vmatpush2.msra.mxu0 0.0
      %980 = vmatprep.subr.mxu0 0.0
      %981 = vmatpush2.msra.mxu0 0.0
      %982 = vmatprep.subr.mxu0 0.0
      %983 = vmatpush2.msra.mxu0 0.0
      %984 = vmatprep.subr.mxu0 0.0
      %985 = vmatpush2.msra.mxu0 0.0
      %986 = vmatprep.subr.mxu0 0.0
      %987 = vmatpush2.msra.mxu0 0.0
      %988 = vmatprep.subr.mxu0 0.0
      %989 = vmatpush2.msra.mxu0 0.0
      %990 = vmatprep.subr.mxu0 0.0
      %991 = vmatpush2.msra.mxu0 0.0
      %992 = vmatprep.subr.mxu0 0.0
      %993 = vmatpush2.msra.mxu0 0.0
      %994 = vmatprep.subr.mxu0 0.0
      %995 = vmatpush2.msra.mxu0 0.0
      %996 = vmatprep.subr.mxu0 0.0
      %997 = vmatpush2.msra.mxu0 0.0
      %998 = vmatprep.subr.mxu0 0.0
      %999 = vmatpush2.msra.mxu0 0.0
      %1000 = vmatprep.subr.mxu0 0.0
      %1001 = vmatpush2.msra.mxu0 0.0
      %1002 = vmatprep.subr.mxu0 0.0
      %1003 = vmatpush2.msra.mxu0 0.0
      %1004 = vmatprep.subr.mxu0 0.0
      %1005 = vmatpush2.msra.mxu0 0.0
      %1006 = vmatprep.subr.mxu0 0.0
      %1007 = vmatpush2.msra.mxu0 0.0
      %1008 = vmatprep.mubr.f32.mxu0 0.0
      %1009 = vmatmul.mubr.f32.gmra.mxu0 %v942
      %v1010 = vpop.f32.mrf.mxu0
      %v1011 = vadd.f32 0.0, %v1010
      %v1012 = vpop.f32.mrf.mxu0
      %1013 = vdwg.mxu0
      %v1014 = vadd.f32 %v936, %v1011
      %s1015 = scalar_lea.vmem %s1, 44
      %v1016 = vld [vmem:[%s1015] sm:$0xf]
      %v1018 = vsel %vm175, %v1016, 0
      %1020 = vmatprep.subr.mxu0 0.0
      %1021 = vmatpush1.msra.mxu0 0.0
      %1022 = vmatprep.subr.mxu0 0.0
      %1023 = vmatpush1.msra.mxu0 0.0
      %1024 = vmatprep.subr.mxu0 0.0
      %1025 = vmatpush1.msra.mxu0 0.0
      %1026 = vmatprep.subr.mxu0 0.0
      %1027 = vmatpush1.msra.mxu0 0.0
      %1028 = vmatprep.subr.mxu0 0.0
      %1029 = vmatpush1.msra.mxu0 0.0
      %1030 = vmatprep.subr.mxu0 0.0
      %1031 = vmatpush1.msra.mxu0 0.0
      %1032 = vmatprep.subr.mxu0 0.0
      %1033 = vmatpush1.msra.mxu0 0.0
      %1034 = vmatprep.subr.mxu0 0.0
      %1035 = vmatpush1.msra.mxu0 0.0
      %1036 = vmatprep.subr.mxu0 0.0
      %1037 = vmatpush1.msra.mxu0 0.0
      %1038 = vmatprep.subr.mxu0 0.0
      %1039 = vmatpush1.msra.mxu0 0.0
      %1040 = vmatprep.subr.mxu0 0.0
      %1041 = vmatpush1.msra.mxu0 0.0
      %1042 = vmatprep.subr.mxu0 0.0
      %1043 = vmatpush1.msra.mxu0 0.0
      %1044 = vmatprep.subr.mxu0 0.0
      %1045 = vmatpush1.msra.mxu0 0.0
      %1046 = vmatprep.subr.mxu0 0.0
      %1047 = vmatpush1.msra.mxu0 0.0
      %1048 = vmatprep.subr.mxu0 0.0
      %1049 = vmatpush1.msra.mxu0 0.0
      %1050 = vmatprep.subr.mxu0 0.0
      %1051 = vmatpush1.msra.mxu0 %v414
      %1052 = vmatprep.subr.mxu0 0.0
      %1053 = vmatpush2.msra.mxu0 0.0
      %1054 = vmatprep.subr.mxu0 0.0
      %1055 = vmatpush2.msra.mxu0 0.0
      %1056 = vmatprep.subr.mxu0 0.0
      %1057 = vmatpush2.msra.mxu0 0.0
      %1058 = vmatprep.subr.mxu0 0.0
      %1059 = vmatpush2.msra.mxu0 0.0
      %1060 = vmatprep.subr.mxu0 0.0
      %1061 = vmatpush2.msra.mxu0 0.0
      %1062 = vmatprep.subr.mxu0 0.0
      %1063 = vmatpush2.msra.mxu0 0.0
      %1064 = vmatprep.subr.mxu0 0.0
      %1065 = vmatpush2.msra.mxu0 0.0
      %1066 = vmatprep.subr.mxu0 0.0
      %1067 = vmatpush2.msra.mxu0 0.0
      %1068 = vmatprep.subr.mxu0 0.0
      %1069 = vmatpush2.msra.mxu0 0.0
      %1070 = vmatprep.subr.mxu0 0.0
      %1071 = vmatpush2.msra.mxu0 0.0
      %1072 = vmatprep.subr.mxu0 0.0
      %1073 = vmatpush2.msra.mxu0 0.0
      %1074 = vmatprep.subr.mxu0 0.0
      %1075 = vmatpush2.msra.mxu0 0.0
      %1076 = vmatprep.subr.mxu0 0.0
      %1077 = vmatpush2.msra.mxu0 0.0
      %1078 = vmatprep.subr.mxu0 0.0
      %1079 = vmatpush2.msra.mxu0 0.0
      %1080 = vmatprep.subr.mxu0 0.0
      %1081 = vmatpush2.msra.mxu0 0.0
      %1082 = vmatprep.subr.mxu0 0.0
      %1083 = vmatpush2.msra.mxu0 0.0
      %1084 = vmatprep.mubr.f32.mxu0 0.0
      %1085 = vmatmul.mubr.f32.gmra.mxu0 %v1018
      %v1086 = vpop.f32.mrf.mxu0
      %v1087 = vadd.f32 0.0, %v1086
      %v1088 = vpop.f32.mrf.mxu0
      %1089 = vdwg.mxu0
      %v1090 = vadd.f32 %v1014, %v1087
      %s1091 = scalar_lea.vmem %s1, 48
      %v1092 = vld [vmem:[%s1091] sm:$0xf]
      %s1093 = scalar_lea.vmem %s1, 52
      %v1094 = vld [vmem:[%s1093] sm:$0xf]
      %v1096 = vsel %vm175, %v1094, 0
      %1098 = vmatprep.subr.mxu0 0.0
      %1099 = vmatpush1.msra.mxu0 0.0
      %1100 = vmatprep.subr.mxu0 0.0
      %1101 = vmatpush1.msra.mxu0 0.0
      %1102 = vmatprep.subr.mxu0 0.0
      %1103 = vmatpush1.msra.mxu0 0.0
      %1104 = vmatprep.subr.mxu0 0.0
      %1105 = vmatpush1.msra.mxu0 0.0
      %1106 = vmatprep.subr.mxu0 0.0
      %1107 = vmatpush1.msra.mxu0 0.0
      %1108 = vmatprep.subr.mxu0 0.0
      %1109 = vmatpush1.msra.mxu0 0.0
      %1110 = vmatprep.subr.mxu0 0.0
      %1111 = vmatpush1.msra.mxu0 0.0
      %1112 = vmatprep.subr.mxu0 0.0
      %1113 = vmatpush1.msra.mxu0 0.0
      %1114 = vmatprep.subr.mxu0 0.0
      %1115 = vmatpush1.msra.mxu0 0.0
      %1116 = vmatprep.subr.mxu0 0.0
      %1117 = vmatpush1.msra.mxu0 0.0
      %1118 = vmatprep.subr.mxu0 0.0
      %1119 = vmatpush1.msra.mxu0 0.0
      %1120 = vmatprep.subr.mxu0 0.0
      %1121 = vmatpush1.msra.mxu0 0.0
      %1122 = vmatprep.subr.mxu0 0.0
      %1123 = vmatpush1.msra.mxu0 0.0
      %1124 = vmatprep.subr.mxu0 0.0
      %1125 = vmatpush1.msra.mxu0 0.0
      %1126 = vmatprep.subr.mxu0 0.0
      %1127 = vmatpush1.msra.mxu0 0.0
      %1128 = vmatprep.subr.mxu0 0.0
      %1129 = vmatpush1.msra.mxu0 %v180
      %1130 = vmatprep.subr.mxu0 0.0
      %1131 = vmatpush2.msra.mxu0 0.0
      %1132 = vmatprep.subr.mxu0 0.0
      %1133 = vmatpush2.msra.mxu0 0.0
      %1134 = vmatprep.subr.mxu0 0.0
      %1135 = vmatpush2.msra.mxu0 0.0
      %1136 = vmatprep.subr.mxu0 0.0
      %1137 = vmatpush2.msra.mxu0 0.0
      %1138 = vmatprep.subr.mxu0 0.0
      %1139 = vmatpush2.msra.mxu0 0.0
      %1140 = vmatprep.subr.mxu0 0.0
      %1141 = vmatpush2.msra.mxu0 0.0
      %1142 = vmatprep.subr.mxu0 0.0
      %1143 = vmatpush2.msra.mxu0 0.0
      %1144 = vmatprep.subr.mxu0 0.0
      %1145 = vmatpush2.msra.mxu0 0.0
      %1146 = vmatprep.subr.mxu0 0.0
      %1147 = vmatpush2.msra.mxu0 0.0
      %1148 = vmatprep.subr.mxu0 0.0
      %1149 = vmatpush2.msra.mxu0 0.0
      %1150 = vmatprep.subr.mxu0 0.0
      %1151 = vmatpush2.msra.mxu0 0.0
      %1152 = vmatprep.subr.mxu0 0.0
      %1153 = vmatpush2.msra.mxu0 0.0
      %1154 = vmatprep.subr.mxu0 0.0
      %1155 = vmatpush2.msra.mxu0 0.0
      %1156 = vmatprep.subr.mxu0 0.0
      %1157 = vmatpush2.msra.mxu0 0.0
      %1158 = vmatprep.subr.mxu0 0.0
      %1159 = vmatpush2.msra.mxu0 0.0
      %1160 = vmatprep.subr.mxu0 0.0
      %1161 = vmatpush2.msra.mxu0 0.0
      %1162 = vmatprep.mubr.f32.mxu0 0.0
      %1163 = vmatmul.mubr.f32.gmra.mxu0 %v1096
      %v1164 = vpop.f32.mrf.mxu0
      %v1165 = vadd.f32 0.0, %v1164
      %v1166 = vpop.f32.mrf.mxu0
      %1167 = vdwg.mxu0
      %v1169 = vsel %vm175, %v1092, 0
      %1171 = vmatprep.subr.mxu0 0.0
      %1172 = vmatpush1.msra.mxu0 0.0
      %1173 = vmatprep.subr.mxu0 0.0
      %1174 = vmatpush1.msra.mxu0 0.0
      %1175 = vmatprep.subr.mxu0 0.0
      %1176 = vmatpush1.msra.mxu0 0.0
      %1177 = vmatprep.subr.mxu0 0.0
      %1178 = vmatpush1.msra.mxu0 0.0
      %1179 = vmatprep.subr.mxu0 0.0
      %1180 = vmatpush1.msra.mxu0 0.0
      %1181 = vmatprep.subr.mxu0 0.0
      %1182 = vmatpush1.msra.mxu0 0.0
      %1183 = vmatprep.subr.mxu0 0.0
      %1184 = vmatpush1.msra.mxu0 0.0
      %1185 = vmatprep.subr.mxu0 0.0
      %1186 = vmatpush1.msra.mxu0 0.0
      %1187 = vmatprep.subr.mxu0 0.0
      %1188 = vmatpush1.msra.mxu0 0.0
      %1189 = vmatprep.subr.mxu0 0.0
      %1190 = vmatpush1.msra.mxu0 0.0
      %1191 = vmatprep.subr.mxu0 0.0
      %1192 = vmatpush1.msra.mxu0 0.0
      %1193 = vmatprep.subr.mxu0 0.0
      %1194 = vmatpush1.msra.mxu0 0.0
      %1195 = vmatprep.subr.mxu0 0.0
      %1196 = vmatpush1.msra.mxu0 0.0
      %1197 = vmatprep.subr.mxu0 0.0
      %1198 = vmatpush1.msra.mxu0 0.0
      %1199 = vmatprep.subr.mxu0 0.0
      %1200 = vmatpush1.msra.mxu0 0.0
      %1201 = vmatprep.subr.mxu0 0.0
      %1202 = vmatpush1.msra.mxu0 %v257
      %1203 = vmatprep.subr.mxu0 0.0
      %1204 = vmatpush2.msra.mxu0 0.0
      %1205 = vmatprep.subr.mxu0 0.0
      %1206 = vmatpush2.msra.mxu0 0.0
      %1207 = vmatprep.subr.mxu0 0.0
      %1208 = vmatpush2.msra.mxu0 0.0
      %1209 = vmatprep.subr.mxu0 0.0
      %1210 = vmatpush2.msra.mxu0 0.0
      %1211 = vmatprep.subr.mxu0 0.0
      %1212 = vmatpush2.msra.mxu0 0.0
      %1213 = vmatprep.subr.mxu0 0.0
      %1214 = vmatpush2.msra.mxu0 0.0
      %1215 = vmatprep.subr.mxu0 0.0
      %1216 = vmatpush2.msra.mxu0 0.0
      %1217 = vmatprep.subr.mxu0 0.0
      %1218 = vmatpush2.msra.mxu0 0.0
      %1219 = vmatprep.subr.mxu0 0.0
      %1220 = vmatpush2.msra.mxu0 0.0
      %1221 = vmatprep.subr.mxu0 0.0
      %1222 = vmatpush2.msra.mxu0 0.0
      %1223 = vmatprep.subr.mxu0 0.0
      %1224 = vmatpush2.msra.mxu0 0.0
      %1225 = vmatprep.subr.mxu0 0.0
      %1226 = vmatpush2.msra.mxu0 0.0
      %1227 = vmatprep.subr.mxu0 0.0
      %1228 = vmatpush2.msra.mxu0 0.0
      %1229 = vmatprep.subr.mxu0 0.0
      %1230 = vmatpush2.msra.mxu0 0.0
      %1231 = vmatprep.subr.mxu0 0.0
      %1232 = vmatpush2.msra.mxu0 0.0
      %1233 = vmatprep.subr.mxu0 0.0
      %1234 = vmatpush2.msra.mxu0 0.0
      %1235 = vmatprep.mubr.f32.mxu0 0.0
      %1236 = vmatmul.mubr.f32.gmra.mxu0 %v1169
      %v1237 = vpop.f32.mrf.mxu0
      %v1238 = vadd.f32 %v1165, %v1237
      %v1239 = vpop.f32.mrf.mxu0
      %1240 = vdwg.mxu0
      %s1241 = scalar_lea.vmem %s1, 56
      %v1242 = vld [vmem:[%s1241] sm:$0xf]
      %v1244 = vsel %vm175, %v1242, 0
      %1246 = vmatprep.subr.mxu0 0.0
      %1247 = vmatpush1.msra.mxu0 0.0
      %1248 = vmatprep.subr.mxu0 0.0
      %1249 = vmatpush1.msra.mxu0 0.0
      %1250 = vmatprep.subr.mxu0 0.0
      %1251 = vmatpush1.msra.mxu0 0.0
      %1252 = vmatprep.subr.mxu0 0.0
      %1253 = vmatpush1.msra.mxu0 0.0
      %1254 = vmatprep.subr.mxu0 0.0
      %1255 = vmatpush1.msra.mxu0 0.0
      %1256 = vmatprep.subr.mxu0 0.0
      %1257 = vmatpush1.msra.mxu0 0.0
      %1258 = vmatprep.subr.mxu0 0.0
      %1259 = vmatpush1.msra.mxu0 0.0
      %1260 = vmatprep.subr.mxu0 0.0
      %1261 = vmatpush1.msra.mxu0 0.0
      %1262 = vmatprep.subr.mxu0 0.0
      %1263 = vmatpush1.msra.mxu0 0.0
      %1264 = vmatprep.subr.mxu0 0.0
      %1265 = vmatpush1.msra.mxu0 0.0
      %1266 = vmatprep.subr.mxu0 0.0
      %1267 = vmatpush1.msra.mxu0 0.0
      %1268 = vmatprep.subr.mxu0 0.0
      %1269 = vmatpush1.msra.mxu0 0.0
      %1270 = vmatprep.subr.mxu0 0.0
      %1271 = vmatpush1.msra.mxu0 0.0
      %1272 = vmatprep.subr.mxu0 0.0
      %1273 = vmatpush1.msra.mxu0 0.0
      %1274 = vmatprep.subr.mxu0 0.0
      %1275 = vmatpush1.msra.mxu0 0.0
      %1276 = vmatprep.subr.mxu0 0.0
      %1277 = vmatpush1.msra.mxu0 %v336
      %1278 = vmatprep.subr.mxu0 0.0
      %1279 = vmatpush2.msra.mxu0 0.0
      %1280 = vmatprep.subr.mxu0 0.0
      %1281 = vmatpush2.msra.mxu0 0.0
      %1282 = vmatprep.subr.mxu0 0.0
      %1283 = vmatpush2.msra.mxu0 0.0
      %1284 = vmatprep.subr.mxu0 0.0
      %1285 = vmatpush2.msra.mxu0 0.0
      %1286 = vmatprep.subr.mxu0 0.0
      %1287 = vmatpush2.msra.mxu0 0.0
      %1288 = vmatprep.subr.mxu0 0.0
      %1289 = vmatpush2.msra.mxu0 0.0
      %1290 = vmatprep.subr.mxu0 0.0
      %1291 = vmatpush2.msra.mxu0 0.0
      %1292 = vmatprep.subr.mxu0 0.0
      %1293 = vmatpush2.msra.mxu0 0.0
      %1294 = vmatprep.subr.mxu0 0.0
      %1295 = vmatpush2.msra.mxu0 0.0
      %1296 = vmatprep.subr.mxu0 0.0
      %1297 = vmatpush2.msra.mxu0 0.0
      %1298 = vmatprep.subr.mxu0 0.0
      %1299 = vmatpush2.msra.mxu0 0.0
      %1300 = vmatprep.subr.mxu0 0.0
      %1301 = vmatpush2.msra.mxu0 0.0
      %1302 = vmatprep.subr.mxu0 0.0
      %1303 = vmatpush2.msra.mxu0 0.0
      %1304 = vmatprep.subr.mxu0 0.0
      %1305 = vmatpush2.msra.mxu0 0.0
      %1306 = vmatprep.subr.mxu0 0.0
      %1307 = vmatpush2.msra.mxu0 0.0
      %1308 = vmatprep.subr.mxu0 0.0
      %1309 = vmatpush2.msra.mxu0 0.0
      %1310 = vmatprep.mubr.f32.mxu0 0.0
      %1311 = vmatmul.mubr.f32.gmra.mxu0 %v1244
      %v1312 = vpop.f32.mrf.mxu0
      %v1313 = vadd.f32 0.0, %v1312
      %v1314 = vpop.f32.mrf.mxu0
      %1315 = vdwg.mxu0
      %v1316 = vadd.f32 %v1238, %v1313
      %s1317 = scalar_lea.vmem %s1, 60
      %v1318 = vld [vmem:[%s1317] sm:$0xf]
      %v1320 = vsel %vm175, %v1318, 0
      %1322 = vmatprep.subr.mxu0 0.0
      %1323 = vmatpush1.msra.mxu0 0.0
      %1324 = vmatprep.subr.mxu0 0.0
      %1325 = vmatpush1.msra.mxu0 0.0
      %1326 = vmatprep.subr.mxu0 0.0
      %1327 = vmatpush1.msra.mxu0 0.0
      %1328 = vmatprep.subr.mxu0 0.0
      %1329 = vmatpush1.msra.mxu0 0.0
      %1330 = vmatprep.subr.mxu0 0.0
      %1331 = vmatpush1.msra.mxu0 0.0
      %1332 = vmatprep.subr.mxu0 0.0
      %1333 = vmatpush1.msra.mxu0 0.0
      %1334 = vmatprep.subr.mxu0 0.0
      %1335 = vmatpush1.msra.mxu0 0.0
      %1336 = vmatprep.subr.mxu0 0.0
      %1337 = vmatpush1.msra.mxu0 0.0
      %1338 = vmatprep.subr.mxu0 0.0
      %1339 = vmatpush1.msra.mxu0 0.0
      %1340 = vmatprep.subr.mxu0 0.0
      %1341 = vmatpush1.msra.mxu0 0.0
      %1342 = vmatprep.subr.mxu0 0.0
      %1343 = vmatpush1.msra.mxu0 0.0
      %1344 = vmatprep.subr.mxu0 0.0
      %1345 = vmatpush1.msra.mxu0 0.0
      %1346 = vmatprep.subr.mxu0 0.0
      %1347 = vmatpush1.msra.mxu0 0.0
      %1348 = vmatprep.subr.mxu0 0.0
      %1349 = vmatpush1.msra.mxu0 0.0
      %1350 = vmatprep.subr.mxu0 0.0
      %1351 = vmatpush1.msra.mxu0 0.0
      %1352 = vmatprep.subr.mxu0 0.0
      %1353 = vmatpush1.msra.mxu0 %v414
      %1354 = vmatprep.subr.mxu0 0.0
      %1355 = vmatpush2.msra.mxu0 0.0
      %1356 = vmatprep.subr.mxu0 0.0
      %1357 = vmatpush2.msra.mxu0 0.0
      %1358 = vmatprep.subr.mxu0 0.0
      %1359 = vmatpush2.msra.mxu0 0.0
      %1360 = vmatprep.subr.mxu0 0.0
      %1361 = vmatpush2.msra.mxu0 0.0
      %1362 = vmatprep.subr.mxu0 0.0
      %1363 = vmatpush2.msra.mxu0 0.0
      %1364 = vmatprep.subr.mxu0 0.0
      %1365 = vmatpush2.msra.mxu0 0.0
      %1366 = vmatprep.subr.mxu0 0.0
      %1367 = vmatpush2.msra.mxu0 0.0
      %1368 = vmatprep.subr.mxu0 0.0
      %1369 = vmatpush2.msra.mxu0 0.0
      %1370 = vmatprep.subr.mxu0 0.0
      %1371 = vmatpush2.msra.mxu0 0.0
      %1372 = vmatprep.subr.mxu0 0.0
      %1373 = vmatpush2.msra.mxu0 0.0
      %1374 = vmatprep.subr.mxu0 0.0
      %1375 = vmatpush2.msra.mxu0 0.0
      %1376 = vmatprep.subr.mxu0 0.0
      %1377 = vmatpush2.msra.mxu0 0.0
      %1378 = vmatprep.subr.mxu0 0.0
      %1379 = vmatpush2.msra.mxu0 0.0
      %1380 = vmatprep.subr.mxu0 0.0
      %1381 = vmatpush2.msra.mxu0 0.0
      %1382 = vmatprep.subr.mxu0 0.0
      %1383 = vmatpush2.msra.mxu0 0.0
      %1384 = vmatprep.subr.mxu0 0.0
      %1385 = vmatpush2.msra.mxu0 0.0
      %1386 = vmatprep.mubr.f32.mxu0 0.0
      %1387 = vmatmul.mubr.f32.gmra.mxu0 %v1320
      %v1388 = vpop.f32.mrf.mxu0
      %v1389 = vadd.f32 0.0, %v1388
      %v1390 = vpop.f32.mrf.mxu0
      %1391 = vdwg.mxu0
      %v1392 = vadd.f32 %v1316, %v1389
      %v1394 = vrot.slane %v788, 4
      %v1397 = vrot.slane %v1392, 4
      %v1399 = vsel %vm179, %v486, %v1394
      %v1400 = vsel %vm179, %v1090, %v1397
      %v1401 = vld [vmem:[%s2] sm:$0xff]
      %v1402 = vld [vmem:[%s2 + $0x8] sm:$0xff]
      %1404 = vset.pattern.permute.xlu0 0
      %1405 = vperm.xlu0 %1404, %v1401
      %v1406 = vpop.permute.xlu0 %1405
      %1409 = vset.pattern.permute.xlu0 0
      %1410 = vperm.xlu0 %1409, %v1402
      %v1411 = vpop.permute.xlu0 %1410
      %v1413 = vadd.f32 %v1399, %v1406
      %v1414 = vadd.f32 %v1400, %v1411
      %vm1415 = vcmask 588800
      %1416 = vst.msk [vmem:[%s167] sm:$0xff] %vm1415, %v1413
      %1417 = vst.msk [vmem:[%s167 + $0x8] sm:$0xff] %vm1415, %v1414
      %p1418 = scmp.lt.s32.totalorder %s14, 1
      %s1419 = scalar_select %p1418, %s14, 1
      %s1420 = smul.addr %s1419, 2
      %s1421 = smul.addr %s1420, 8
      %s1422 = scalar_lea.vmem %s3, %s1421
      // Predicated region
      $region33: #{_lambda_.5} parent=31 // pred_check
        %p1423 = pneg %p100
      $region34: #{_lambda_.5} parent=31 // pred_check_branch
        %1425 = sbr.rel (%p1423) target = $region36
      $region35: #{_lambda_.5} parent=31 // pred_region
        _
      $region36: #{_lambda_.5} parent=31 // pred_fallthru
        _
    $region32: #{_lambda_.5} parent=5 // pred_fallthru
      _
    %p1426 = scmp.le.s32.totalorder 2, %s9
    // Predicated region
    $region37: #{_lambda_.5} parent=5 // pred_check
      %p1427 = pneg %p1426
    $region38: #{_lambda_.5} parent=5 // pred_check_branch
      %1429 = sbr.rel (%p1427) target = $region40
    $region39: #{_lambda_.5} parent=5 // pred_region
      %s1430 = ssub.s32 %s9, 2
      // Predicated region
      $region41: #{_lambda_.5} parent=39 // pred_check
        %p1431 = pneg %p106
      $region42: #{_lambda_.5} parent=39 // pred_check_branch
        %1433 = sbr.rel (%p1431) target = $region44
      $region43: #{_lambda_.5} parent=39 // pred_region
        %p1434 = scmp.lt.s32.totalorder %s15, 1
        %s1435 = scalar_select %p1434, %s15, 1
        %s1436 = smul.addr %s1435, 2
        %s1437 = smul.addr %s1436, 8
        %s1438 = scalar_lea.vmem %s3, %s1437
      $region44: #{_lambda_.5} parent=39 // pred_fallthru
        _
    $region40: #{_lambda_.5} parent=5 // pred_fallthru
      _
  $region6: #{_lambda_.5} parent=0 // loop_footer
    %s13 = sadd.s32 1, %s9
  $region7: #{_lambda_.5} parent=0 // loop_footer_branch
    %8 = sbr.rel target = $region3
  $region8: #{_lambda_.5} parent=0 // loop_exit
    _

</llo_original>
